<compile_context>
chip_gen: v5e
topology: v5e:2x2
jax: 0.10.0
libtpu: 0.0.40
codegen_flags: <defaults>
</compile_context>

<pallas_src>
import functools
import math

import jax
import jax.numpy as jnp
from jax.experimental import pallas as pl
from jax.experimental.pallas import tpu as pltpu


def _resblock_kernel(xc_ref, xt_ref, xb_ref, w1_ref, b1_ref, w2_ref, b2_ref,
                     o_ref, xpad_ref, midpad_ref):
    # xc_ref : (SH, W, C)        current output strip of x (NHWC, unpadded)
    # xt_ref : (2, W, C)         the 2 rows of x just above the strip (clamped)
    # xb_ref : (2, W, C)         the 2 rows of x just below the strip (clamped)
    # w*_ref : (3, 3C, C)        im2col weights, per dy; columns (dx, cin)
    # b*_ref : (1, C)            f32 biases (res_scale already folded into w2/b2)
    # o_ref  : (SH, W, C)        output strip
    # xpad_ref  : (SH+4, W+2, C) VMEM scratch, zero-padded x strip
    # midpad_ref: (SH+2, W+2, C) VMEM scratch, zero-padded relu(conv1) strip
    SH, W, C = xc_ref.shape
    cdt = xpad_ref.dtype
    s = pl.program_id(1)
    ns = pl.num_programs(1)
    R1 = SH + 2          # conv1 is evaluated on the strip + 1 halo row each side

    # ---- Build the zero-padded input strip in VMEM (rows +/-2, cols +/-1). ----
    # Zero the left/right pad columns every step (scratch persists across steps
    # and the step order is "parallel"-sharded, so never rely on step 0).
    xpad_ref[:, 0:1, :] = jnp.zeros((SH + 4, 1, C), cdt)
    xpad_ref[:, W + 1:W + 2, :] = jnp.zeros((SH + 4, 1, C), cdt)
    # Interior rows come straight from the current-strip block.
    xpad_ref[2:SH + 2, 1:W + 1, :] = xc_ref[...].astype(cdt)

    # Top halo: zeros at the image top, else the 2 rows above the strip.
    @pl.when(s == 0)
    def _():
        xpad_ref[0:2, 1:W + 1, :] = jnp.zeros((2, W, C), cdt)

    @pl.when(s > 0)
    def _():
        xpad_ref[0:2, 1:W + 1, :] = xt_ref[...].astype(cdt)

    # Bottom halo: zeros at the image bottom, else the 2 rows below the strip.
    @pl.when(s == ns - 1)
    def _():
        xpad_ref[SH + 2:SH + 4, 1:W + 1, :] = jnp.zeros((2, W, C), cdt)

    @pl.when(s < ns - 1)
    def _():
        xpad_ref[SH + 2:SH + 4, 1:W + 1, :] = xb_ref[...].astype(cdt)

    def conv3x3(src_ref, rows, w_ref, b_ref):
        # src_ref: (rows+2, W+2, C) zero-padded activations.
        # Three accumulating MXU matmuls over dy with (rows*W, 3C) slabs
        # instead of one (rows*W, 9C) patch matrix; f32 accumulation.
        M = rows * W
        acc = None
        for dy in range(3):
            slab = jnp.concatenate(
                [src_ref[dy:dy + rows, dx:dx + W, :].reshape(M, C)
                 for dx in range(3)],
                axis=-1).astype(cdt)                                  # (M, 3C)
            part = jnp.dot(slab, w_ref[dy],
                           preferred_element_type=jnp.float32)        # (M, C) f32
            acc = part if acc is None else acc + part
        return acc + b_ref[...]

    # ---- conv1 + ReLU over the strip plus 1 halo row each side. ----
    mid = jnp.maximum(conv3x3(xpad_ref, R1, w1_ref, b1_ref), 0.0)     # (R1*W, C)

    # ---- Padded conv1 intermediate in VMEM for conv2's taps. ----
    midpad_ref[:, 0:1, :] = jnp.zeros((R1, 1, C), cdt)
    midpad_ref[:, W + 1:W + 2, :] = jnp.zeros((R1, 1, C), cdt)
    midpad_ref[:, 1:W + 1, :] = mid.reshape(R1, W, C).astype(cdt)

    # conv2's zero padding at the image boundary overrides conv1's halo rows.
    @pl.when(s == 0)
    def _():
        midpad_ref[0:1, :, :] = jnp.zeros((1, W + 2, C), cdt)

    @pl.when(s == ns - 1)
    def _():
        midpad_ref[R1 - 1:R1, :, :] = jnp.zeros((1, W + 2, C), cdt)

    # ---- conv2 over the strip; residual add in f32 (res_scale pre-folded). ----
    out = conv3x3(midpad_ref, SH, w2_ref, b2_ref)                     # (SH*W, C)
    identity = xc_ref[...].reshape(SH * W, C).astype(jnp.float32)     # aligned
    o_ref[...] = (identity + out).reshape(SH, W, C).astype(o_ref.dtype)


def _choose_strip_rows(H, W, C, in_itemsize, cdt_itemsize, budget_bytes):
    """Largest even divisor of H whose estimated per-step VMEM fits the budget."""
    def est(sh):
        blk_in = (sh + 4) * W * C * in_itemsize * 2        # strip + halos, x2 buffers
        blk_out = sh * W * C * in_itemsize * 2
        wts = 2 * (9 * C * C) * cdt_itemsize * 2 + 2 * C * 4
        xpad = (sh + 4) * (W + 2) * C * cdt_itemsize
        midp = (sh + 2) * (W + 2) * C * cdt_itemsize
        trans = ((sh + 2) * W * 3 * C * cdt_itemsize       # one (M, 3C) slab
                 + (sh + 2) * W * C * 4 * 4)               # f32 partial/acc/mid/out
        return blk_in + blk_out + wts + xpad + midp + trans

    # Even strip heights keep the 2-row halo blocks aligned; odd H falls back
    # to whole-image strips.
    # TODO(synk): support odd H with 1-row halo blocks if it ever matters.
    cands = [d for d in range(H, 0, -1) if H % d == 0 and (d % 2 == 0 or d == H)]
    for d in cands:
        if est(d) <= budget_bytes:
            return d
    return cands[-1]


def residual_block_nobn(x_nchw, w1, b1, w2, b2, res_scale=1.0,
                        compute_dtype=None, strip_rows=None):
    """x_nchw: (B, C, H, W); w*: (Cout, Cin, 3, 3) PyTorch layout; b*: (C,).

    compute_dtype: MXU feed dtype (accumulation stays f32).  Defaults to the
    input dtype; pass jnp.bfloat16 for f32 inputs in production for ~2x MXU
    throughput and half the VMEM/DMA bytes (results then differ from an f32
    reference beyond ~1e-5 — only the exact-f32 path is self-tested here).
    """
    B, C, H, W = x_nchw.shape
    if compute_dtype is None:
        compute_dtype = x_nchw.dtype
    cdt = jnp.dtype(compute_dtype)

    # Layout glue in plain JAX: NCHW -> NHWC (no spatial padding in HBM).
    x = jnp.transpose(x_nchw, (0, 2, 3, 1))                           # (B, H, W, C)

    # im2col weights: (Cout, Cin, 3, 3) -> (ky, kx, Cin, Cout) -> (3, 3*Cin, Cout).
    # Column order within a dy slab is (dx, cin), matching the kernel's
    # 3-way tap concatenation.  res_scale is folded into conv2.
    w1_i2c = jnp.transpose(w1, (2, 3, 1, 0)).reshape(3, 3 * C, C).astype(cdt)
    w2_i2c = (jnp.transpose(w2, (2, 3, 1, 0)).reshape(3, 3 * C, C)
              * float(res_scale)).astype(cdt)
    b1_r = b1.reshape(1, C).astype(jnp.float32)
    b2_r = (b2.astype(jnp.float32) * float(res_scale)).reshape(1, C)

    # Per-generation VMEM budget: ~80% of physical (v7x ~51 MiB, v5e/v6e ~102 MiB).
    try:
        vmem_phys = int(pltpu.get_tpu_info().vmem_capacity_bytes)
    except Exception:
        vmem_phys = 64 * 1024 * 1024
    vmem_limit = min(int(vmem_phys * 0.80), 112 * 1024 * 1024)

    if strip_rows is None:
        strip_rows = _choose_strip_rows(H, W, C, x.dtype.itemsize, cdt.itemsize,
                                        budget_bytes=int(vmem_limit * 0.6))
    SH = int(strip_rows)
    assert H % SH == 0 and (SH % 2 == 0 or SH == H), (
        "strip_rows must be an even divisor of H (or equal to H)")
    n_strips = H // SH

    # Halo index maps (block units of 2 rows), clamped to stay in-bounds; the
    # kernel zeroes the halo at the image boundary so clamped content is unused.
    def top_map(b, s):
        return (b, jnp.maximum(s * (SH // 2) - 1, 0), 0, 0)

    def bot_map(b, s):
        return (b, jnp.minimum((s + 1) * (SH // 2), max((H - 2) // 2, 0)), 0, 0)

    out_nhwc = pl.pallas_call(
        _resblock_kernel,
        out_shape=jax.ShapeDtypeStruct((B, H, W, C), x.dtype),
        grid_spec=pltpu.PrefetchScalarGridSpec(
            num_scalar_prefetch=0,
            grid=(B, n_strips),
            in_specs=[
                pl.BlockSpec((None, SH, W, C), lambda b, s: (b, s, 0, 0)),
                pl.BlockSpec((None, 2, W, C), top_map),
                pl.BlockSpec((None, 2, W, C), bot_map),
                pl.BlockSpec((3, 3 * C, C), lambda b, s: (0, 0, 0)),
                pl.BlockSpec((1, C), lambda b, s: (0, 0)),
                pl.BlockSpec((3, 3 * C, C), lambda b, s: (0, 0, 0)),
                pl.BlockSpec((1, C), lambda b, s: (0, 0)),
            ],
            out_specs=pl.BlockSpec((None, SH, W, C), lambda b, s: (b, s, 0, 0)),
            scratch_shapes=[
                pltpu.VMEM((SH + 4, W + 2, C), cdt),   # padded x strip
                pltpu.VMEM((SH + 2, W + 2, C), cdt),   # padded relu(conv1) strip
            ],
        ),
        compiler_params=pltpu.CompilerParams(
            # Every (batch, strip) step is independent -> shard across
            # TensorCores on v7x; harmless on single-TC v5e/v6e.
            dimension_semantics=("parallel", "parallel"),
            vmem_limit_bytes=vmem_limit,
        ),
    )(x, x, x, w1_i2c, b1_r, w2_i2c, b2_r)

    return jnp.transpose(out_nhwc, (0, 3, 1, 2))                      # back to NCHW


def _reference(x, w1, b1, w2, b2, res_scale):
    # Pure-JAX reference of the PyTorch forward (NCHW convs).
    dn = jax.lax.conv_dimension_numbers(x.shape, w1.shape,
                                        ("NCHW", "OIHW", "NCHW"))
    c1 = jax.lax.conv_general_dilated(x, w1, (1, 1), ((1, 1), (1, 1)),
                                      dimension_numbers=dn)
    c1 = c1 + b1.reshape(1, -1, 1, 1)
    r = jnp.maximum(c1, 0.0)
    c2 = jax.lax.conv_general_dilated(r, w2, (1, 1), ((1, 1), (1, 1)),
                                      dimension_numbers=dn)
    c2 = c2 + b2.reshape(1, -1, 1, 1)
    return x + c2 * res_scale


def _run_case(key, B, C, H, W, res_scale, strip_rows):
    kx, k1, k2, kb1, kb2 = jax.random.split(key, 5)
    # default_init_weights: kaiming_normal_ (fan_in, gain sqrt(2)) * 0.1.
    fan_in = C * 3 * 3
    std = math.sqrt(2.0 / fan_in)
    w1 = jax.random.normal(k1, (C, C, 3, 3), jnp.float32) * std * 0.1
    w2 = jax.random.normal(k2, (C, C, 3, 3), jnp.float32) * std * 0.1
    # Biases are zero-initialized in basicsr, but exercise the bias path anyway.
    b1 = jax.random.normal(kb1, (C,), jnp.float32) * 0.1
    b2 = jax.random.normal(kb2, (C,), jnp.float32) * 0.1
    x = jax.random.normal(kx, (B, C, H, W), jnp.float32)

    out = residual_block_nobn(x, w1, b1, w2, b2, res_scale=res_scale,
                              strip_rows=strip_rows)
    out = jax.block_until_ready(out)
    ref = _reference(x, w1, b1, w2, b2, res_scale)
    assert out.shape == (B, C, H, W)
    err = jnp.max(jnp.abs(out - ref))
    assert jnp.allclose(out, ref, atol=1e-5, rtol=1e-5), (
        f"max abs err {err} at shape {(B, C, H, W)} strips={strip_rows}")


if __name__ == "__main__":
    key = jax.random.PRNGKey(0)
    k1, k2, k3 = jax.random.split(key, 3)

    # Small default shape, automatic strip selection (single strip per image).
    _run_case(k1, B=2, C=4, H=16, W=16, res_scale=1.0, strip_rows=None)
    # Forced multi-strip path: exercises the 2-row input halos and the conv2
    # boundary overrides on interior / edge strips.
    _run_case(k2, B=2, C=4, H=16, W=16, res_scale=1.0, strip_rows=4)
    # num_feat-like channel count, non-square spatial, res_scale folding.
    _run_case(k3, B=1, C=64, H=12, W=16, res_scale=0.5, strip_rows=6)

    print("KERNEL_OK")
</pallas_src>

<mosaic_0001>
module attributes {stable_mosaic.version = 11 : i64} {
  func.func @_resblock_kernel(%arg0: i32, %arg1: i32, %arg2: memref<1x16x16x4xf32, #tpu.memory_space<vmem>>, %arg3: memref<1x2x16x4xf32, #tpu.memory_space<vmem>>, %arg4: memref<1x2x16x4xf32, #tpu.memory_space<vmem>>, %arg5: memref<3x12x4xf32, #tpu.memory_space<vmem>>, %arg6: memref<1x4xf32, #tpu.memory_space<vmem>>, %arg7: memref<3x12x4xf32, #tpu.memory_space<vmem>>, %arg8: memref<1x4xf32, #tpu.memory_space<vmem>>, %arg9: memref<1x16x16x4xf32, #tpu.memory_space<vmem>>, %arg10: memref<20x18x4xf32, #tpu.memory_space<vmem>>, %arg11: memref<18x18x4xf32, #tpu.memory_space<vmem>>) attributes {dimension_semantics = [#tpu.dimension_semantics<parallel>, #tpu.dimension_semantics<parallel>], iteration_bounds = array<i64: 2, 1>, scalar_prefetch = 0 : i64, scratch_operands = 2 : i64, tpu.core_type = #tpu.core_type<tc>, window_params = [{transform_indices = @transform_0, window_bounds = array<i64: 1, 16, 16, 4>}, {transform_indices = @transform_1, window_bounds = array<i64: 1, 2, 16, 4>}, {transform_indices = @transform_2, window_bounds = array<i64: 1, 2, 16, 4>}, {pipeline_mode = #tpu.pipeline_mode<synchronous>, transform_indices = @transform_3, window_bounds = array<i64: 3, 12, 4>}, {pipeline_mode = #tpu.pipeline_mode<synchronous>, transform_indices = @transform_4, window_bounds = array<i64: 1, 4>}, {pipeline_mode = #tpu.pipeline_mode<synchronous>, transform_indices = @transform_5, window_bounds = array<i64: 3, 12, 4>}, {pipeline_mode = #tpu.pipeline_mode<synchronous>, transform_indices = @transform_6, window_bounds = array<i64: 1, 4>}, {transform_indices = @transform_7, window_bounds = array<i64: 1, 16, 16, 4>}]} {
    %cst = arith.constant 0.000000e+00 : f32
    %0 = vector.broadcast %cst : f32 to vector<20x1x4xf32>
    %c0 = arith.constant 0 : index
    %c0_0 = arith.constant 0 : index
    %c0_1 = arith.constant 0 : index
    %1 = vector.load %arg10[%c0, %c0_0, %c0_1] : memref<20x18x4xf32, #tpu.memory_space<vmem>>, vector<20x1x4xf32>
    tpu.vector_store %arg10[%c0, %c0_0, %c0_1], %0 {strides = array<i32>} : memref<20x18x4xf32, #tpu.memory_space<vmem>>, vector<20x1x4xf32>,
    %cst_2 = arith.constant 0.000000e+00 : f32
    %2 = vector.broadcast %cst_2 : f32 to vector<20x1x4xf32>
    %c0_3 = arith.constant 0 : index
    %c17 = arith.constant 17 : index
    %c0_4 = arith.constant 0 : index
    %3 = vector.load %arg10[%c0_3, %c17, %c0_4] : memref<20x18x4xf32, #tpu.memory_space<vmem>>, vector<20x1x4xf32>
    tpu.vector_store %arg10[%c0_3, %c17, %c0_4], %2 {strides = array<i32>} : memref<20x18x4xf32, #tpu.memory_space<vmem>>, vector<20x1x4xf32>,
    %c0_5 = arith.constant 0 : index
    %c0_6 = arith.constant 0 : index
    %c0_7 = arith.constant 0 : index
    %c0_8 = arith.constant 0 : index
    %4 = vector.load %arg2[%c0_5, %c0_6, %c0_7, %c0_8] : memref<1x16x16x4xf32, #tpu.memory_space<vmem>>, vector<1x16x16x4xf32>
    %5 = vector.shape_cast %4 : vector<1x16x16x4xf32> to vector<16x16x4xf32>
    %c2 = arith.constant 2 : index
    %c1 = arith.constant 1 : index
    %c0_9 = arith.constant 0 : index
    %6 = vector.load %arg10[%c2, %c1, %c0_9] : memref<20x18x4xf32, #tpu.memory_space<vmem>>, vector<16x16x4xf32>
    tpu.vector_store %arg10[%c2, %c1, %c0_9], %5 {strides = array<i32>} : memref<20x18x4xf32, #tpu.memory_space<vmem>>, vector<16x16x4xf32>,
    %c0_i32 = arith.constant 0 : i32
    %7 = arith.cmpi eq, %arg1, %c0_i32 : i32
    %8 = arith.extui %7 : i1 to i32
    %c0_i32_10 = arith.constant 0 : i32
    %9 = arith.cmpi ne, %8, %c0_i32_10 : i32
    scf.if %9 {
      %cst_123 = arith.constant 0.000000e+00 : f32
      %111 = vector.broadcast %cst_123 : f32 to vector<2x16x4xf32>
      %c0_124 = arith.constant 0 : index
      %c1_125 = arith.constant 1 : index
      %c0_126 = arith.constant 0 : index
      %112 = vector.load %arg10[%c0_124, %c1_125, %c0_126] : memref<20x18x4xf32, #tpu.memory_space<vmem>>, vector<2x16x4xf32>
      tpu.vector_store %arg10[%c0_124, %c1_125, %c0_126], %111 {strides = array<i32>} : memref<20x18x4xf32, #tpu.memory_space<vmem>>, vector<2x16x4xf32>,
    } else {
    }
    %c0_i32_11 = arith.constant 0 : i32
    %10 = arith.cmpi sgt, %arg1, %c0_i32_11 : i32
    %11 = arith.extui %10 : i1 to i32
    %c0_i32_12 = arith.constant 0 : i32
    %12 = arith.cmpi ne, %11, %c0_i32_12 : i32
    scf.if %12 {
      %c0_123 = arith.constant 0 : index
      %c0_124 = arith.constant 0 : index
      %c0_125 = arith.constant 0 : index
      %c0_126 = arith.constant 0 : index
      %111 = vector.load %arg3[%c0_123, %c0_124, %c0_125, %c0_126] : memref<1x2x16x4xf32, #tpu.memory_space<vmem>>, vector<1x2x16x4xf32>
      %112 = vector.shape_cast %111 : vector<1x2x16x4xf32> to vector<2x16x4xf32>
      %c0_127 = arith.constant 0 : index
      %c1_128 = arith.constant 1 : index
      %c0_129 = arith.constant 0 : index
      %113 = vector.load %arg10[%c0_127, %c1_128, %c0_129] : memref<20x18x4xf32, #tpu.memory_space<vmem>>, vector<2x16x4xf32>
      tpu.vector_store %arg10[%c0_127, %c1_128, %c0_129], %112 {strides = array<i32>} : memref<20x18x4xf32, #tpu.memory_space<vmem>>, vector<2x16x4xf32>,
    } else {
    }
    %c0_i32_13 = arith.constant 0 : i32
    %13 = arith.cmpi eq, %arg1, %c0_i32_13 : i32
    %14 = arith.extui %13 : i1 to i32
    %c0_i32_14 = arith.constant 0 : i32
    %15 = arith.cmpi ne, %14, %c0_i32_14 : i32
    scf.if %15 {
      %cst_123 = arith.constant 0.000000e+00 : f32
      %111 = vector.broadcast %cst_123 : f32 to vector<2x16x4xf32>
      %c18 = arith.constant 18 : index
      %c1_124 = arith.constant 1 : index
      %c0_125 = arith.constant 0 : index
      %112 = vector.load %arg10[%c18, %c1_124, %c0_125] : memref<20x18x4xf32, #tpu.memory_space<vmem>>, vector<2x16x4xf32>
      tpu.vector_store %arg10[%c18, %c1_124, %c0_125], %111 {strides = array<i32>} : memref<20x18x4xf32, #tpu.memory_space<vmem>>, vector<2x16x4xf32>,
    } else {
    }
    %c0_i32_15 = arith.constant 0 : i32
    %16 = arith.cmpi slt, %arg1, %c0_i32_15 : i32
    %17 = arith.extui %16 : i1 to i32
    %c0_i32_16 = arith.constant 0 : i32
    %18 = arith.cmpi ne, %17, %c0_i32_16 : i32
    scf.if %18 {
      %c0_123 = arith.constant 0 : index
      %c0_124 = arith.constant 0 : index
      %c0_125 = arith.constant 0 : index
      %c0_126 = arith.constant 0 : index
      %111 = vector.load %arg4[%c0_123, %c0_124, %c0_125, %c0_126] : memref<1x2x16x4xf32, #tpu.memory_space<vmem>>, vector<1x2x16x4xf32>
      %112 = vector.shape_cast %111 : vector<1x2x16x4xf32> to vector<2x16x4xf32>
      %c18 = arith.constant 18 : index
      %c1_127 = arith.constant 1 : index
      %c0_128 = arith.constant 0 : index
      %113 = vector.load %arg10[%c18, %c1_127, %c0_128] : memref<20x18x4xf32, #tpu.memory_space<vmem>>, vector<2x16x4xf32>
      tpu.vector_store %arg10[%c18, %c1_127, %c0_128], %112 {strides = array<i32>} : memref<20x18x4xf32, #tpu.memory_space<vmem>>, vector<2x16x4xf32>,
    } else {
    }
    %c0_17 = arith.constant 0 : index
    %c0_18 = arith.constant 0 : index
    %c0_19 = arith.constant 0 : index
    %19 = vector.load %arg10[%c0_17, %c0_18, %c0_19] : memref<20x18x4xf32, #tpu.memory_space<vmem>>, vector<18x16x4xf32>
    %20 = vector.shape_cast %19 : vector<18x16x4xf32> to vector<288x4xf32>
    %c0_20 = arith.constant 0 : index
    %c1_21 = arith.constant 1 : index
    %c0_22 = arith.constant 0 : index
    %21 = vector.load %arg10[%c0_20, %c1_21, %c0_22] : memref<20x18x4xf32, #tpu.memory_space<vmem>>, vector<18x16x4xf32>
    %22 = vector.shape_cast %21 : vector<18x16x4xf32> to vector<288x4xf32>
    %c0_23 = arith.constant 0 : index
    %c2_24 = arith.constant 2 : index
    %c0_25 = arith.constant 0 : index
    %23 = vector.load %arg10[%c0_23, %c2_24, %c0_25] : memref<20x18x4xf32, #tpu.memory_space<vmem>>, vector<18x16x4xf32>
    %24 = vector.shape_cast %23 : vector<18x16x4xf32> to vector<288x4xf32>
    %25 = tpu.concatenate %20, %22, %24 in 1 : vector<288x4xf32>, vector<288x4xf32>, vector<288x4xf32> -> vector<288x12xf32>
    %c0_26 = arith.constant 0 : index
    %c0_27 = arith.constant 0 : index
    %c0_28 = arith.constant 0 : index
    %26 = vector.load %arg5[%c0_26, %c0_27, %c0_28] : memref<3x12x4xf32, #tpu.memory_space<vmem>>, vector<1x12x4xf32>
    %27 = vector.shape_cast %26 : vector<1x12x4xf32> to vector<12x4xf32>
    %cst_29 = arith.constant dense<0.000000e+00> : vector<288x4xf32>
    %28 = tpu.matmul %25, %27, %cst_29 {dimension_numbers = #tpu.dot_dimension_numbers<[1], [0], [0], [1], [0, 0, 1, 1], [], []>} : vector<288x12xf32>, vector<12x4xf32>, vector<288x4xf32> -> vector<288x4xf32>
    %c1_30 = arith.constant 1 : index
    %c0_31 = arith.constant 0 : index
    %c0_32 = arith.constant 0 : index
    %29 = vector.load %arg10[%c1_30, %c0_31, %c0_32] : memref<20x18x4xf32, #tpu.memory_space<vmem>>, vector<18x16x4xf32>
    %30 = vector.shape_cast %29 : vector<18x16x4xf32> to vector<288x4xf32>
    %c1_33 = arith.constant 1 : index
    %c1_34 = arith.constant 1 : index
    %c0_35 = arith.constant 0 : index
    %31 = vector.load %arg10[%c1_33, %c1_34, %c0_35] : memref<20x18x4xf32, #tpu.memory_space<vmem>>, vector<18x16x4xf32>
    %32 = vector.shape_cast %31 : vector<18x16x4xf32> to vector<288x4xf32>
    %c1_36 = arith.constant 1 : index
    %c2_37 = arith.constant 2 : index
    %c0_38 = arith.constant 0 : index
    %33 = vector.load %arg10[%c1_36, %c2_37, %c0_38] : memref<20x18x4xf32, #tpu.memory_space<vmem>>, vector<18x16x4xf32>
    %34 = vector.shape_cast %33 : vector<18x16x4xf32> to vector<288x4xf32>
    %35 = tpu.concatenate %30, %32, %34 in 1 : vector<288x4xf32>, vector<288x4xf32>, vector<288x4xf32> -> vector<288x12xf32>
    %c1_39 = arith.constant 1 : index
    %c0_40 = arith.constant 0 : index
    %c0_41 = arith.constant 0 : index
    %36 = vector.load %arg5[%c1_39, %c0_40, %c0_41] : memref<3x12x4xf32, #tpu.memory_space<vmem>>, vector<1x12x4xf32>
    %37 = vector.shape_cast %36 : vector<1x12x4xf32> to vector<12x4xf32>
    %cst_42 = arith.constant dense<0.000000e+00> : vector<288x4xf32>
    %38 = tpu.matmul %35, %37, %cst_42 {dimension_numbers = #tpu.dot_dimension_numbers<[1], [0], [0], [1], [0, 0, 1, 1], [], []>} : vector<288x12xf32>, vector<12x4xf32>, vector<288x4xf32> -> vector<288x4xf32>
    %39 = arith.addf %28, %38 : vector<288x4xf32>
    %c2_43 = arith.constant 2 : index
    %c0_44 = arith.constant 0 : index
    %c0_45 = arith.constant 0 : index
    %40 = vector.load %arg10[%c2_43, %c0_44, %c0_45] : memref<20x18x4xf32, #tpu.memory_space<vmem>>, vector<18x16x4xf32>
    %41 = vector.shape_cast %40 : vector<18x16x4xf32> to vector<288x4xf32>
    %c2_46 = arith.constant 2 : index
    %c1_47 = arith.constant 1 : index
    %c0_48 = arith.constant 0 : index
    %42 = vector.load %arg10[%c2_46, %c1_47, %c0_48] : memref<20x18x4xf32, #tpu.memory_space<vmem>>, vector<18x16x4xf32>
    %43 = vector.shape_cast %42 : vector<18x16x4xf32> to vector<288x4xf32>
    %c2_49 = arith.constant 2 : index
    %c2_50 = arith.constant 2 : index
    %c0_51 = arith.constant 0 : index
    %44 = vector.load %arg10[%c2_49, %c2_50, %c0_51] : memref<20x18x4xf32, #tpu.memory_space<vmem>>, vector<18x16x4xf32>
    %45 = vector.shape_cast %44 : vector<18x16x4xf32> to vector<288x4xf32>
    %46 = tpu.concatenate %41, %43, %45 in 1 : vector<288x4xf32>, vector<288x4xf32>, vector<288x4xf32> -> vector<288x12xf32>
    %c2_52 = arith.constant 2 : index
    %c0_53 = arith.constant 0 : index
    %c0_54 = arith.constant 0 : index
    %47 = vector.load %arg5[%c2_52, %c0_53, %c0_54] : memref<3x12x4xf32, #tpu.memory_space<vmem>>, vector<1x12x4xf32>
    %48 = vector.shape_cast %47 : vector<1x12x4xf32> to vector<12x4xf32>
    %cst_55 = arith.constant dense<0.000000e+00> : vector<288x4xf32>
    %49 = tpu.matmul %46, %48, %cst_55 {dimension_numbers = #tpu.dot_dimension_numbers<[1], [0], [0], [1], [0, 0, 1, 1], [], []>} : vector<288x12xf32>, vector<12x4xf32>, vector<288x4xf32> -> vector<288x4xf32>
    %50 = arith.addf %39, %49 : vector<288x4xf32>
    %c0_56 = arith.constant 0 : index
    %c0_57 = arith.constant 0 : index
    %51 = vector.load %arg6[%c0_56, %c0_57] : memref<1x4xf32, #tpu.memory_space<vmem>>, vector<1x4xf32>
    %52 = vector.broadcast %51 : vector<1x4xf32> to vector<288x4xf32>
    %53 = arith.addf %50, %52 : vector<288x4xf32>
    %cst_58 = arith.constant 0.000000e+00 : f32
    %54 = vector.broadcast %cst_58 : f32 to vector<288x4xf32>
    %55 = arith.maximumf %53, %54 : vector<288x4xf32>
    %cst_59 = arith.constant 0.000000e+00 : f32
    %56 = vector.broadcast %cst_59 : f32 to vector<18x1x4xf32>
    %c0_60 = arith.constant 0 : index
    %c0_61 = arith.constant 0 : index
    %c0_62 = arith.constant 0 : index
    %57 = vector.load %arg11[%c0_60, %c0_61, %c0_62] : memref<18x18x4xf32, #tpu.memory_space<vmem>>, vector<18x1x4xf32>
    tpu.vector_store %arg11[%c0_60, %c0_61, %c0_62], %56 {strides = array<i32>} : memref<18x18x4xf32, #tpu.memory_space<vmem>>, vector<18x1x4xf32>,
    %cst_63 = arith.constant 0.000000e+00 : f32
    %58 = vector.broadcast %cst_63 : f32 to vector<18x1x4xf32>
    %c0_64 = arith.constant 0 : index
    %c17_65 = arith.constant 17 : index
    %c0_66 = arith.constant 0 : index
    %59 = vector.load %arg11[%c0_64, %c17_65, %c0_66] : memref<18x18x4xf32, #tpu.memory_space<vmem>>, vector<18x1x4xf32>
    tpu.vector_store %arg11[%c0_64, %c17_65, %c0_66], %58 {strides = array<i32>} : memref<18x18x4xf32, #tpu.memory_space<vmem>>, vector<18x1x4xf32>,
    %60 = vector.shape_cast %55 : vector<288x4xf32> to vector<18x16x4xf32>
    %c0_67 = arith.constant 0 : index
    %c1_68 = arith.constant 1 : index
    %c0_69 = arith.constant 0 : index
    %61 = vector.load %arg11[%c0_67, %c1_68, %c0_69] : memref<18x18x4xf32, #tpu.memory_space<vmem>>, vector<18x16x4xf32>
    tpu.vector_store %arg11[%c0_67, %c1_68, %c0_69], %60 {strides = array<i32>} : memref<18x18x4xf32, #tpu.memory_space<vmem>>, vector<18x16x4xf32>,
    %c0_i32_70 = arith.constant 0 : i32
    %62 = arith.cmpi eq, %arg1, %c0_i32_70 : i32
    %63 = arith.extui %62 : i1 to i32
    %c0_i32_71 = arith.constant 0 : i32
    %64 = arith.cmpi ne, %63, %c0_i32_71 : i32
    scf.if %64 {
      %cst_123 = arith.constant 0.000000e+00 : f32
      %111 = vector.broadcast %cst_123 : f32 to vector<1x18x4xf32>
      %c0_124 = arith.constant 0 : index
      %c0_125 = arith.constant 0 : index
      %c0_126 = arith.constant 0 : index
      %112 = vector.load %arg11[%c0_124, %c0_125, %c0_126] : memref<18x18x4xf32, #tpu.memory_space<vmem>>, vector<1x18x4xf32>
      tpu.vector_store %arg11[%c0_124, %c0_125, %c0_126], %111 {strides = array<i32>} : memref<18x18x4xf32, #tpu.memory_space<vmem>>, vector<1x18x4xf32>,
    } else {
    }
    %c0_i32_72 = arith.constant 0 : i32
    %65 = arith.cmpi eq, %arg1, %c0_i32_72 : i32
    %66 = arith.extui %65 : i1 to i32
    %c0_i32_73 = arith.constant 0 : i32
    %67 = arith.cmpi ne, %66, %c0_i32_73 : i32
    scf.if %67 {
      %cst_123 = arith.constant 0.000000e+00 : f32
      %111 = vector.broadcast %cst_123 : f32 to vector<1x18x4xf32>
      %c17_124 = arith.constant 17 : index
      %c0_125 = arith.constant 0 : index
      %c0_126 = arith.constant 0 : index
      %112 = vector.load %arg11[%c17_124, %c0_125, %c0_126] : memref<18x18x4xf32, #tpu.memory_space<vmem>>, vector<1x18x4xf32>
      tpu.vector_store %arg11[%c17_124, %c0_125, %c0_126], %111 {strides = array<i32>} : memref<18x18x4xf32, #tpu.memory_space<vmem>>, vector<1x18x4xf32>,
    } else {
    }
    %c0_74 = arith.constant 0 : index
    %c0_75 = arith.constant 0 : index
    %c0_76 = arith.constant 0 : index
    %68 = vector.load %arg11[%c0_74, %c0_75, %c0_76] : memref<18x18x4xf32, #tpu.memory_space<vmem>>, vector<16x16x4xf32>
    %69 = vector.shape_cast %68 : vector<16x16x4xf32> to vector<256x4xf32>
    %c0_77 = arith.constant 0 : index
    %c1_78 = arith.constant 1 : index
    %c0_79 = arith.constant 0 : index
    %70 = vector.load %arg11[%c0_77, %c1_78, %c0_79] : memref<18x18x4xf32, #tpu.memory_space<vmem>>, vector<16x16x4xf32>
    %71 = vector.shape_cast %70 : vector<16x16x4xf32> to vector<256x4xf32>
    %c0_80 = arith.constant 0 : index
    %c2_81 = arith.constant 2 : index
    %c0_82 = arith.constant 0 : index
    %72 = vector.load %arg11[%c0_80, %c2_81, %c0_82] : memref<18x18x4xf32, #tpu.memory_space<vmem>>, vector<16x16x4xf32>
    %73 = vector.shape_cast %72 : vector<16x16x4xf32> to vector<256x4xf32>
    %74 = tpu.concatenate %69, %71, %73 in 1 : vector<256x4xf32>, vector<256x4xf32>, vector<256x4xf32> -> vector<256x12xf32>
    %c0_83 = arith.constant 0 : index
    %c0_84 = arith.constant 0 : index
    %c0_85 = arith.constant 0 : index
    %75 = vector.load %arg7[%c0_83, %c0_84, %c0_85] : memref<3x12x4xf32, #tpu.memory_space<vmem>>, vector<1x12x4xf32>
    %76 = vector.shape_cast %75 : vector<1x12x4xf32> to vector<12x4xf32>
    %cst_86 = arith.constant dense<0.000000e+00> : vector<256x4xf32>
    %77 = tpu.matmul %74, %76, %cst_86 {dimension_numbers = #tpu.dot_dimension_numbers<[1], [0], [0], [1], [0, 0, 1, 1], [], []>} : vector<256x12xf32>, vector<12x4xf32>, vector<256x4xf32> -> vector<256x4xf32>
    %c1_87 = arith.constant 1 : index
    %c0_88 = arith.constant 0 : index
    %c0_89 = arith.constant 0 : index
    %78 = vector.load %arg11[%c1_87, %c0_88, %c0_89] : memref<18x18x4xf32, #tpu.memory_space<vmem>>, vector<16x16x4xf32>
    %79 = vector.shape_cast %78 : vector<16x16x4xf32> to vector<256x4xf32>
    %c1_90 = arith.constant 1 : index
    %c1_91 = arith.constant 1 : index
    %c0_92 = arith.constant 0 : index
    %80 = vector.load %arg11[%c1_90, %c1_91, %c0_92] : memref<18x18x4xf32, #tpu.memory_space<vmem>>, vector<16x16x4xf32>
    %81 = vector.shape_cast %80 : vector<16x16x4xf32> to vector<256x4xf32>
    %c1_93 = arith.constant 1 : index
    %c2_94 = arith.constant 2 : index
    %c0_95 = arith.constant 0 : index
    %82 = vector.load %arg11[%c1_93, %c2_94, %c0_95] : memref<18x18x4xf32, #tpu.memory_space<vmem>>, vector<16x16x4xf32>
    %83 = vector.shape_cast %82 : vector<16x16x4xf32> to vector<256x4xf32>
    %84 = tpu.concatenate %79, %81, %83 in 1 : vector<256x4xf32>, vector<256x4xf32>, vector<256x4xf32> -> vector<256x12xf32>
    %c1_96 = arith.constant 1 : index
    %c0_97 = arith.constant 0 : index
    %c0_98 = arith.constant 0 : index
    %85 = vector.load %arg7[%c1_96, %c0_97, %c0_98] : memref<3x12x4xf32, #tpu.memory_space<vmem>>, vector<1x12x4xf32>
    %86 = vector.shape_cast %85 : vector<1x12x4xf32> to vector<12x4xf32>
    %cst_99 = arith.constant dense<0.000000e+00> : vector<256x4xf32>
    %87 = tpu.matmul %84, %86, %cst_99 {dimension_numbers = #tpu.dot_dimension_numbers<[1], [0], [0], [1], [0, 0, 1, 1], [], []>} : vector<256x12xf32>, vector<12x4xf32>, vector<256x4xf32> -> vector<256x4xf32>
    %88 = arith.addf %77, %87 : vector<256x4xf32>
    %c2_100 = arith.constant 2 : index
    %c0_101 = arith.constant 0 : index
    %c0_102 = arith.constant 0 : index
    %89 = vector.load %arg11[%c2_100, %c0_101, %c0_102] : memref<18x18x4xf32, #tpu.memory_space<vmem>>, vector<16x16x4xf32>
    %90 = vector.shape_cast %89 : vector<16x16x4xf32> to vector<256x4xf32>
    %c2_103 = arith.constant 2 : index
    %c1_104 = arith.constant 1 : index
    %c0_105 = arith.constant 0 : index
    %91 = vector.load %arg11[%c2_103, %c1_104, %c0_105] : memref<18x18x4xf32, #tpu.memory_space<vmem>>, vector<16x16x4xf32>
    %92 = vector.shape_cast %91 : vector<16x16x4xf32> to vector<256x4xf32>
    %c2_106 = arith.constant 2 : index
    %c2_107 = arith.constant 2 : index
    %c0_108 = arith.constant 0 : index
    %93 = vector.load %arg11[%c2_106, %c2_107, %c0_108] : memref<18x18x4xf32, #tpu.memory_space<vmem>>, vector<16x16x4xf32>
    %94 = vector.shape_cast %93 : vector<16x16x4xf32> to vector<256x4xf32>
    %95 = tpu.concatenate %90, %92, %94 in 1 : vector<256x4xf32>, vector<256x4xf32>, vector<256x4xf32> -> vector<256x12xf32>
    %c2_109 = arith.constant 2 : index
    %c0_110 = arith.constant 0 : index
    %c0_111 = arith.constant 0 : index
    %96 = vector.load %arg7[%c2_109, %c0_110, %c0_111] : memref<3x12x4xf32, #tpu.memory_space<vmem>>, vector<1x12x4xf32>
    %97 = vector.shape_cast %96 : vector<1x12x4xf32> to vector<12x4xf32>
    %cst_112 = arith.constant dense<0.000000e+00> : vector<256x4xf32>
    %98 = tpu.matmul %95, %97, %cst_112 {dimension_numbers = #tpu.dot_dimension_numbers<[1], [0], [0], [1], [0, 0, 1, 1], [], []>} : vector<256x12xf32>, vector<12x4xf32>, vector<256x4xf32> -> vector<256x4xf32>
    %99 = arith.addf %88, %98 : vector<256x4xf32>
    %c0_113 = arith.constant 0 : index
    %c0_114 = arith.constant 0 : index
    %100 = vector.load %arg8[%c0_113, %c0_114] : memref<1x4xf32, #tpu.memory_space<vmem>>, vector<1x4xf32>
    %101 = vector.broadcast %100 : vector<1x4xf32> to vector<256x4xf32>
    %102 = arith.addf %99, %101 : vector<256x4xf32>
    %c0_115 = arith.constant 0 : index
    %c0_116 = arith.constant 0 : index
    %c0_117 = arith.constant 0 : index
    %c0_118 = arith.constant 0 : index
    %103 = vector.load %arg2[%c0_115, %c0_116, %c0_117, %c0_118] : memref<1x16x16x4xf32, #tpu.memory_space<vmem>>, vector<1x16x16x4xf32>
    %104 = vector.shape_cast %103 : vector<1x16x16x4xf32> to vector<16x16x4xf32>
    %105 = vector.shape_cast %104 : vector<16x16x4xf32> to vector<256x4xf32>
    %106 = arith.addf %105, %102 : vector<256x4xf32>
    %107 = vector.shape_cast %106 : vector<256x4xf32> to vector<16x16x4xf32>
    %c0_119 = arith.constant 0 : index
    %c0_120 = arith.constant 0 : index
    %c0_121 = arith.constant 0 : index
    %c0_122 = arith.constant 0 : index
    %108 = vector.load %arg9[%c0_119, %c0_120, %c0_121, %c0_122] : memref<1x16x16x4xf32, #tpu.memory_space<vmem>>, vector<1x16x16x4xf32>
    %109 = vector.shape_cast %108 : vector<1x16x16x4xf32> to vector<16x16x4xf32>
    %110 = vector.shape_cast %107 : vector<16x16x4xf32> to vector<1x16x16x4xf32>
    tpu.vector_store %arg9[%c0_119, %c0_120, %c0_121, %c0_122], %110 {strides = array<i32>} : memref<1x16x16x4xf32, #tpu.memory_space<vmem>>, vector<1x16x16x4xf32>,
    return
  }
  func.func @transform_0(%arg0: i32, %arg1: i32) -> (i32, i32, i32, i32) {
    %c0_i32 = arith.constant 0 : i32
    %c0_i32_0 = arith.constant 0 : i32
    %c0_i32_1 = arith.constant 0 : i32
    return %arg0, %arg1, %c0_i32, %c0_i32_0 : i32, i32, i32, i32
  }
  func.func @transform_1(%arg0: i32, %arg1: i32) -> (i32, i32, i32, i32) {
    %c8_i32 = arith.constant 8 : i32
    %0 = arith.muli %arg1, %c8_i32 : i32
    %c1_i32 = arith.constant 1 : i32
    %1 = arith.subi %0, %c1_i32 : i32
    %c0_i32 = arith.constant 0 : i32
    %2 = arith.maxsi %1, %c0_i32 : i32
    %c0_i32_0 = arith.constant 0 : i32
    %c0_i32_1 = arith.constant 0 : i32
    %c0_i32_2 = arith.constant 0 : i32
    return %arg0, %2, %c0_i32_0, %c0_i32_1 : i32, i32, i32, i32
  }
  func.func @transform_2(%arg0: i32, %arg1: i32) -> (i32, i32, i32, i32) {
    %c1_i32 = arith.constant 1 : i32
    %0 = arith.addi %arg1, %c1_i32 : i32
    %c8_i32 = arith.constant 8 : i32
    %1 = arith.muli %0, %c8_i32 : i32
    %c7_i32 = arith.constant 7 : i32
    %2 = arith.minsi %1, %c7_i32 : i32
    %c0_i32 = arith.constant 0 : i32
    %c0_i32_0 = arith.constant 0 : i32
    %c0_i32_1 = arith.constant 0 : i32
    return %arg0, %2, %c0_i32, %c0_i32_0 : i32, i32, i32, i32
  }
  func.func @transform_3(%arg0: i32, %arg1: i32) -> (i32, i32, i32) {
    %c0_i32 = arith.constant 0 : i32
    %c0_i32_0 = arith.constant 0 : i32
    %c0_i32_1 = arith.constant 0 : i32
    %c0_i32_2 = arith.constant 0 : i32
    return %c0_i32, %c0_i32_0, %c0_i32_1 : i32, i32, i32
  }
  func.func @transform_4(%arg0: i32, %arg1: i32) -> (i32, i32) {
    %c0_i32 = arith.constant 0 : i32
    %c0_i32_0 = arith.constant 0 : i32
    %c0_i32_1 = arith.constant 0 : i32
    return %c0_i32, %c0_i32_0 : i32, i32
  }
  func.func @transform_5(%arg0: i32, %arg1: i32) -> (i32, i32, i32) {
    %c0_i32 = arith.constant 0 : i32
    %c0_i32_0 = arith.constant 0 : i32
    %c0_i32_1 = arith.constant 0 : i32
    %c0_i32_2 = arith.constant 0 : i32
    return %c0_i32, %c0_i32_0, %c0_i32_1 : i32, i32, i32
  }
  func.func @transform_6(%arg0: i32, %arg1: i32) -> (i32, i32) {
    %c0_i32 = arith.constant 0 : i32
    %c0_i32_0 = arith.constant 0 : i32
    %c0_i32_1 = arith.constant 0 : i32
    return %c0_i32, %c0_i32_0 : i32, i32
  }
  func.func @transform_7(%arg0: i32, %arg1: i32) -> (i32, i32, i32, i32) {
    %c0_i32 = arith.constant 0 : i32
    %c0_i32_0 = arith.constant 0 : i32
    %c0_i32_1 = arith.constant 0 : i32
    return %arg0, %arg1, %c0_i32, %c0_i32_0 : i32, i32, i32, i32
  }
}

</mosaic_0001>

<llo_original>
// kernel: tpu_custom_call.1
$region0: #{tpu_custom_call.1}
  #allocation0 [shape = 'u32[]', space=smem, size = 0x4, offset = 0x4, fixed_abs, tag = 'smem constant byte address 0x4 - core index']
  #allocation1 [shape = 'u32[72,128]{1,0:T(1,128)}', space=vmem, size = 0x9000, scoped, tag = 'internal scratch']
  #allocation2 [shape = 'f32[20,18,4]{2,1,0:T(8,128)}', space=vmem, size = 0x3c000, scoped, tag = 'scratch operand']
  #allocation3 [shape = 'f32[18,18,4]{2,1,0:T(8,128)}', space=vmem, size = 0x36000, scoped, tag = 'scratch operand']
  %s0 = inlined_call_operand.vmem [shape: f32[2,16,16,4], index: 0, kind: input, shape index: {}]
  %s1 = inlined_call_operand.vmem [shape: f32[2,16,16,4], index: 1, kind: input, shape index: {}]
  %s2 = inlined_call_operand.vmem [shape: f32[2,16,16,4], index: 2, kind: input, shape index: {}]
  %s3 = inlined_call_operand.vmem [shape: f32[3,12,4], index: 3, kind: input, shape index: {}]
  %s4 = inlined_call_operand.vmem [shape: f32[1,4], index: 4, kind: input, shape index: {}]
  %s5 = inlined_call_operand.vmem [shape: f32[3,12,4], index: 5, kind: input, shape index: {}]
  %s6 = inlined_call_operand.vmem [shape: f32[1,4], index: 6, kind: input, shape index: {}]
  %s7 = inlined_call_operand.vmem [shape: f32[2,16,16,4], index: 7, kind: output, shape index: {}]
  %s8 = sld [smem:[#allocation0]]
  $region81: #{tpu_custom_call.1} parent=0
    _
  %s10 = ssub.s32 1, %s8
  %s11 = scalar_select 0, %s10, %s8
  loop: start=0, step=1, limit=4
  $region2: #{tpu_custom_call.1} parent=0 // loop_pre_header
    _
  $region3: #{tpu_custom_call.1} parent=0 // loop_header
    %s13 = sphi 0, %s17
    %p14 = scmp.ge.s32.totalorder %s13, 4
    %s20 = sphi 0, %s32
    %s21 = sphi 0, %s28
    %s22 = sphi 0, %s20
    %s23 = sphi 0, %s21
    %s24 = sphi 0, %s22
    %s25 = sphi 0, %s23
    %s37 = sphi 0, %s39
    %s40 = sphi 0, %s37
    %s41 = sphi 0, %s40
    %s57 = sphi 0, %s41
    %s73 = sphi 0, %s75
    %s76 = sphi 0, %s73
    %s77 = sphi 0, %s76
    %s93 = sphi 0, %s77
    %s109 = sphi 0, %s111
    %s112 = sphi 0, %s109
    %s113 = sphi 0, %s112
    %s129 = sphi 0, %s113
    %s133 = sphi 0, %s133
    %s135 = sphi 0, %s133
    %s136 = sphi 0, %s135
    %s150 = sphi 0, %s136
    %s154 = sphi 0, %s154
    %s156 = sphi 0, %s154
    %s157 = sphi 0, %s156
    %s171 = sphi 0, %s157
    %s175 = sphi 0, %s175
    %s177 = sphi 0, %s175
    %s178 = sphi 0, %s177
    %s192 = sphi 0, %s178
    %s196 = sphi 0, %s196
    %s198 = sphi 0, %s196
    %s199 = sphi 0, %s198
    %s213 = sphi 0, %s199
    %s221 = sphi 0, %s223
    %s224 = sphi 0, %s221
    %s225 = sphi 0, %s224
    %s241 = sphi 0, %s225
  $region4: #{tpu_custom_call.1} parent=0 // loop_header_branch
    %16 = sbr.rel (%p14) target = $region8
  $region5: #{tpu_custom_call.1} parent=0 // loop_body
    %s18 = ssub.s32 %s13, 1
    %s19 = ssub.s32 %s13, 2
    %s26 = sadd.s32 1, %s21
    %p27 = scmp.ge.s32.totalorder %s26, 1
    %s28 = scalar_select %p27, 0, %s26
    %s29 = sadd.s32 1, %s20
    %s30 = scalar_select %p27, %s29, %s20
    %p31 = scmp.ge.s32.totalorder %s30, 2
    %s32 = scalar_select %p31, 0, %s30
    %s33 = ssub.s32 %s20, %s32
    %s34 = ssub.s32 %s21, %s28
    %s35 = sor.u32 %s33, %s34
    %p36 = scmp.eq.s32.totalorder %s35, 0
    %s38 = sadd.s32 %s37, 1
    %s39 = scalar_select %p36, %s37, %s38
    %p42 = pneg %p36
    %p43 = scmp.eq.s32.totalorder %s13, 1
    %p44 = por %p42, %p43
    %p45 = scmp.ne.s32.totalorder %s37, %s40
    %p46 = scmp.eq.s32.totalorder %s13, 0
    %p47 = por %p45, %p46
    %p48 = scmp.ne.s32.totalorder %s37, %s40
    %p49 = scmp.eq.s32.totalorder %s18, 1
    %p50 = por %p48, %p49
    %p51 = scmp.ne.s32.totalorder %s40, %s41
    %p52 = scmp.eq.s32.totalorder %s18, 0
    %p53 = por %p51, %p52
    %p54 = scmp.ne.s32.totalorder %s40, %s41
    %p55 = scmp.eq.s32.totalorder %s19, 1
    %p56 = por %p54, %p55
    %p58 = scmp.ne.s32.totalorder %s41, %s57
    %p59 = scmp.eq.s32.totalorder %s19, 0
    %p60 = por %p58, %p59
    %s61 = smul.u32 %s21, 8
    %s62 = ssub.s32 %s61, 1
    %p63 = scmp.gt.s32.totalorder %s62, 0
    %s64 = scalar_select %p63, %s62, 0
    %s65 = smul.u32 %s28, 8
    %s66 = ssub.s32 %s65, 1
    %p67 = scmp.gt.s32.totalorder %s66, 0
    %s68 = scalar_select %p67, %s66, 0
    %s69 = ssub.s32 %s20, %s32
    %s70 = ssub.s32 %s64, %s68
    %s71 = sor.u32 %s69, %s70
    %p72 = scmp.eq.s32.totalorder %s71, 0
    %s74 = sadd.s32 %s73, 1
    %s75 = scalar_select %p72, %s73, %s74
    %p78 = pneg %p72
    %p79 = scmp.eq.s32.totalorder %s13, 1
    %p80 = por %p78, %p79
    %p81 = scmp.ne.s32.totalorder %s73, %s76
    %p82 = scmp.eq.s32.totalorder %s13, 0
    %p83 = por %p81, %p82
    %p84 = scmp.ne.s32.totalorder %s73, %s76
    %p85 = scmp.eq.s32.totalorder %s18, 1
    %p86 = por %p84, %p85
    %p87 = scmp.ne.s32.totalorder %s76, %s77
    %p88 = scmp.eq.s32.totalorder %s18, 0
    %p89 = por %p87, %p88
    %p90 = scmp.ne.s32.totalorder %s76, %s77
    %p91 = scmp.eq.s32.totalorder %s19, 1
    %p92 = por %p90, %p91
    %p94 = scmp.ne.s32.totalorder %s77, %s93
    %p95 = scmp.eq.s32.totalorder %s19, 0
    %p96 = por %p94, %p95
    %s97 = sadd.s32 %s21, 1
    %s98 = smul.u32 %s97, 8
    %p99 = scmp.lt.s32.totalorder %s98, 7
    %s100 = scalar_select %p99, %s98, 7
    %s101 = sadd.s32 %s28, 1
    %s102 = smul.u32 %s101, 8
    %p103 = scmp.lt.s32.totalorder %s102, 7
    %s104 = scalar_select %p103, %s102, 7
    %s105 = ssub.s32 %s20, %s32
    %s106 = ssub.s32 %s100, %s104
    %s107 = sor.u32 %s105, %s106
    %p108 = scmp.eq.s32.totalorder %s107, 0
    %s110 = sadd.s32 %s109, 1
    %s111 = scalar_select %p108, %s109, %s110
    %p114 = pneg %p108
    %p115 = scmp.eq.s32.totalorder %s13, 1
    %p116 = por %p114, %p115
    %p117 = scmp.ne.s32.totalorder %s109, %s112
    %p118 = scmp.eq.s32.totalorder %s13, 0
    %p119 = por %p117, %p118
    %p120 = scmp.ne.s32.totalorder %s109, %s112
    %p121 = scmp.eq.s32.totalorder %s18, 1
    %p122 = por %p120, %p121
    %p123 = scmp.ne.s32.totalorder %s112, %s113
    %p124 = scmp.eq.s32.totalorder %s18, 0
    %p125 = por %p123, %p124
    %p126 = scmp.ne.s32.totalorder %s112, %s113
    %p127 = scmp.eq.s32.totalorder %s19, 1
    %p128 = por %p126, %p127
    %p130 = scmp.ne.s32.totalorder %s113, %s129
    %p131 = scmp.eq.s32.totalorder %s19, 0
    %p132 = por %p130, %p131
    %s134 = sadd.s32 %s133, 1
    %p137 = scmp.eq.s32.totalorder %s13, 1
    %p138 = scmp.ne.s32.totalorder %s133, %s135
    %p139 = scmp.eq.s32.totalorder %s13, 0
    %p140 = por %p138, %p139
    %p141 = scmp.ne.s32.totalorder %s133, %s135
    %p142 = scmp.eq.s32.totalorder %s18, 1
    %p143 = por %p141, %p142
    %p144 = scmp.ne.s32.totalorder %s135, %s136
    %p145 = scmp.eq.s32.totalorder %s18, 0
    %p146 = por %p144, %p145
    %p147 = scmp.ne.s32.totalorder %s135, %s136
    %p148 = scmp.eq.s32.totalorder %s19, 1
    %p149 = por %p147, %p148
    %p151 = scmp.ne.s32.totalorder %s136, %s150
    %p152 = scmp.eq.s32.totalorder %s19, 0
    %p153 = por %p151, %p152
    %s155 = sadd.s32 %s154, 1
    %p158 = scmp.eq.s32.totalorder %s13, 1
    %p159 = scmp.ne.s32.totalorder %s154, %s156
    %p160 = scmp.eq.s32.totalorder %s13, 0
    %p161 = por %p159, %p160
    %p162 = scmp.ne.s32.totalorder %s154, %s156
    %p163 = scmp.eq.s32.totalorder %s18, 1
    %p164 = por %p162, %p163
    %p165 = scmp.ne.s32.totalorder %s156, %s157
    %p166 = scmp.eq.s32.totalorder %s18, 0
    %p167 = por %p165, %p166
    %p168 = scmp.ne.s32.totalorder %s156, %s157
    %p169 = scmp.eq.s32.totalorder %s19, 1
    %p170 = por %p168, %p169
    %p172 = scmp.ne.s32.totalorder %s157, %s171
    %p173 = scmp.eq.s32.totalorder %s19, 0
    %p174 = por %p172, %p173
    %s176 = sadd.s32 %s175, 1
    %p179 = scmp.eq.s32.totalorder %s13, 1
    %p180 = scmp.ne.s32.totalorder %s175, %s177
    %p181 = scmp.eq.s32.totalorder %s13, 0
    %p182 = por %p180, %p181
    %p183 = scmp.ne.s32.totalorder %s175, %s177
    %p184 = scmp.eq.s32.totalorder %s18, 1
    %p185 = por %p183, %p184
    %p186 = scmp.ne.s32.totalorder %s177, %s178
    %p187 = scmp.eq.s32.totalorder %s18, 0
    %p188 = por %p186, %p187
    %p189 = scmp.ne.s32.totalorder %s177, %s178
    %p190 = scmp.eq.s32.totalorder %s19, 1
    %p191 = por %p189, %p190
    %p193 = scmp.ne.s32.totalorder %s178, %s192
    %p194 = scmp.eq.s32.totalorder %s19, 0
    %p195 = por %p193, %p194
    %s197 = sadd.s32 %s196, 1
    %p200 = scmp.eq.s32.totalorder %s13, 1
    %p201 = scmp.ne.s32.totalorder %s196, %s198
    %p202 = scmp.eq.s32.totalorder %s13, 0
    %p203 = por %p201, %p202
    %p204 = scmp.ne.s32.totalorder %s196, %s198
    %p205 = scmp.eq.s32.totalorder %s18, 1
    %p206 = por %p204, %p205
    %p207 = scmp.ne.s32.totalorder %s198, %s199
    %p208 = scmp.eq.s32.totalorder %s18, 0
    %p209 = por %p207, %p208
    %p210 = scmp.ne.s32.totalorder %s198, %s199
    %p211 = scmp.eq.s32.totalorder %s19, 1
    %p212 = por %p210, %p211
    %p214 = scmp.ne.s32.totalorder %s199, %s213
    %p215 = scmp.eq.s32.totalorder %s19, 0
    %p216 = por %p214, %p215
    %s217 = ssub.s32 %s20, %s32
    %s218 = ssub.s32 %s21, %s28
    %s219 = sor.u32 %s217, %s218
    %p220 = scmp.eq.s32.totalorder %s219, 0
    %s222 = sadd.s32 %s221, 1
    %s223 = scalar_select %p220, %s221, %s222
    %p226 = pneg %p220
    %p227 = scmp.eq.s32.totalorder %s13, 1
    %p228 = por %p226, %p227
    %p229 = scmp.ne.s32.totalorder %s221, %s224
    %p230 = scmp.eq.s32.totalorder %s13, 0
    %p231 = por %p229, %p230
    %p232 = scmp.ne.s32.totalorder %s221, %s224
    %p233 = scmp.eq.s32.totalorder %s18, 1
    %p234 = por %p232, %p233
    %p235 = scmp.ne.s32.totalorder %s224, %s225
    %p236 = scmp.eq.s32.totalorder %s18, 0
    %p237 = por %p235, %p236
    %p238 = scmp.ne.s32.totalorder %s224, %s225
    %p239 = scmp.eq.s32.totalorder %s19, 1
    %p240 = por %p238, %p239
    %p242 = scmp.ne.s32.totalorder %s225, %s241
    %p243 = scmp.eq.s32.totalorder %s19, 0
    %p244 = por %p242, %p243
    %p245 = scmp.le.s32.totalorder 1, %s13
    %p246 = scmp.lt.s32.totalorder %s13, 3
    %p247 = pnand %p245, %p246
    %p248 = pneg %p247
    // Predicated region
    $region9: #{tpu_custom_call.1} parent=5 // pred_check
      _
    $region10: #{tpu_custom_call.1} parent=5 // pred_check_branch
      %250 = sbr.rel (%p247) target = $region12
    $region11: #{tpu_custom_call.1} parent=5 // pred_region
      %s251 = ssub.s32 %s13, 1
      // Predicated region
      $region13: #{tpu_custom_call.1} parent=11 // pred_check
        %p252 = pneg %p146
      $region14: #{tpu_custom_call.1} parent=11 // pred_check_branch
        %254 = sbr.rel (%p252) target = $region16
      $region15: #{tpu_custom_call.1} parent=11 // pred_region
        _
      $region16: #{tpu_custom_call.1} parent=11 // pred_fallthru
        _
      // Predicated region
      $region17: #{tpu_custom_call.1} parent=11 // pred_check
        %p255 = pneg %p167
      $region18: #{tpu_custom_call.1} parent=11 // pred_check_branch
        %257 = sbr.rel (%p255) target = $region20
      $region19: #{tpu_custom_call.1} parent=11 // pred_region
        _
      $region20: #{tpu_custom_call.1} parent=11 // pred_fallthru
        _
      // Predicated region
      $region21: #{tpu_custom_call.1} parent=11 // pred_check
        %p258 = pneg %p188
      $region22: #{tpu_custom_call.1} parent=11 // pred_check_branch
        %260 = sbr.rel (%p258) target = $region24
      $region23: #{tpu_custom_call.1} parent=11 // pred_region
        _
      $region24: #{tpu_custom_call.1} parent=11 // pred_fallthru
        _
      // Predicated region
      $region25: #{tpu_custom_call.1} parent=11 // pred_check
        %p261 = pneg %p209
      $region26: #{tpu_custom_call.1} parent=11 // pred_check_branch
        %263 = sbr.rel (%p261) target = $region28
      $region27: #{tpu_custom_call.1} parent=11 // pred_region
        _
      $region28: #{tpu_custom_call.1} parent=11 // pred_fallthru
        _
    $region12: #{tpu_custom_call.1} parent=5 // pred_fallthru
      _
    %p264 = scmp.lt.s32.totalorder %s13, 2
    // Predicated region
    $region29: #{tpu_custom_call.1} parent=5 // pred_check
      %p265 = pneg %p264
    $region30: #{tpu_custom_call.1} parent=5 // pred_check_branch
      %267 = sbr.rel (%p265) target = $region32
    $region31: #{tpu_custom_call.1} parent=5 // pred_region
      // Predicated region
      $region33: #{tpu_custom_call.1} parent=31 // pred_check
        %p268 = pneg %p47
      $region34: #{tpu_custom_call.1} parent=31 // pred_check_branch
        %270 = sbr.rel (%p268) target = $region36
      $region35: #{tpu_custom_call.1} parent=31 // pred_region
        %s271 = smul.u32 16, %s21
        %p272 = scmp.lt.s32.totalorder %s20, 1
        %s273 = scalar_select %p272, %s20, 1
        %p274 = scmp.lt.s32.totalorder %s271, 15
        %s275 = scalar_select %p274, %s271, 15
        %s276 = smul.addr %s275, 2
        %s277 = smul.addr %s273, 32
        %s278 = sadd.s32 %s276, %s277
        %s279 = smul.addr %s278, 8
        %s280 = scalar_lea.vmem %s0, %s279
        %s281 = smul.u32 16, %s21
      $region36: #{tpu_custom_call.1} parent=31 // pred_fallthru
        _
      // Predicated region
      $region37: #{tpu_custom_call.1} parent=31 // pred_check
        %p282 = pneg %p83
      $region38: #{tpu_custom_call.1} parent=31 // pred_check_branch
        %284 = sbr.rel (%p282) target = $region40
      $region39: #{tpu_custom_call.1} parent=31 // pred_region
        %s285 = smul.u32 %s21, 8
        %s286 = ssub.s32 %s285, 1
        %p287 = scmp.gt.s32.totalorder %s286, 0
        %s288 = scalar_select %p287, %s286, 0
        %s289 = smul.u32 2, %s288
        %p290 = scmp.lt.s32.totalorder %s20, 1
        %s291 = scalar_select %p290, %s20, 1
        %p292 = scmp.lt.s32.totalorder %s289, 15
        %s293 = scalar_select %p292, %s289, 15
        %s294 = smul.addr %s293, 2
        %s295 = smul.addr %s291, 32
        %s296 = sadd.s32 %s294, %s295
        %s297 = smul.addr %s296, 8
        %s298 = scalar_lea.vmem %s1, %s297
        %s299 = smul.u32 %s21, 8
        %s300 = ssub.s32 %s299, 1
        %p301 = scmp.gt.s32.totalorder %s300, 0
        %s302 = scalar_select %p301, %s300, 0
        %s303 = smul.u32 2, %s302
      $region40: #{tpu_custom_call.1} parent=31 // pred_fallthru
        _
      // Predicated region
      $region41: #{tpu_custom_call.1} parent=31 // pred_check
        %p304 = pneg %p119
      $region42: #{tpu_custom_call.1} parent=31 // pred_check_branch
        %306 = sbr.rel (%p304) target = $region44
      $region43: #{tpu_custom_call.1} parent=31 // pred_region
        %s307 = sadd.s32 %s21, 1
        %s308 = smul.u32 %s307, 8
        %p309 = scmp.lt.s32.totalorder %s308, 7
        %s310 = scalar_select %p309, %s308, 7
        %s311 = smul.u32 2, %s310
        %p312 = scmp.lt.s32.totalorder %s20, 1
        %s313 = scalar_select %p312, %s20, 1
        %p314 = scmp.lt.s32.totalorder %s311, 15
        %s315 = scalar_select %p314, %s311, 15
        %s316 = smul.addr %s315, 2
        %s317 = smul.addr %s313, 32
        %s318 = sadd.s32 %s316, %s317
        %s319 = smul.addr %s318, 8
        %s320 = scalar_lea.vmem %s2, %s319
        %s321 = sadd.s32 %s21, 1
        %s322 = smul.u32 %s321, 8
        %p323 = scmp.lt.s32.totalorder %s322, 7
        %s324 = scalar_select %p323, %s322, 7
        %s325 = smul.u32 2, %s324
      $region44: #{tpu_custom_call.1} parent=31 // pred_fallthru
        _
    $region32: #{tpu_custom_call.1} parent=5 // pred_fallthru
      _
    %p326 = scmp.le.s32.totalorder 1, %s13
    %p327 = scmp.lt.s32.totalorder %s13, 3
    %p328 = pnand %p326, %p327
    %p329 = pneg %p328
    // Predicated region
    $region45: #{tpu_custom_call.1} parent=5 // pred_check
      _
    $region46: #{tpu_custom_call.1} parent=5 // pred_check_branch
      %331 = sbr.rel (%p328) target = $region48
    $region47: #{tpu_custom_call.1} parent=5 // pred_region
      %s332 = ssub.s32 %s13, 1
      %s333 = smul.u32 16, %s23
      %p334 = scmp.lt.s32.totalorder %s22, 1
      %s335 = scalar_select %p334, %s22, 1
      %p336 = scmp.lt.s32.totalorder %s333, 15
      %s337 = scalar_select %p336, %s333, 15
      %s338 = smul.addr %s337, 2
      %s339 = smul.addr %s335, 32
      %s340 = sadd.s32 %s338, %s339
      %s341 = smul.addr %s340, 8
      %s342 = scalar_lea.vmem %s0, %s341
      %p343 = pneg %p53
      %p344 = pneg %p50
      %s345 = smul.u32 %s23, 8
      %s346 = ssub.s32 %s345, 1
      %p347 = scmp.gt.s32.totalorder %s346, 0
      %s348 = scalar_select %p347, %s346, 0
      %s349 = smul.u32 2, %s348
      %p350 = scmp.lt.s32.totalorder %s22, 1
      %s351 = scalar_select %p350, %s22, 1
      %p352 = scmp.lt.s32.totalorder %s349, 15
      %s353 = scalar_select %p352, %s349, 15
      %s354 = smul.addr %s353, 2
      %s355 = smul.addr %s351, 32
      %s356 = sadd.s32 %s354, %s355
      %s357 = smul.addr %s356, 8
      %s358 = scalar_lea.vmem %s1, %s357
      %p359 = pneg %p89
      %p360 = pneg %p86
      %s361 = sadd.s32 %s23, 1
      %s362 = smul.u32 %s361, 8
      %p363 = scmp.lt.s32.totalorder %s362, 7
      %s364 = scalar_select %p363, %s362, 7
      %s365 = smul.u32 2, %s364
      %p366 = scmp.lt.s32.totalorder %s22, 1
      %s367 = scalar_select %p366, %s22, 1
      %p368 = scmp.lt.s32.totalorder %s365, 15
      %s369 = scalar_select %p368, %s365, 15
      %s370 = smul.addr %s369, 2
      %s371 = smul.addr %s367, 32
      %s372 = sadd.s32 %s370, %s371
      %s373 = smul.addr %s372, 8
      %s374 = scalar_lea.vmem %s2, %s373
      %p375 = pneg %p125
      %p376 = pneg %p122
      %p377 = pneg %p146
      %p378 = pneg %p143
      %p379 = pneg %p167
      %p380 = pneg %p164
      %p381 = pneg %p188
      %p382 = pneg %p185
      %p383 = pneg %p209
      %p384 = pneg %p206
      %p385 = pneg %p237
      %p386 = pneg %p234
      %s387 = smul.u32 16, %s23
      %p388 = scmp.lt.s32.totalorder %s22, 1
      %s389 = scalar_select %p388, %s22, 1
      %p390 = scmp.lt.s32.totalorder %s387, 15
      %s391 = scalar_select %p390, %s387, 15
      %s392 = smul.addr %s391, 2
      %s393 = smul.addr %s389, 32
      %s394 = sadd.s32 %s392, %s393
      %s395 = smul.addr %s394, 8
      %s396 = scalar_lea.vmem %s7, %s395
      %s397 = smul.u32 16, %s23
      %p398 = scmp.lt.s32.totalorder %s22, 1
      %s399 = scalar_select %p398, %s22, 1
      %p400 = scmp.lt.s32.totalorder %s397, 15
      %s401 = scalar_select %p400, %s397, 15
      %s402 = smul.addr %s401, 2
      %s403 = smul.addr %s399, 32
      %s404 = sadd.s32 %s402, %s403
      %s405 = smul.addr %s404, 8
      %s406 = scalar_lea.vmem %s0, %s405
      %s407 = smul.u32 16, %s23
      %s408 = smul.u32 %s23, 8
      %s409 = ssub.s32 %s408, 1
      %p410 = scmp.gt.s32.totalorder %s409, 0
      %s411 = scalar_select %p410, %s409, 0
      %s412 = smul.u32 2, %s411
      %p413 = scmp.lt.s32.totalorder %s22, 1
      %s414 = scalar_select %p413, %s22, 1
      %p415 = scmp.lt.s32.totalorder %s412, 15
      %s416 = scalar_select %p415, %s412, 15
      %s417 = smul.addr %s416, 2
      %s418 = smul.addr %s414, 32
      %s419 = sadd.s32 %s417, %s418
      %s420 = smul.addr %s419, 8
      %s421 = scalar_lea.vmem %s1, %s420
      %s422 = smul.u32 %s23, 8
      %s423 = ssub.s32 %s422, 1
      %p424 = scmp.gt.s32.totalorder %s423, 0
      %s425 = scalar_select %p424, %s423, 0
      %s426 = smul.u32 2, %s425
      %s427 = sadd.s32 %s23, 1
      %s428 = smul.u32 %s427, 8
      %p429 = scmp.lt.s32.totalorder %s428, 7
      %s430 = scalar_select %p429, %s428, 7
      %s431 = smul.u32 2, %s430
      %p432 = scmp.lt.s32.totalorder %s22, 1
      %s433 = scalar_select %p432, %s22, 1
      %p434 = scmp.lt.s32.totalorder %s431, 15
      %s435 = scalar_select %p434, %s431, 15
      %s436 = smul.addr %s435, 2
      %s437 = smul.addr %s433, 32
      %s438 = sadd.s32 %s436, %s437
      %s439 = smul.addr %s438, 8
      %s440 = scalar_lea.vmem %s2, %s439
      %s441 = sadd.s32 %s23, 1
      %s442 = smul.u32 %s441, 8
      %p443 = scmp.lt.s32.totalorder %s442, 7
      %s444 = scalar_select %p443, %s442, 7
      %s445 = smul.u32 2, %s444
      %s446 = smul.u32 16, %s23
      %p447 = scmp.lt.s32.totalorder %s22, 1
      %s448 = scalar_select %p447, %s22, 1
      %p449 = scmp.lt.s32.totalorder %s446, 15
      %s450 = scalar_select %p449, %s446, 15
      %s451 = smul.addr %s450, 2
      %s452 = smul.addr %s448, 32
      %s453 = sadd.s32 %s451, %s452
      %s454 = smul.addr %s453, 8
      %s455 = scalar_lea.vmem %s7, %s454
      %s456 = smul.u32 16, %s23
      %vm457 = vcmask 24576
      %458 = vst.msk [vmem:[#allocation2] sm:$0x1] %vm457, 0.0
      %459 = vst.msk [vmem:[#allocation2 + $0x18] sm:$0x1] %vm457, 0.0
      %460 = vst.msk [vmem:[#allocation2 + $0x30] sm:$0x1] %vm457, 0.0
      %461 = vst.msk [vmem:[#allocation2 + $0x48] sm:$0x1] %vm457, 0.0
      %462 = vst.msk [vmem:[#allocation2 + $0x60] sm:$0x1] %vm457, 0.0
      %463 = vst.msk [vmem:[#allocation2 + $0x78] sm:$0x1] %vm457, 0.0
      %464 = vst.msk [vmem:[#allocation2 + $0x90] sm:$0x1] %vm457, 0.0
      %465 = vst.msk [vmem:[#allocation2 + $0xa8] sm:$0x1] %vm457, 0.0
      %466 = vst.msk [vmem:[#allocation2 + $0xc0] sm:$0x1] %vm457, 0.0
      %467 = vst.msk [vmem:[#allocation2 + $0xd8] sm:$0x1] %vm457, 0.0
      %468 = vst.msk [vmem:[#allocation2 + $0xf0] sm:$0x1] %vm457, 0.0
      %469 = vst.msk [vmem:[#allocation2 + $0x108] sm:$0x1] %vm457, 0.0
      %470 = vst.msk [vmem:[#allocation2 + $0x120] sm:$0x1] %vm457, 0.0
      %471 = vst.msk [vmem:[#allocation2 + $0x138] sm:$0x1] %vm457, 0.0
      %472 = vst.msk [vmem:[#allocation2 + $0x150] sm:$0x1] %vm457, 0.0
      %473 = vst.msk [vmem:[#allocation2 + $0x168] sm:$0x1] %vm457, 0.0
      %474 = vst.msk [vmem:[#allocation2 + $0x180] sm:$0x1] %vm457, 0.0
      %475 = vst.msk [vmem:[#allocation2 + $0x198] sm:$0x1] %vm457, 0.0
      %476 = vst.msk [vmem:[#allocation2 + $0x1b0] sm:$0x1] %vm457, 0.0
      %477 = vst.msk [vmem:[#allocation2 + $0x1c8] sm:$0x1] %vm457, 0.0
      %478 = vst.msk [vmem:[#allocation2 + $0x11] sm:$0x1] %vm457, 0.0
      %479 = vst.msk [vmem:[#allocation2 + $0x29] sm:$0x1] %vm457, 0.0
      %480 = vst.msk [vmem:[#allocation2 + $0x41] sm:$0x1] %vm457, 0.0
      %481 = vst.msk [vmem:[#allocation2 + $0x59] sm:$0x1] %vm457, 0.0
      %482 = vst.msk [vmem:[#allocation2 + $0x71] sm:$0x1] %vm457, 0.0
      %483 = vst.msk [vmem:[#allocation2 + $0x89] sm:$0x1] %vm457, 0.0
      %484 = vst.msk [vmem:[#allocation2 + $0xa1] sm:$0x1] %vm457, 0.0
      %485 = vst.msk [vmem:[#allocation2 + $0xb9] sm:$0x1] %vm457, 0.0
      %486 = vst.msk [vmem:[#allocation2 + $0xd1] sm:$0x1] %vm457, 0.0
      %487 = vst.msk [vmem:[#allocation2 + $0xe9] sm:$0x1] %vm457, 0.0
      %488 = vst.msk [vmem:[#allocation2 + $0x101] sm:$0x1] %vm457, 0.0
      %489 = vst.msk [vmem:[#allocation2 + $0x119] sm:$0x1] %vm457, 0.0
      %490 = vst.msk [vmem:[#allocation2 + $0x131] sm:$0x1] %vm457, 0.0
      %491 = vst.msk [vmem:[#allocation2 + $0x149] sm:$0x1] %vm457, 0.0
      %492 = vst.msk [vmem:[#allocation2 + $0x161] sm:$0x1] %vm457, 0.0
      %493 = vst.msk [vmem:[#allocation2 + $0x179] sm:$0x1] %vm457, 0.0
      %494 = vst.msk [vmem:[#allocation2 + $0x191] sm:$0x1] %vm457, 0.0
      %495 = vst.msk [vmem:[#allocation2 + $0x1a9] sm:$0x1] %vm457, 0.0
      %496 = vst.msk [vmem:[#allocation2 + $0x1c1] sm:$0x1] %vm457, 0.0
      %497 = vst.msk [vmem:[#allocation2 + $0x1d9] sm:$0x1] %vm457, 0.0
      %v498 = vld [vmem:[%s406] sm:$0xff]
      %v499 = vld [vmem:[%s406 + $0x8] sm:$0xff]
      %v500 = vld [vmem:[%s406 + $0x10] sm:$0xff]
      %v501 = vld [vmem:[%s406 + $0x18] sm:$0xff]
      %v502 = vld [vmem:[%s406 + $0x20] sm:$0xff]
      %v503 = vld [vmem:[%s406 + $0x28] sm:$0xff]
      %v504 = vld [vmem:[%s406 + $0x30] sm:$0xff]
      %v505 = vld [vmem:[%s406 + $0x38] sm:$0xff]
      %v506 = vld [vmem:[%s406 + $0x40] sm:$0xff]
      %v507 = vld [vmem:[%s406 + $0x48] sm:$0xff]
      %v508 = vld [vmem:[%s406 + $0x50] sm:$0xff]
      %v509 = vld [vmem:[%s406 + $0x58] sm:$0xff]
      %v510 = vld [vmem:[%s406 + $0x60] sm:$0xff]
      %v511 = vld [vmem:[%s406 + $0x68] sm:$0xff]
      %v512 = vld [vmem:[%s406 + $0x70] sm:$0xff]
      %v513 = vld [vmem:[%s406 + $0x78] sm:$0xff]
      %v514 = vld [vmem:[%s406 + $0x80] sm:$0xff]
      %v515 = vld [vmem:[%s406 + $0x88] sm:$0xff]
      %v516 = vld [vmem:[%s406 + $0x90] sm:$0xff]
      %v517 = vld [vmem:[%s406 + $0x98] sm:$0xff]
      %v518 = vld [vmem:[%s406 + $0xa0] sm:$0xff]
      %v519 = vld [vmem:[%s406 + $0xa8] sm:$0xff]
      %v520 = vld [vmem:[%s406 + $0xb0] sm:$0xff]
      %v521 = vld [vmem:[%s406 + $0xb8] sm:$0xff]
      %v522 = vld [vmem:[%s406 + $0xc0] sm:$0xff]
      %v523 = vld [vmem:[%s406 + $0xc8] sm:$0xff]
      %v524 = vld [vmem:[%s406 + $0xd0] sm:$0xff]
      %v525 = vld [vmem:[%s406 + $0xd8] sm:$0xff]
      %v526 = vld [vmem:[%s406 + $0xe0] sm:$0xff]
      %v527 = vld [vmem:[%s406 + $0xe8] sm:$0xff]
      %v528 = vld [vmem:[%s406 + $0xf0] sm:$0xff]
      %v529 = vld [vmem:[%s406 + $0xf8] sm:$0xff]
      %s530 = scalar_lea.vmem [#allocation2], 48
      %vm531 = vcmask 31744
      %532 = vst.msk [vmem:[%s530 + $0x1] sm:$0xff] %vm531, %v498
      %533 = vst.msk [vmem:[%s530 + $0x9] sm:$0xff] %vm531, %v499
      %534 = vst.msk [vmem:[%s530 + $0x19] sm:$0xff] %vm531, %v500
      %535 = vst.msk [vmem:[%s530 + $0x21] sm:$0xff] %vm531, %v501
      %536 = vst.msk [vmem:[%s530 + $0x31] sm:$0xff] %vm531, %v502
      %537 = vst.msk [vmem:[%s530 + $0x39] sm:$0xff] %vm531, %v503
      %538 = vst.msk [vmem:[%s530 + $0x49] sm:$0xff] %vm531, %v504
      %539 = vst.msk [vmem:[%s530 + $0x51] sm:$0xff] %vm531, %v505
      %540 = vst.msk [vmem:[%s530 + $0x61] sm:$0xff] %vm531, %v506
      %541 = vst.msk [vmem:[%s530 + $0x69] sm:$0xff] %vm531, %v507
      %542 = vst.msk [vmem:[%s530 + $0x79] sm:$0xff] %vm531, %v508
      %543 = vst.msk [vmem:[%s530 + $0x81] sm:$0xff] %vm531, %v509
      %544 = vst.msk [vmem:[%s530 + $0x91] sm:$0xff] %vm531, %v510
      %545 = vst.msk [vmem:[%s530 + $0x99] sm:$0xff] %vm531, %v511
      %546 = vst.msk [vmem:[%s530 + $0xa9] sm:$0xff] %vm531, %v512
      %547 = vst.msk [vmem:[%s530 + $0xb1] sm:$0xff] %vm531, %v513
      %548 = vst.msk [vmem:[%s530 + $0xc1] sm:$0xff] %vm531, %v514
      %549 = vst.msk [vmem:[%s530 + $0xc9] sm:$0xff] %vm531, %v515
      %550 = vst.msk [vmem:[%s530 + $0xd9] sm:$0xff] %vm531, %v516
      %551 = vst.msk [vmem:[%s530 + $0xe1] sm:$0xff] %vm531, %v517
      %552 = vst.msk [vmem:[%s530 + $0xf1] sm:$0xff] %vm531, %v518
      %553 = vst.msk [vmem:[%s530 + $0xf9] sm:$0xff] %vm531, %v519
      %554 = vst.msk [vmem:[%s530 + $0x109] sm:$0xff] %vm531, %v520
      %555 = vst.msk [vmem:[%s530 + $0x111] sm:$0xff] %vm531, %v521
      %556 = vst.msk [vmem:[%s530 + $0x121] sm:$0xff] %vm531, %v522
      %557 = vst.msk [vmem:[%s530 + $0x129] sm:$0xff] %vm531, %v523
      %558 = vst.msk [vmem:[%s530 + $0x139] sm:$0xff] %vm531, %v524
      %559 = vst.msk [vmem:[%s530 + $0x141] sm:$0xff] %vm531, %v525
      %560 = vst.msk [vmem:[%s530 + $0x151] sm:$0xff] %vm531, %v526
      %561 = vst.msk [vmem:[%s530 + $0x159] sm:$0xff] %vm531, %v527
      %562 = vst.msk [vmem:[%s530 + $0x169] sm:$0xff] %vm531, %v528
      %563 = vst.msk [vmem:[%s530 + $0x171] sm:$0xff] %vm531, %v529
      %p564 = scmp.eq.s32.totalorder %s23, 0
      // Predicated region
      $region49: #{tpu_custom_call.1} parent=47 // pred_check
        %p565 = pneg %p564
      $region50: #{tpu_custom_call.1} parent=47 // pred_check_branch
        %567 = sbr.rel (%p565) target = $region52
      $region51: #{tpu_custom_call.1} parent=47 // pred_region
        %568 = vst.msk [vmem:[#allocation2 + $0x1] sm:$0xff] %vm531, 0.0
        %569 = vst.msk [vmem:[#allocation2 + $0x9] sm:$0xff] %vm531, 0.0
        %570 = vst.msk [vmem:[#allocation2 + $0x19] sm:$0xff] %vm531, 0.0
        %571 = vst.msk [vmem:[#allocation2 + $0x21] sm:$0xff] %vm531, 0.0
      $region52: #{tpu_custom_call.1} parent=47 // pred_fallthru
        _
      %p572 = scmp.gt.s32.totalorder %s23, 0
      // Predicated region
      $region53: #{tpu_custom_call.1} parent=47 // pred_check
        %p573 = pneg %p572
      $region54: #{tpu_custom_call.1} parent=47 // pred_check_branch
        %575 = sbr.rel (%p573) target = $region56
      $region55: #{tpu_custom_call.1} parent=47 // pred_region
        %v576 = vld [vmem:[%s421] sm:$0xff]
        %v577 = vld [vmem:[%s421 + $0x8] sm:$0xff]
        %v578 = vld [vmem:[%s421 + $0x10] sm:$0xff]
        %v579 = vld [vmem:[%s421 + $0x18] sm:$0xff]
        %580 = vst.msk [vmem:[#allocation2 + $0x1] sm:$0xff] %vm531, %v576
        %581 = vst.msk [vmem:[#allocation2 + $0x9] sm:$0xff] %vm531, %v577
        %582 = vst.msk [vmem:[#allocation2 + $0x19] sm:$0xff] %vm531, %v578
        %583 = vst.msk [vmem:[#allocation2 + $0x21] sm:$0xff] %vm531, %v579
      $region56: #{tpu_custom_call.1} parent=47 // pred_fallthru
        _
      // Predicated region
      $region57: #{tpu_custom_call.1} parent=47 // pred_check
        %p584 = pneg %p564
      $region58: #{tpu_custom_call.1} parent=47 // pred_check_branch
        %586 = sbr.rel (%p584) target = $region60
      $region59: #{tpu_custom_call.1} parent=47 // pred_region
        %s587 = scalar_lea.vmem [#allocation2], 432
        %588 = vst.msk [vmem:[%s587 + $0x1] sm:$0xff] %vm531, 0.0
        %589 = vst.msk [vmem:[%s587 + $0x9] sm:$0xff] %vm531, 0.0
        %590 = vst.msk [vmem:[%s587 + $0x19] sm:$0xff] %vm531, 0.0
        %591 = vst.msk [vmem:[%s587 + $0x21] sm:$0xff] %vm531, 0.0
      $region60: #{tpu_custom_call.1} parent=47 // pred_fallthru
        _
      %p592 = scmp.lt.s32.totalorder %s23, 0
      // Predicated region
      $region61: #{tpu_custom_call.1} parent=47 // pred_check
        %p593 = pneg %p592
      $region62: #{tpu_custom_call.1} parent=47 // pred_check_branch
        %595 = sbr.rel (%p593) target = $region64
      $region63: #{tpu_custom_call.1} parent=47 // pred_region
        %v596 = vld [vmem:[%s440] sm:$0xff]
        %v597 = vld [vmem:[%s440 + $0x8] sm:$0xff]
        %v598 = vld [vmem:[%s440 + $0x10] sm:$0xff]
        %v599 = vld [vmem:[%s440 + $0x18] sm:$0xff]
        %s600 = scalar_lea.vmem [#allocation2], 432
        %601 = vst.msk [vmem:[%s600 + $0x1] sm:$0xff] %vm531, %v596
        %602 = vst.msk [vmem:[%s600 + $0x9] sm:$0xff] %vm531, %v597
        %603 = vst.msk [vmem:[%s600 + $0x19] sm:$0xff] %vm531, %v598
        %604 = vst.msk [vmem:[%s600 + $0x21] sm:$0xff] %vm531, %v599
      $region64: #{tpu_custom_call.1} parent=47 // pred_fallthru
        _
      %v605 = vld [vmem:[#allocation2] sm:$0xff]
      %v606 = vld [vmem:[#allocation2 + $0x8] sm:$0xff]
      %v607 = vld [vmem:[#allocation2 + $0x18] sm:$0xff]
      %v608 = vld [vmem:[#allocation2 + $0x20] sm:$0xff]
      %v609 = vld [vmem:[#allocation2 + $0x30] sm:$0xff]
      %v610 = vld [vmem:[#allocation2 + $0x38] sm:$0xff]
      %v611 = vld [vmem:[#allocation2 + $0x48] sm:$0xff]
      %v612 = vld [vmem:[#allocation2 + $0x50] sm:$0xff]
      %v613 = vld [vmem:[#allocation2 + $0x60] sm:$0xff]
      %v614 = vld [vmem:[#allocation2 + $0x68] sm:$0xff]
      %v615 = vld [vmem:[#allocation2 + $0x78] sm:$0xff]
      %v616 = vld [vmem:[#allocation2 + $0x80] sm:$0xff]
      %v617 = vld [vmem:[#allocation2 + $0x90] sm:$0xff]
      %v618 = vld [vmem:[#allocation2 + $0x98] sm:$0xff]
      %v619 = vld [vmem:[#allocation2 + $0xa8] sm:$0xff]
      %v620 = vld [vmem:[#allocation2 + $0xb0] sm:$0xff]
      %v621 = vld [vmem:[#allocation2 + $0xc0] sm:$0xff]
      %v622 = vld [vmem:[#allocation2 + $0xc8] sm:$0xff]
      %v623 = vld [vmem:[#allocation2 + $0xd8] sm:$0xff]
      %v624 = vld [vmem:[#allocation2 + $0xe0] sm:$0xff]
      %v625 = vld [vmem:[#allocation2 + $0xf0] sm:$0xff]
      %v626 = vld [vmem:[#allocation2 + $0xf8] sm:$0xff]
      %v627 = vld [vmem:[#allocation2 + $0x108] sm:$0xff]
      %v628 = vld [vmem:[#allocation2 + $0x110] sm:$0xff]
      %v629 = vld [vmem:[#allocation2 + $0x120] sm:$0xff]
      %v630 = vld [vmem:[#allocation2 + $0x128] sm:$0xff]
      %v631 = vld [vmem:[#allocation2 + $0x138] sm:$0xff]
      %v632 = vld [vmem:[#allocation2 + $0x140] sm:$0xff]
      %v633 = vld [vmem:[#allocation2 + $0x150] sm:$0xff]
      %v634 = vld [vmem:[#allocation2 + $0x158] sm:$0xff]
      %v635 = vld [vmem:[#allocation2 + $0x168] sm:$0xff]
      %v636 = vld [vmem:[#allocation2 + $0x170] sm:$0xff]
      %v637 = vld [vmem:[#allocation2 + $0x180] sm:$0xff]
      %v638 = vld [vmem:[#allocation2 + $0x188] sm:$0xff]
      %v639 = vld [vmem:[#allocation2 + $0x198] sm:$0xff]
      %v640 = vld [vmem:[#allocation2 + $0x1a0] sm:$0xff]
      %v641 = vld [vmem:[#allocation2 + $0x1] sm:$0xff]
      %v642 = vld [vmem:[#allocation2 + $0x9] sm:$0xff]
      %v643 = vld [vmem:[#allocation2 + $0x19] sm:$0xff]
      %v644 = vld [vmem:[#allocation2 + $0x21] sm:$0xff]
      %v645 = vld [vmem:[#allocation2 + $0x31] sm:$0xff]
      %v646 = vld [vmem:[#allocation2 + $0x39] sm:$0xff]
      %v647 = vld [vmem:[#allocation2 + $0x49] sm:$0xff]
      %v648 = vld [vmem:[#allocation2 + $0x51] sm:$0xff]
      %v649 = vld [vmem:[#allocation2 + $0x61] sm:$0xff]
      %v650 = vld [vmem:[#allocation2 + $0x69] sm:$0xff]
      %v651 = vld [vmem:[#allocation2 + $0x79] sm:$0xff]
      %v652 = vld [vmem:[#allocation2 + $0x81] sm:$0xff]
      %v653 = vld [vmem:[#allocation2 + $0x91] sm:$0xff]
      %v654 = vld [vmem:[#allocation2 + $0x99] sm:$0xff]
      %v655 = vld [vmem:[#allocation2 + $0xa9] sm:$0xff]
      %v656 = vld [vmem:[#allocation2 + $0xb1] sm:$0xff]
      %v657 = vld [vmem:[#allocation2 + $0xc1] sm:$0xff]
      %v658 = vld [vmem:[#allocation2 + $0xc9] sm:$0xff]
      %v659 = vld [vmem:[#allocation2 + $0xd9] sm:$0xff]
      %v660 = vld [vmem:[#allocation2 + $0xe1] sm:$0xff]
      %v661 = vld [vmem:[#allocation2 + $0xf1] sm:$0xff]
      %v662 = vld [vmem:[#allocation2 + $0xf9] sm:$0xff]
      %v663 = vld [vmem:[#allocation2 + $0x109] sm:$0xff]
      %v664 = vld [vmem:[#allocation2 + $0x111] sm:$0xff]
      %v665 = vld [vmem:[#allocation2 + $0x121] sm:$0xff]
      %v666 = vld [vmem:[#allocation2 + $0x129] sm:$0xff]
      %v667 = vld [vmem:[#allocation2 + $0x139] sm:$0xff]
      %v668 = vld [vmem:[#allocation2 + $0x141] sm:$0xff]
      %v669 = vld [vmem:[#allocation2 + $0x151] sm:$0xff]
      %v670 = vld [vmem:[#allocation2 + $0x159] sm:$0xff]
      %v671 = vld [vmem:[#allocation2 + $0x169] sm:$0xff]
      %v672 = vld [vmem:[#allocation2 + $0x171] sm:$0xff]
      %v673 = vld [vmem:[#allocation2 + $0x181] sm:$0xff]
      %v674 = vld [vmem:[#allocation2 + $0x189] sm:$0xff]
      %v675 = vld [vmem:[#allocation2 + $0x199] sm:$0xff]
      %v676 = vld [vmem:[#allocation2 + $0x1a1] sm:$0xff]
      %v677 = vld [vmem:[#allocation2 + $0x2] sm:$0xff]
      %v678 = vld [vmem:[#allocation2 + $0xa] sm:$0xff]
      %v679 = vld [vmem:[#allocation2 + $0x1a] sm:$0xff]
      %v680 = vld [vmem:[#allocation2 + $0x22] sm:$0xff]
      %v681 = vld [vmem:[#allocation2 + $0x32] sm:$0xff]
      %v682 = vld [vmem:[#allocation2 + $0x3a] sm:$0xff]
      %v683 = vld [vmem:[#allocation2 + $0x4a] sm:$0xff]
      %v684 = vld [vmem:[#allocation2 + $0x52] sm:$0xff]
      %v685 = vld [vmem:[#allocation2 + $0x62] sm:$0xff]
      %v686 = vld [vmem:[#allocation2 + $0x6a] sm:$0xff]
      %v687 = vld [vmem:[#allocation2 + $0x7a] sm:$0xff]
      %v688 = vld [vmem:[#allocation2 + $0x82] sm:$0xff]
      %v689 = vld [vmem:[#allocation2 + $0x92] sm:$0xff]
      %v690 = vld [vmem:[#allocation2 + $0x9a] sm:$0xff]
      %v691 = vld [vmem:[#allocation2 + $0xaa] sm:$0xff]
      %v692 = vld [vmem:[#allocation2 + $0xb2] sm:$0xff]
      %v693 = vld [vmem:[#allocation2 + $0xc2] sm:$0xff]
      %v694 = vld [vmem:[#allocation2 + $0xca] sm:$0xff]
      %v695 = vld [vmem:[#allocation2 + $0xda] sm:$0xff]
      %v696 = vld [vmem:[#allocation2 + $0xe2] sm:$0xff]
      %v697 = vld [vmem:[#allocation2 + $0xf2] sm:$0xff]
      %v698 = vld [vmem:[#allocation2 + $0xfa] sm:$0xff]
      %v699 = vld [vmem:[#allocation2 + $0x10a] sm:$0xff]
      %v700 = vld [vmem:[#allocation2 + $0x112] sm:$0xff]
      %v701 = vld [vmem:[#allocation2 + $0x122] sm:$0xff]
      %v702 = vld [vmem:[#allocation2 + $0x12a] sm:$0xff]
      %v703 = vld [vmem:[#allocation2 + $0x13a] sm:$0xff]
      %v704 = vld [vmem:[#allocation2 + $0x142] sm:$0xff]
      %v705 = vld [vmem:[#allocation2 + $0x152] sm:$0xff]
      %v706 = vld [vmem:[#allocation2 + $0x15a] sm:$0xff]
      %v707 = vld [vmem:[#allocation2 + $0x16a] sm:$0xff]
      %v708 = vld [vmem:[#allocation2 + $0x172] sm:$0xff]
      %v709 = vld [vmem:[#allocation2 + $0x182] sm:$0xff]
      %v710 = vld [vmem:[#allocation2 + $0x18a] sm:$0xff]
      %v711 = vld [vmem:[#allocation2 + $0x19a] sm:$0xff]
      %v712 = vld [vmem:[#allocation2 + $0x1a2] sm:$0xff]
      %749 = vrot.lane.b32.xlu0 %v641, 4
      %v750 = vpop.permute.xlu0 %749
      %751 = vrot.lane.b32.xlu0 %v642, 4
      %v752 = vpop.permute.xlu0 %751
      %753 = vrot.lane.b32.xlu0 %v643, 4
      %v754 = vpop.permute.xlu0 %753
      %755 = vrot.lane.b32.xlu0 %v644, 4
      %v756 = vpop.permute.xlu0 %755
      %757 = vrot.lane.b32.xlu0 %v645, 4
      %v758 = vpop.permute.xlu0 %757
      %759 = vrot.lane.b32.xlu0 %v646, 4
      %v760 = vpop.permute.xlu0 %759
      %761 = vrot.lane.b32.xlu0 %v647, 4
      %v762 = vpop.permute.xlu0 %761
      %763 = vrot.lane.b32.xlu0 %v648, 4
      %v764 = vpop.permute.xlu0 %763
      %765 = vrot.lane.b32.xlu0 %v649, 4
      %v766 = vpop.permute.xlu0 %765
      %767 = vrot.lane.b32.xlu0 %v650, 4
      %v768 = vpop.permute.xlu0 %767
      %769 = vrot.lane.b32.xlu0 %v651, 4
      %v770 = vpop.permute.xlu0 %769
      %771 = vrot.lane.b32.xlu0 %v652, 4
      %v772 = vpop.permute.xlu0 %771
      %773 = vrot.lane.b32.xlu0 %v653, 4
      %v774 = vpop.permute.xlu0 %773
      %775 = vrot.lane.b32.xlu0 %v654, 4
      %v776 = vpop.permute.xlu0 %775
      %777 = vrot.lane.b32.xlu0 %v655, 4
      %v778 = vpop.permute.xlu0 %777
      %779 = vrot.lane.b32.xlu0 %v656, 4
      %v780 = vpop.permute.xlu0 %779
      %781 = vrot.lane.b32.xlu0 %v657, 4
      %v782 = vpop.permute.xlu0 %781
      %783 = vrot.lane.b32.xlu0 %v658, 4
      %v784 = vpop.permute.xlu0 %783
      %785 = vrot.lane.b32.xlu0 %v659, 4
      %v786 = vpop.permute.xlu0 %785
      %787 = vrot.lane.b32.xlu0 %v660, 4
      %v788 = vpop.permute.xlu0 %787
      %789 = vrot.lane.b32.xlu0 %v661, 4
      %v790 = vpop.permute.xlu0 %789
      %791 = vrot.lane.b32.xlu0 %v662, 4
      %v792 = vpop.permute.xlu0 %791
      %793 = vrot.lane.b32.xlu0 %v663, 4
      %v794 = vpop.permute.xlu0 %793
      %795 = vrot.lane.b32.xlu0 %v664, 4
      %v796 = vpop.permute.xlu0 %795
      %797 = vrot.lane.b32.xlu0 %v665, 4
      %v798 = vpop.permute.xlu0 %797
      %799 = vrot.lane.b32.xlu0 %v666, 4
      %v800 = vpop.permute.xlu0 %799
      %801 = vrot.lane.b32.xlu0 %v667, 4
      %v802 = vpop.permute.xlu0 %801
      %803 = vrot.lane.b32.xlu0 %v668, 4
      %v804 = vpop.permute.xlu0 %803
      %805 = vrot.lane.b32.xlu0 %v669, 4
      %v806 = vpop.permute.xlu0 %805
      %807 = vrot.lane.b32.xlu0 %v670, 4
      %v808 = vpop.permute.xlu0 %807
      %809 = vrot.lane.b32.xlu0 %v671, 4
      %v810 = vpop.permute.xlu0 %809
      %811 = vrot.lane.b32.xlu0 %v672, 4
      %v812 = vpop.permute.xlu0 %811
      %813 = vrot.lane.b32.xlu0 %v673, 4
      %v814 = vpop.permute.xlu0 %813
      %815 = vrot.lane.b32.xlu0 %v674, 4
      %v816 = vpop.permute.xlu0 %815
      %817 = vrot.lane.b32.xlu0 %v675, 4
      %v818 = vpop.permute.xlu0 %817
      %819 = vrot.lane.b32.xlu0 %v676, 4
      %v820 = vpop.permute.xlu0 %819
      %893 = vrot.lane.b32.xlu0 %v677, 8
      %v894 = vpop.permute.xlu0 %893
      %895 = vrot.lane.b32.xlu0 %v678, 8
      %v896 = vpop.permute.xlu0 %895
      %897 = vrot.lane.b32.xlu0 %v679, 8
      %v898 = vpop.permute.xlu0 %897
      %899 = vrot.lane.b32.xlu0 %v680, 8
      %v900 = vpop.permute.xlu0 %899
      %901 = vrot.lane.b32.xlu0 %v681, 8
      %v902 = vpop.permute.xlu0 %901
      %903 = vrot.lane.b32.xlu0 %v682, 8
      %v904 = vpop.permute.xlu0 %903
      %905 = vrot.lane.b32.xlu0 %v683, 8
      %v906 = vpop.permute.xlu0 %905
      %907 = vrot.lane.b32.xlu0 %v684, 8
      %v908 = vpop.permute.xlu0 %907
      %909 = vrot.lane.b32.xlu0 %v685, 8
      %v910 = vpop.permute.xlu0 %909
      %911 = vrot.lane.b32.xlu0 %v686, 8
      %v912 = vpop.permute.xlu0 %911
      %913 = vrot.lane.b32.xlu0 %v687, 8
      %v914 = vpop.permute.xlu0 %913
      %915 = vrot.lane.b32.xlu0 %v688, 8
      %v916 = vpop.permute.xlu0 %915
      %917 = vrot.lane.b32.xlu0 %v689, 8
      %v918 = vpop.permute.xlu0 %917
      %919 = vrot.lane.b32.xlu0 %v690, 8
      %v920 = vpop.permute.xlu0 %919
      %921 = vrot.lane.b32.xlu0 %v691, 8
      %v922 = vpop.permute.xlu0 %921
      %923 = vrot.lane.b32.xlu0 %v692, 8
      %v924 = vpop.permute.xlu0 %923
      %925 = vrot.lane.b32.xlu0 %v693, 8
      %v926 = vpop.permute.xlu0 %925
      %927 = vrot.lane.b32.xlu0 %v694, 8
      %v928 = vpop.permute.xlu0 %927
      %929 = vrot.lane.b32.xlu0 %v695, 8
      %v930 = vpop.permute.xlu0 %929
      %931 = vrot.lane.b32.xlu0 %v696, 8
      %v932 = vpop.permute.xlu0 %931
      %933 = vrot.lane.b32.xlu0 %v697, 8
      %v934 = vpop.permute.xlu0 %933
      %935 = vrot.lane.b32.xlu0 %v698, 8
      %v936 = vpop.permute.xlu0 %935
      %937 = vrot.lane.b32.xlu0 %v699, 8
      %v938 = vpop.permute.xlu0 %937
      %939 = vrot.lane.b32.xlu0 %v700, 8
      %v940 = vpop.permute.xlu0 %939
      %941 = vrot.lane.b32.xlu0 %v701, 8
      %v942 = vpop.permute.xlu0 %941
      %943 = vrot.lane.b32.xlu0 %v702, 8
      %v944 = vpop.permute.xlu0 %943
      %945 = vrot.lane.b32.xlu0 %v703, 8
      %v946 = vpop.permute.xlu0 %945
      %947 = vrot.lane.b32.xlu0 %v704, 8
      %v948 = vpop.permute.xlu0 %947
      %949 = vrot.lane.b32.xlu0 %v705, 8
      %v950 = vpop.permute.xlu0 %949
      %951 = vrot.lane.b32.xlu0 %v706, 8
      %v952 = vpop.permute.xlu0 %951
      %953 = vrot.lane.b32.xlu0 %v707, 8
      %v954 = vpop.permute.xlu0 %953
      %955 = vrot.lane.b32.xlu0 %v708, 8
      %v956 = vpop.permute.xlu0 %955
      %957 = vrot.lane.b32.xlu0 %v709, 8
      %v958 = vpop.permute.xlu0 %957
      %959 = vrot.lane.b32.xlu0 %v710, 8
      %v960 = vpop.permute.xlu0 %959
      %961 = vrot.lane.b32.xlu0 %v711, 8
      %v962 = vpop.permute.xlu0 %961
      %963 = vrot.lane.b32.xlu0 %v712, 8
      %v964 = vpop.permute.xlu0 %963
      %v1001 = vsel %vm531, %v605, %v750
      %v1002 = vsel %vm531, %v606, %v752
      %v1003 = vsel %vm531, %v607, %v754
      %v1004 = vsel %vm531, %v608, %v756
      %v1005 = vsel %vm531, %v609, %v758
      %v1006 = vsel %vm531, %v610, %v760
      %v1007 = vsel %vm531, %v611, %v762
      %v1008 = vsel %vm531, %v612, %v764
      %v1009 = vsel %vm531, %v613, %v766
      %v1010 = vsel %vm531, %v614, %v768
      %v1011 = vsel %vm531, %v615, %v770
      %v1012 = vsel %vm531, %v616, %v772
      %v1013 = vsel %vm531, %v617, %v774
      %v1014 = vsel %vm531, %v618, %v776
      %v1015 = vsel %vm531, %v619, %v778
      %v1016 = vsel %vm531, %v620, %v780
      %v1017 = vsel %vm531, %v621, %v782
      %v1018 = vsel %vm531, %v622, %v784
      %v1019 = vsel %vm531, %v623, %v786
      %v1020 = vsel %vm531, %v624, %v788
      %v1021 = vsel %vm531, %v625, %v790
      %v1022 = vsel %vm531, %v626, %v792
      %v1023 = vsel %vm531, %v627, %v794
      %v1024 = vsel %vm531, %v628, %v796
      %v1025 = vsel %vm531, %v629, %v798
      %v1026 = vsel %vm531, %v630, %v800
      %v1027 = vsel %vm531, %v631, %v802
      %v1028 = vsel %vm531, %v632, %v804
      %v1029 = vsel %vm531, %v633, %v806
      %v1030 = vsel %vm531, %v634, %v808
      %v1031 = vsel %vm531, %v635, %v810
      %v1032 = vsel %vm531, %v636, %v812
      %v1033 = vsel %vm531, %v637, %v814
      %v1034 = vsel %vm531, %v638, %v816
      %v1035 = vsel %vm531, %v639, %v818
      %v1036 = vsel %vm531, %v640, %v820
      %vm1037 = vcmask 64512
      %v1038 = vsel %vm1037, %v1001, %v894
      %v1039 = vsel %vm1037, %v1002, %v896
      %v1040 = vsel %vm1037, %v1003, %v898
      %v1041 = vsel %vm1037, %v1004, %v900
      %v1042 = vsel %vm1037, %v1005, %v902
      %v1043 = vsel %vm1037, %v1006, %v904
      %v1044 = vsel %vm1037, %v1007, %v906
      %v1045 = vsel %vm1037, %v1008, %v908
      %v1046 = vsel %vm1037, %v1009, %v910
      %v1047 = vsel %vm1037, %v1010, %v912
      %v1048 = vsel %vm1037, %v1011, %v914
      %v1049 = vsel %vm1037, %v1012, %v916
      %v1050 = vsel %vm1037, %v1013, %v918
      %v1051 = vsel %vm1037, %v1014, %v920
      %v1052 = vsel %vm1037, %v1015, %v922
      %v1053 = vsel %vm1037, %v1016, %v924
      %v1054 = vsel %vm1037, %v1017, %v926
      %v1055 = vsel %vm1037, %v1018, %v928
      %v1056 = vsel %vm1037, %v1019, %v930
      %v1057 = vsel %vm1037, %v1020, %v932
      %v1058 = vsel %vm1037, %v1021, %v934
      %v1059 = vsel %vm1037, %v1022, %v936
      %v1060 = vsel %vm1037, %v1023, %v938
      %v1061 = vsel %vm1037, %v1024, %v940
      %v1062 = vsel %vm1037, %v1025, %v942
      %v1063 = vsel %vm1037, %v1026, %v944
      %v1064 = vsel %vm1037, %v1027, %v946
      %v1065 = vsel %vm1037, %v1028, %v948
      %v1066 = vsel %vm1037, %v1029, %v950
      %v1067 = vsel %vm1037, %v1030, %v952
      %v1068 = vsel %vm1037, %v1031, %v954
      %v1069 = vsel %vm1037, %v1032, %v956
      %v1070 = vsel %vm1037, %v1033, %v958
      %v1071 = vsel %vm1037, %v1034, %v960
      %v1072 = vsel %vm1037, %v1035, %v962
      %v1073 = vsel %vm1037, %v1036, %v964
      %v1074 = vld [vmem:[%s3] sm:$0xff]
      %v1075 = vld [vmem:[%s3 + $0x8] sm:$0xf]
      %s1076 = scalar_lea.vmem [#allocation2], 24
      %v1077 = vld [vmem:[%s1076] sm:$0xff]
      %v1078 = vld [vmem:[%s1076 + $0x8] sm:$0xff]
      %v1079 = vld [vmem:[%s1076 + $0x18] sm:$0xff]
      %v1080 = vld [vmem:[%s1076 + $0x20] sm:$0xff]
      %v1081 = vld [vmem:[%s1076 + $0x30] sm:$0xff]
      %v1082 = vld [vmem:[%s1076 + $0x38] sm:$0xff]
      %v1083 = vld [vmem:[%s1076 + $0x48] sm:$0xff]
      %v1084 = vld [vmem:[%s1076 + $0x50] sm:$0xff]
      %v1085 = vld [vmem:[%s1076 + $0x60] sm:$0xff]
      %v1086 = vld [vmem:[%s1076 + $0x68] sm:$0xff]
      %v1087 = vld [vmem:[%s1076 + $0x78] sm:$0xff]
      %v1088 = vld [vmem:[%s1076 + $0x80] sm:$0xff]
      %v1089 = vld [vmem:[%s1076 + $0x90] sm:$0xff]
      %v1090 = vld [vmem:[%s1076 + $0x98] sm:$0xff]
      %v1091 = vld [vmem:[%s1076 + $0xa8] sm:$0xff]
      %v1092 = vld [vmem:[%s1076 + $0xb0] sm:$0xff]
      %v1093 = vld [vmem:[%s1076 + $0xc0] sm:$0xff]
      %v1094 = vld [vmem:[%s1076 + $0xc8] sm:$0xff]
      %v1095 = vld [vmem:[%s1076 + $0xd8] sm:$0xff]
      %v1096 = vld [vmem:[%s1076 + $0xe0] sm:$0xff]
      %v1097 = vld [vmem:[%s1076 + $0xf0] sm:$0xff]
      %v1098 = vld [vmem:[%s1076 + $0xf8] sm:$0xff]
      %v1099 = vld [vmem:[%s1076 + $0x108] sm:$0xff]
      %v1100 = vld [vmem:[%s1076 + $0x110] sm:$0xff]
      %v1101 = vld [vmem:[%s1076 + $0x120] sm:$0xff]
      %v1102 = vld [vmem:[%s1076 + $0x128] sm:$0xff]
      %v1103 = vld [vmem:[%s1076 + $0x138] sm:$0xff]
      %v1104 = vld [vmem:[%s1076 + $0x140] sm:$0xff]
      %v1105 = vld [vmem:[%s1076 + $0x150] sm:$0xff]
      %v1106 = vld [vmem:[%s1076 + $0x158] sm:$0xff]
      %v1107 = vld [vmem:[%s1076 + $0x168] sm:$0xff]
      %v1108 = vld [vmem:[%s1076 + $0x170] sm:$0xff]
      %v1109 = vld [vmem:[%s1076 + $0x180] sm:$0xff]
      %v1110 = vld [vmem:[%s1076 + $0x188] sm:$0xff]
      %v1111 = vld [vmem:[%s1076 + $0x198] sm:$0xff]
      %v1112 = vld [vmem:[%s1076 + $0x1a0] sm:$0xff]
      %v1113 = vld [vmem:[%s1076 + $0x1] sm:$0xff]
      %v1114 = vld [vmem:[%s1076 + $0x9] sm:$0xff]
      %v1115 = vld [vmem:[%s1076 + $0x19] sm:$0xff]
      %v1116 = vld [vmem:[%s1076 + $0x21] sm:$0xff]
      %v1117 = vld [vmem:[%s1076 + $0x31] sm:$0xff]
      %v1118 = vld [vmem:[%s1076 + $0x39] sm:$0xff]
      %v1119 = vld [vmem:[%s1076 + $0x49] sm:$0xff]
      %v1120 = vld [vmem:[%s1076 + $0x51] sm:$0xff]
      %v1121 = vld [vmem:[%s1076 + $0x61] sm:$0xff]
      %v1122 = vld [vmem:[%s1076 + $0x69] sm:$0xff]
      %v1123 = vld [vmem:[%s1076 + $0x79] sm:$0xff]
      %v1124 = vld [vmem:[%s1076 + $0x81] sm:$0xff]
      %v1125 = vld [vmem:[%s1076 + $0x91] sm:$0xff]
      %v1126 = vld [vmem:[%s1076 + $0x99] sm:$0xff]
      %v1127 = vld [vmem:[%s1076 + $0xa9] sm:$0xff]
      %v1128 = vld [vmem:[%s1076 + $0xb1] sm:$0xff]
      %v1129 = vld [vmem:[%s1076 + $0xc1] sm:$0xff]
      %v1130 = vld [vmem:[%s1076 + $0xc9] sm:$0xff]
      %v1131 = vld [vmem:[%s1076 + $0xd9] sm:$0xff]
      %v1132 = vld [vmem:[%s1076 + $0xe1] sm:$0xff]
      %v1133 = vld [vmem:[%s1076 + $0xf1] sm:$0xff]
      %v1134 = vld [vmem:[%s1076 + $0xf9] sm:$0xff]
      %v1135 = vld [vmem:[%s1076 + $0x109] sm:$0xff]
      %v1136 = vld [vmem:[%s1076 + $0x111] sm:$0xff]
      %v1137 = vld [vmem:[%s1076 + $0x121] sm:$0xff]
      %v1138 = vld [vmem:[%s1076 + $0x129] sm:$0xff]
      %v1139 = vld [vmem:[%s1076 + $0x139] sm:$0xff]
      %v1140 = vld [vmem:[%s1076 + $0x141] sm:$0xff]
      %v1141 = vld [vmem:[%s1076 + $0x151] sm:$0xff]
      %v1142 = vld [vmem:[%s1076 + $0x159] sm:$0xff]
      %v1143 = vld [vmem:[%s1076 + $0x169] sm:$0xff]
      %v1144 = vld [vmem:[%s1076 + $0x171] sm:$0xff]
      %v1145 = vld [vmem:[%s1076 + $0x181] sm:$0xff]
      %v1146 = vld [vmem:[%s1076 + $0x189] sm:$0xff]
      %v1147 = vld [vmem:[%s1076 + $0x199] sm:$0xff]
      %v1148 = vld [vmem:[%s1076 + $0x1a1] sm:$0xff]
      %v1149 = vld [vmem:[%s1076 + $0x2] sm:$0xff]
      %v1150 = vld [vmem:[%s1076 + $0xa] sm:$0xff]
      %v1151 = vld [vmem:[%s1076 + $0x1a] sm:$0xff]
      %v1152 = vld [vmem:[%s1076 + $0x22] sm:$0xff]
      %v1153 = vld [vmem:[%s1076 + $0x32] sm:$0xff]
      %v1154 = vld [vmem:[%s1076 + $0x3a] sm:$0xff]
      %v1155 = vld [vmem:[%s1076 + $0x4a] sm:$0xff]
      %v1156 = vld [vmem:[%s1076 + $0x52] sm:$0xff]
      %v1157 = vld [vmem:[%s1076 + $0x62] sm:$0xff]
      %v1158 = vld [vmem:[%s1076 + $0x6a] sm:$0xff]
      %v1159 = vld [vmem:[%s1076 + $0x7a] sm:$0xff]
      %v1160 = vld [vmem:[%s1076 + $0x82] sm:$0xff]
      %v1161 = vld [vmem:[%s1076 + $0x92] sm:$0xff]
      %v1162 = vld [vmem:[%s1076 + $0x9a] sm:$0xff]
      %v1163 = vld [vmem:[%s1076 + $0xaa] sm:$0xff]
      %v1164 = vld [vmem:[%s1076 + $0xb2] sm:$0xff]
      %v1165 = vld [vmem:[%s1076 + $0xc2] sm:$0xff]
      %v1166 = vld [vmem:[%s1076 + $0xca] sm:$0xff]
      %v1167 = vld [vmem:[%s1076 + $0xda] sm:$0xff]
      %v1168 = vld [vmem:[%s1076 + $0xe2] sm:$0xff]
      %v1169 = vld [vmem:[%s1076 + $0xf2] sm:$0xff]
      %v1170 = vld [vmem:[%s1076 + $0xfa] sm:$0xff]
      %v1171 = vld [vmem:[%s1076 + $0x10a] sm:$0xff]
      %v1172 = vld [vmem:[%s1076 + $0x112] sm:$0xff]
      %v1173 = vld [vmem:[%s1076 + $0x122] sm:$0xff]
      %v1174 = vld [vmem:[%s1076 + $0x12a] sm:$0xff]
      %v1175 = vld [vmem:[%s1076 + $0x13a] sm:$0xff]
      %v1176 = vld [vmem:[%s1076 + $0x142] sm:$0xff]
      %v1177 = vld [vmem:[%s1076 + $0x152] sm:$0xff]
      %v1178 = vld [vmem:[%s1076 + $0x15a] sm:$0xff]
      %v1179 = vld [vmem:[%s1076 + $0x16a] sm:$0xff]
      %v1180 = vld [vmem:[%s1076 + $0x172] sm:$0xff]
      %v1181 = vld [vmem:[%s1076 + $0x182] sm:$0xff]
      %v1182 = vld [vmem:[%s1076 + $0x18a] sm:$0xff]
      %v1183 = vld [vmem:[%s1076 + $0x19a] sm:$0xff]
      %v1184 = vld [vmem:[%s1076 + $0x1a2] sm:$0xff]
      %1221 = vrot.lane.b32.xlu0 %v1113, 4
      %v1222 = vpop.permute.xlu0 %1221
      %1223 = vrot.lane.b32.xlu0 %v1114, 4
      %v1224 = vpop.permute.xlu0 %1223
      %1225 = vrot.lane.b32.xlu0 %v1115, 4
      %v1226 = vpop.permute.xlu0 %1225
      %1227 = vrot.lane.b32.xlu0 %v1116, 4
      %v1228 = vpop.permute.xlu0 %1227
      %1229 = vrot.lane.b32.xlu0 %v1117, 4
      %v1230 = vpop.permute.xlu0 %1229
      %1231 = vrot.lane.b32.xlu0 %v1118, 4
      %v1232 = vpop.permute.xlu0 %1231
      %1233 = vrot.lane.b32.xlu0 %v1119, 4
      %v1234 = vpop.permute.xlu0 %1233
      %1235 = vrot.lane.b32.xlu0 %v1120, 4
      %v1236 = vpop.permute.xlu0 %1235
      %1237 = vrot.lane.b32.xlu0 %v1121, 4
      %v1238 = vpop.permute.xlu0 %1237
      %1239 = vrot.lane.b32.xlu0 %v1122, 4
      %v1240 = vpop.permute.xlu0 %1239
      %1241 = vrot.lane.b32.xlu0 %v1123, 4
      %v1242 = vpop.permute.xlu0 %1241
      %1243 = vrot.lane.b32.xlu0 %v1124, 4
      %v1244 = vpop.permute.xlu0 %1243
      %1245 = vrot.lane.b32.xlu0 %v1125, 4
      %v1246 = vpop.permute.xlu0 %1245
      %1247 = vrot.lane.b32.xlu0 %v1126, 4
      %v1248 = vpop.permute.xlu0 %1247
      %1249 = vrot.lane.b32.xlu0 %v1127, 4
      %v1250 = vpop.permute.xlu0 %1249
      %1251 = vrot.lane.b32.xlu0 %v1128, 4
      %v1252 = vpop.permute.xlu0 %1251
      %1253 = vrot.lane.b32.xlu0 %v1129, 4
      %v1254 = vpop.permute.xlu0 %1253
      %1255 = vrot.lane.b32.xlu0 %v1130, 4
      %v1256 = vpop.permute.xlu0 %1255
      %1257 = vrot.lane.b32.xlu0 %v1131, 4
      %v1258 = vpop.permute.xlu0 %1257
      %1259 = vrot.lane.b32.xlu0 %v1132, 4
      %v1260 = vpop.permute.xlu0 %1259
      %1261 = vrot.lane.b32.xlu0 %v1133, 4
      %v1262 = vpop.permute.xlu0 %1261
      %1263 = vrot.lane.b32.xlu0 %v1134, 4
      %v1264 = vpop.permute.xlu0 %1263
      %1265 = vrot.lane.b32.xlu0 %v1135, 4
      %v1266 = vpop.permute.xlu0 %1265
      %1267 = vrot.lane.b32.xlu0 %v1136, 4
      %v1268 = vpop.permute.xlu0 %1267
      %1269 = vrot.lane.b32.xlu0 %v1137, 4
      %v1270 = vpop.permute.xlu0 %1269
      %1271 = vrot.lane.b32.xlu0 %v1138, 4
      %v1272 = vpop.permute.xlu0 %1271
      %1273 = vrot.lane.b32.xlu0 %v1139, 4
      %v1274 = vpop.permute.xlu0 %1273
      %1275 = vrot.lane.b32.xlu0 %v1140, 4
      %v1276 = vpop.permute.xlu0 %1275
      %1277 = vrot.lane.b32.xlu0 %v1141, 4
      %v1278 = vpop.permute.xlu0 %1277
      %1279 = vrot.lane.b32.xlu0 %v1142, 4
      %v1280 = vpop.permute.xlu0 %1279
      %1281 = vrot.lane.b32.xlu0 %v1143, 4
      %v1282 = vpop.permute.xlu0 %1281
      %1283 = vrot.lane.b32.xlu0 %v1144, 4
      %v1284 = vpop.permute.xlu0 %1283
      %1285 = vrot.lane.b32.xlu0 %v1145, 4
      %v1286 = vpop.permute.xlu0 %1285
      %1287 = vrot.lane.b32.xlu0 %v1146, 4
      %v1288 = vpop.permute.xlu0 %1287
      %1289 = vrot.lane.b32.xlu0 %v1147, 4
      %v1290 = vpop.permute.xlu0 %1289
      %1291 = vrot.lane.b32.xlu0 %v1148, 4
      %v1292 = vpop.permute.xlu0 %1291
      %1365 = vrot.lane.b32.xlu0 %v1149, 8
      %v1366 = vpop.permute.xlu0 %1365
      %1367 = vrot.lane.b32.xlu0 %v1150, 8
      %v1368 = vpop.permute.xlu0 %1367
      %1369 = vrot.lane.b32.xlu0 %v1151, 8
      %v1370 = vpop.permute.xlu0 %1369
      %1371 = vrot.lane.b32.xlu0 %v1152, 8
      %v1372 = vpop.permute.xlu0 %1371
      %1373 = vrot.lane.b32.xlu0 %v1153, 8
      %v1374 = vpop.permute.xlu0 %1373
      %1375 = vrot.lane.b32.xlu0 %v1154, 8
      %v1376 = vpop.permute.xlu0 %1375
      %1377 = vrot.lane.b32.xlu0 %v1155, 8
      %v1378 = vpop.permute.xlu0 %1377
      %1379 = vrot.lane.b32.xlu0 %v1156, 8
      %v1380 = vpop.permute.xlu0 %1379
      %1381 = vrot.lane.b32.xlu0 %v1157, 8
      %v1382 = vpop.permute.xlu0 %1381
      %1383 = vrot.lane.b32.xlu0 %v1158, 8
      %v1384 = vpop.permute.xlu0 %1383
      %1385 = vrot.lane.b32.xlu0 %v1159, 8
      %v1386 = vpop.permute.xlu0 %1385
      %1387 = vrot.lane.b32.xlu0 %v1160, 8
      %v1388 = vpop.permute.xlu0 %1387
      %1389 = vrot.lane.b32.xlu0 %v1161, 8
      %v1390 = vpop.permute.xlu0 %1389
      %1391 = vrot.lane.b32.xlu0 %v1162, 8
      %v1392 = vpop.permute.xlu0 %1391
      %1393 = vrot.lane.b32.xlu0 %v1163, 8
      %v1394 = vpop.permute.xlu0 %1393
      %1395 = vrot.lane.b32.xlu0 %v1164, 8
      %v1396 = vpop.permute.xlu0 %1395
      %1397 = vrot.lane.b32.xlu0 %v1165, 8
      %v1398 = vpop.permute.xlu0 %1397
      %1399 = vrot.lane.b32.xlu0 %v1166, 8
      %v1400 = vpop.permute.xlu0 %1399
      %1401 = vrot.lane.b32.xlu0 %v1167, 8
      %v1402 = vpop.permute.xlu0 %1401
      %1403 = vrot.lane.b32.xlu0 %v1168, 8
      %v1404 = vpop.permute.xlu0 %1403
      %1405 = vrot.lane.b32.xlu0 %v1169, 8
      %v1406 = vpop.permute.xlu0 %1405
      %1407 = vrot.lane.b32.xlu0 %v1170, 8
      %v1408 = vpop.permute.xlu0 %1407
      %1409 = vrot.lane.b32.xlu0 %v1171, 8
      %v1410 = vpop.permute.xlu0 %1409
      %1411 = vrot.lane.b32.xlu0 %v1172, 8
      %v1412 = vpop.permute.xlu0 %1411
      %1413 = vrot.lane.b32.xlu0 %v1173, 8
      %v1414 = vpop.permute.xlu0 %1413
      %1415 = vrot.lane.b32.xlu0 %v1174, 8
      %v1416 = vpop.permute.xlu0 %1415
      %1417 = vrot.lane.b32.xlu0 %v1175, 8
      %v1418 = vpop.permute.xlu0 %1417
      %1419 = vrot.lane.b32.xlu0 %v1176, 8
      %v1420 = vpop.permute.xlu0 %1419
      %1421 = vrot.lane.b32.xlu0 %v1177, 8
      %v1422 = vpop.permute.xlu0 %1421
      %1423 = vrot.lane.b32.xlu0 %v1178, 8
      %v1424 = vpop.permute.xlu0 %1423
      %1425 = vrot.lane.b32.xlu0 %v1179, 8
      %v1426 = vpop.permute.xlu0 %1425
      %1427 = vrot.lane.b32.xlu0 %v1180, 8
      %v1428 = vpop.permute.xlu0 %1427
      %1429 = vrot.lane.b32.xlu0 %v1181, 8
      %v1430 = vpop.permute.xlu0 %1429
      %1431 = vrot.lane.b32.xlu0 %v1182, 8
      %v1432 = vpop.permute.xlu0 %1431
      %1433 = vrot.lane.b32.xlu0 %v1183, 8
      %v1434 = vpop.permute.xlu0 %1433
      %1435 = vrot.lane.b32.xlu0 %v1184, 8
      %v1436 = vpop.permute.xlu0 %1435
      %v1473 = vsel %vm531, %v1077, %v1222
      %v1474 = vsel %vm531, %v1078, %v1224
      %v1475 = vsel %vm531, %v1079, %v1226
      %v1476 = vsel %vm531, %v1080, %v1228
      %v1477 = vsel %vm531, %v1081, %v1230
      %v1478 = vsel %vm531, %v1082, %v1232
      %v1479 = vsel %vm531, %v1083, %v1234
      %v1480 = vsel %vm531, %v1084, %v1236
      %v1481 = vsel %vm531, %v1085, %v1238
      %v1482 = vsel %vm531, %v1086, %v1240
      %v1483 = vsel %vm531, %v1087, %v1242
      %v1484 = vsel %vm531, %v1088, %v1244
      %v1485 = vsel %vm531, %v1089, %v1246
      %v1486 = vsel %vm531, %v1090, %v1248
      %v1487 = vsel %vm531, %v1091, %v1250
      %v1488 = vsel %vm531, %v1092, %v1252
      %v1489 = vsel %vm531, %v1093, %v1254
      %v1490 = vsel %vm531, %v1094, %v1256
      %v1491 = vsel %vm531, %v1095, %v1258
      %v1492 = vsel %vm531, %v1096, %v1260
      %v1493 = vsel %vm531, %v1097, %v1262
      %v1494 = vsel %vm531, %v1098, %v1264
      %v1495 = vsel %vm531, %v1099, %v1266
      %v1496 = vsel %vm531, %v1100, %v1268
      %v1497 = vsel %vm531, %v1101, %v1270
      %v1498 = vsel %vm531, %v1102, %v1272
      %v1499 = vsel %vm531, %v1103, %v1274
      %v1500 = vsel %vm531, %v1104, %v1276
      %v1501 = vsel %vm531, %v1105, %v1278
      %v1502 = vsel %vm531, %v1106, %v1280
      %v1503 = vsel %vm531, %v1107, %v1282
      %v1504 = vsel %vm531, %v1108, %v1284
      %v1505 = vsel %vm531, %v1109, %v1286
      %v1506 = vsel %vm531, %v1110, %v1288
      %v1507 = vsel %vm531, %v1111, %v1290
      %v1508 = vsel %vm531, %v1112, %v1292
      %v1509 = vsel %vm1037, %v1473, %v1366
      %v1510 = vsel %vm1037, %v1474, %v1368
      %v1511 = vsel %vm1037, %v1475, %v1370
      %v1512 = vsel %vm1037, %v1476, %v1372
      %v1513 = vsel %vm1037, %v1477, %v1374
      %v1514 = vsel %vm1037, %v1478, %v1376
      %v1515 = vsel %vm1037, %v1479, %v1378
      %v1516 = vsel %vm1037, %v1480, %v1380
      %v1517 = vsel %vm1037, %v1481, %v1382
      %v1518 = vsel %vm1037, %v1482, %v1384
      %v1519 = vsel %vm1037, %v1483, %v1386
      %v1520 = vsel %vm1037, %v1484, %v1388
      %v1521 = vsel %vm1037, %v1485, %v1390
      %v1522 = vsel %vm1037, %v1486, %v1392
      %v1523 = vsel %vm1037, %v1487, %v1394
      %v1524 = vsel %vm1037, %v1488, %v1396
      %v1525 = vsel %vm1037, %v1489, %v1398
      %v1526 = vsel %vm1037, %v1490, %v1400
      %v1527 = vsel %vm1037, %v1491, %v1402
      %v1528 = vsel %vm1037, %v1492, %v1404
      %v1529 = vsel %vm1037, %v1493, %v1406
      %v1530 = vsel %vm1037, %v1494, %v1408
      %v1531 = vsel %vm1037, %v1495, %v1410
      %v1532 = vsel %vm1037, %v1496, %v1412
      %v1533 = vsel %vm1037, %v1497, %v1414
      %v1534 = vsel %vm1037, %v1498, %v1416
      %v1535 = vsel %vm1037, %v1499, %v1418
      %v1536 = vsel %vm1037, %v1500, %v1420
      %v1537 = vsel %vm1037, %v1501, %v1422
      %v1538 = vsel %vm1037, %v1502, %v1424
      %v1539 = vsel %vm1037, %v1503, %v1426
      %v1540 = vsel %vm1037, %v1504, %v1428
      %v1541 = vsel %vm1037, %v1505, %v1430
      %v1542 = vsel %vm1037, %v1506, %v1432
      %v1543 = vsel %vm1037, %v1507, %v1434
      %v1544 = vsel %vm1037, %v1508, %v1436
      %s1545 = scalar_lea.vmem %s3, 16
      %v1546 = vld [vmem:[%s1545] sm:$0xff]
      %v1547 = vld [vmem:[%s1545 + $0x8] sm:$0xf]
      %vm1548 = vcmask 97280
      %v1550 = vsel %vm1548, %v1509, 0
      %v1553 = vsel %vm1548, %v1510, 0
      %v1556 = vsel %vm1548, %v1511, 0
      %v1559 = vsel %vm1548, %v1512, 0
      %v1562 = vsel %vm1548, %v1513, 0
      %v1565 = vsel %vm1548, %v1514, 0
      %v1568 = vsel %vm1548, %v1515, 0
      %v1571 = vsel %vm1548, %v1516, 0
      %v1574 = vsel %vm1548, %v1517, 0
      %v1577 = vsel %vm1548, %v1518, 0
      %v1580 = vsel %vm1548, %v1519, 0
      %v1583 = vsel %vm1548, %v1520, 0
      %v1586 = vsel %vm1548, %v1521, 0
      %v1589 = vsel %vm1548, %v1522, 0
      %v1592 = vsel %vm1548, %v1523, 0
      %v1595 = vsel %vm1548, %v1524, 0
      %v1598 = vsel %vm1548, %v1525, 0
      %v1601 = vsel %vm1548, %v1526, 0
      %v1604 = vsel %vm1548, %v1527, 0
      %v1607 = vsel %vm1548, %v1528, 0
      %v1610 = vsel %vm1548, %v1529, 0
      %v1613 = vsel %vm1548, %v1530, 0
      %v1616 = vsel %vm1548, %v1531, 0
      %v1619 = vsel %vm1548, %v1532, 0
      %v1622 = vsel %vm1548, %v1533, 0
      %v1625 = vsel %vm1548, %v1534, 0
      %v1628 = vsel %vm1548, %v1535, 0
      %v1631 = vsel %vm1548, %v1536, 0
      %v1634 = vsel %vm1548, %v1537, 0
      %v1637 = vsel %vm1548, %v1538, 0
      %v1640 = vsel %vm1548, %v1539, 0
      %v1643 = vsel %vm1548, %v1540, 0
      %v1646 = vsel %vm1548, %v1541, 0
      %v1649 = vsel %vm1548, %v1542, 0
      %v1652 = vsel %vm1548, %v1543, 0
      %v1655 = vsel %vm1548, %v1544, 0
      %vm1657 = vcmask 1043456
      %v1659 = vsel %vm1657, %v1547, 0
      %1661 = vmatpush.msra.mxu0 0.0
      %1662 = vmatpush.msra.mxu0 0.0
      %1663 = vmatpush.msra.mxu0 0.0
      %1664 = vmatpush.msra.mxu0 0.0
      %1665 = vmatpush.msra.mxu0 0.0
      %1666 = vmatpush.msra.mxu0 0.0
      %1667 = vmatpush.msra.mxu0 0.0
      %1668 = vmatpush.msra.mxu0 0.0
      %1669 = vmatpush.msra.mxu0 0.0
      %1670 = vmatpush.msra.mxu0 0.0
      %1671 = vmatpush.msra.mxu0 0.0
      %1672 = vmatpush.msra.mxu0 0.0
      %1673 = vmatpush.msra.mxu0 0.0
      %1674 = vmatpush.msra.mxu0 0.0
      %1675 = vmatpush.msra.mxu0 %v1659
      %1676 = vmatpush.msra.mxu0 %v1546
      %1677 = vmatmul.f32.gmra.mxu0 %v1550
      %v1678 = vpop.f32.mrf.mxu0
      %v1679 = vadd.f32 0.0, %v1678
      %1680 = vmatmul.f32.gmra.mxu0 %v1553
      %v1681 = vpop.f32.mrf.mxu0
      %v1682 = vadd.f32 0.0, %v1681
      %1683 = vmatmul.f32.gmra.mxu0 %v1556
      %v1684 = vpop.f32.mrf.mxu0
      %v1685 = vadd.f32 0.0, %v1684
      %1686 = vmatmul.f32.gmra.mxu0 %v1559
      %v1687 = vpop.f32.mrf.mxu0
      %v1688 = vadd.f32 0.0, %v1687
      %1689 = vmatmul.f32.gmra.mxu0 %v1562
      %v1690 = vpop.f32.mrf.mxu0
      %v1691 = vadd.f32 0.0, %v1690
      %1692 = vmatmul.f32.gmra.mxu0 %v1565
      %v1693 = vpop.f32.mrf.mxu0
      %v1694 = vadd.f32 0.0, %v1693
      %1695 = vmatmul.f32.gmra.mxu0 %v1568
      %v1696 = vpop.f32.mrf.mxu0
      %v1697 = vadd.f32 0.0, %v1696
      %1698 = vmatmul.f32.gmra.mxu0 %v1571
      %v1699 = vpop.f32.mrf.mxu0
      %v1700 = vadd.f32 0.0, %v1699
      %1701 = vmatmul.f32.gmra.mxu0 %v1574
      %v1702 = vpop.f32.mrf.mxu0
      %v1703 = vadd.f32 0.0, %v1702
      %1704 = vmatmul.f32.gmra.mxu0 %v1577
      %v1705 = vpop.f32.mrf.mxu0
      %v1706 = vadd.f32 0.0, %v1705
      %1707 = vmatmul.f32.gmra.mxu0 %v1580
      %v1708 = vpop.f32.mrf.mxu0
      %v1709 = vadd.f32 0.0, %v1708
      %1710 = vmatmul.f32.gmra.mxu0 %v1583
      %v1711 = vpop.f32.mrf.mxu0
      %v1712 = vadd.f32 0.0, %v1711
      %1713 = vmatmul.f32.gmra.mxu0 %v1586
      %v1714 = vpop.f32.mrf.mxu0
      %v1715 = vadd.f32 0.0, %v1714
      %1716 = vmatmul.f32.gmra.mxu0 %v1589
      %v1717 = vpop.f32.mrf.mxu0
      %v1718 = vadd.f32 0.0, %v1717
      %1719 = vmatmul.f32.gmra.mxu0 %v1592
      %v1720 = vpop.f32.mrf.mxu0
      %v1721 = vadd.f32 0.0, %v1720
      %1722 = vmatmul.f32.gmra.mxu0 %v1595
      %v1723 = vpop.f32.mrf.mxu0
      %v1724 = vadd.f32 0.0, %v1723
      %1725 = vmatmul.f32.gmra.mxu0 %v1598
      %v1726 = vpop.f32.mrf.mxu0
      %v1727 = vadd.f32 0.0, %v1726
      %1728 = vmatmul.f32.gmra.mxu0 %v1601
      %v1729 = vpop.f32.mrf.mxu0
      %v1730 = vadd.f32 0.0, %v1729
      %1731 = vmatmul.f32.gmra.mxu0 %v1604
      %v1732 = vpop.f32.mrf.mxu0
      %v1733 = vadd.f32 0.0, %v1732
      %1734 = vmatmul.f32.gmra.mxu0 %v1607
      %v1735 = vpop.f32.mrf.mxu0
      %v1736 = vadd.f32 0.0, %v1735
      %1737 = vmatmul.f32.gmra.mxu0 %v1610
      %v1738 = vpop.f32.mrf.mxu0
      %v1739 = vadd.f32 0.0, %v1738
      %1740 = vmatmul.f32.gmra.mxu0 %v1613
      %v1741 = vpop.f32.mrf.mxu0
      %v1742 = vadd.f32 0.0, %v1741
      %1743 = vmatmul.f32.gmra.mxu0 %v1616
      %v1744 = vpop.f32.mrf.mxu0
      %v1745 = vadd.f32 0.0, %v1744
      %1746 = vmatmul.f32.gmra.mxu0 %v1619
      %v1747 = vpop.f32.mrf.mxu0
      %v1748 = vadd.f32 0.0, %v1747
      %1749 = vmatmul.f32.gmra.mxu0 %v1622
      %v1750 = vpop.f32.mrf.mxu0
      %v1751 = vadd.f32 0.0, %v1750
      %1752 = vmatmul.f32.gmra.mxu0 %v1625
      %v1753 = vpop.f32.mrf.mxu0
      %v1754 = vadd.f32 0.0, %v1753
      %1755 = vmatmul.f32.gmra.mxu0 %v1628
      %v1756 = vpop.f32.mrf.mxu0
      %v1757 = vadd.f32 0.0, %v1756
      %1758 = vmatmul.f32.gmra.mxu0 %v1631
      %v1759 = vpop.f32.mrf.mxu0
      %v1760 = vadd.f32 0.0, %v1759
      %1761 = vmatmul.f32.gmra.mxu0 %v1634
      %v1762 = vpop.f32.mrf.mxu0
      %v1763 = vadd.f32 0.0, %v1762
      %1764 = vmatmul.f32.gmra.mxu0 %v1637
      %v1765 = vpop.f32.mrf.mxu0
      %v1766 = vadd.f32 0.0, %v1765
      %1767 = vmatmul.f32.gmra.mxu0 %v1640
      %v1768 = vpop.f32.mrf.mxu0
      %v1769 = vadd.f32 0.0, %v1768
      %1770 = vmatmul.f32.gmra.mxu0 %v1643
      %v1771 = vpop.f32.mrf.mxu0
      %v1772 = vadd.f32 0.0, %v1771
      %1773 = vmatmul.f32.gmra.mxu0 %v1646
      %v1774 = vpop.f32.mrf.mxu0
      %v1775 = vadd.f32 0.0, %v1774
      %1776 = vmatmul.f32.gmra.mxu0 %v1649
      %v1777 = vpop.f32.mrf.mxu0
      %v1778 = vadd.f32 0.0, %v1777
      %1779 = vmatmul.f32.gmra.mxu0 %v1652
      %v1780 = vpop.f32.mrf.mxu0
      %v1781 = vadd.f32 0.0, %v1780
      %1782 = vmatmul.f32.gmra.mxu0 %v1655
      %v1783 = vpop.f32.mrf.mxu0
      %v1784 = vadd.f32 0.0, %v1783
      %1785 = vdwg.mxu0
      %v1787 = vsel %vm1548, %v1038, 0
      %v1790 = vsel %vm1548, %v1039, 0
      %v1793 = vsel %vm1548, %v1040, 0
      %v1796 = vsel %vm1548, %v1041, 0
      %v1799 = vsel %vm1548, %v1042, 0
      %v1802 = vsel %vm1548, %v1043, 0
      %v1805 = vsel %vm1548, %v1044, 0
      %v1808 = vsel %vm1548, %v1045, 0
      %v1811 = vsel %vm1548, %v1046, 0
      %v1814 = vsel %vm1548, %v1047, 0
      %v1817 = vsel %vm1548, %v1048, 0
      %v1820 = vsel %vm1548, %v1049, 0
      %v1823 = vsel %vm1548, %v1050, 0
      %v1826 = vsel %vm1548, %v1051, 0
      %v1829 = vsel %vm1548, %v1052, 0
      %v1832 = vsel %vm1548, %v1053, 0
      %v1835 = vsel %vm1548, %v1054, 0
      %v1838 = vsel %vm1548, %v1055, 0
      %v1841 = vsel %vm1548, %v1056, 0
      %v1844 = vsel %vm1548, %v1057, 0
      %v1847 = vsel %vm1548, %v1058, 0
      %v1850 = vsel %vm1548, %v1059, 0
      %v1853 = vsel %vm1548, %v1060, 0
      %v1856 = vsel %vm1548, %v1061, 0
      %v1859 = vsel %vm1548, %v1062, 0
      %v1862 = vsel %vm1548, %v1063, 0
      %v1865 = vsel %vm1548, %v1064, 0
      %v1868 = vsel %vm1548, %v1065, 0
      %v1871 = vsel %vm1548, %v1066, 0
      %v1874 = vsel %vm1548, %v1067, 0
      %v1877 = vsel %vm1548, %v1068, 0
      %v1880 = vsel %vm1548, %v1069, 0
      %v1883 = vsel %vm1548, %v1070, 0
      %v1886 = vsel %vm1548, %v1071, 0
      %v1889 = vsel %vm1548, %v1072, 0
      %v1892 = vsel %vm1548, %v1073, 0
      %v1895 = vsel %vm1657, %v1075, 0
      %1897 = vmatpush.msra.mxu0 0.0
      %1898 = vmatpush.msra.mxu0 0.0
      %1899 = vmatpush.msra.mxu0 0.0
      %1900 = vmatpush.msra.mxu0 0.0
      %1901 = vmatpush.msra.mxu0 0.0
      %1902 = vmatpush.msra.mxu0 0.0
      %1903 = vmatpush.msra.mxu0 0.0
      %1904 = vmatpush.msra.mxu0 0.0
      %1905 = vmatpush.msra.mxu0 0.0
      %1906 = vmatpush.msra.mxu0 0.0
      %1907 = vmatpush.msra.mxu0 0.0
      %1908 = vmatpush.msra.mxu0 0.0
      %1909 = vmatpush.msra.mxu0 0.0
      %1910 = vmatpush.msra.mxu0 0.0
      %1911 = vmatpush.msra.mxu0 %v1895
      %1912 = vmatpush.msra.mxu0 %v1074
      %1913 = vmatmul.f32.gmra.mxu0 %v1787
      %v1914 = vpop.f32.mrf.mxu0
      %v1915 = vadd.f32 %v1679, %v1914
      %1916 = vmatmul.f32.gmra.mxu0 %v1790
      %v1917 = vpop.f32.mrf.mxu0
      %v1918 = vadd.f32 %v1682, %v1917
      %1919 = vmatmul.f32.gmra.mxu0 %v1793
      %v1920 = vpop.f32.mrf.mxu0
      %v1921 = vadd.f32 %v1685, %v1920
      %1922 = vmatmul.f32.gmra.mxu0 %v1796
      %v1923 = vpop.f32.mrf.mxu0
      %v1924 = vadd.f32 %v1688, %v1923
      %1925 = vmatmul.f32.gmra.mxu0 %v1799
      %v1926 = vpop.f32.mrf.mxu0
      %v1927 = vadd.f32 %v1691, %v1926
      %1928 = vmatmul.f32.gmra.mxu0 %v1802
      %v1929 = vpop.f32.mrf.mxu0
      %v1930 = vadd.f32 %v1694, %v1929
      %1931 = vmatmul.f32.gmra.mxu0 %v1805
      %v1932 = vpop.f32.mrf.mxu0
      %v1933 = vadd.f32 %v1697, %v1932
      %1934 = vmatmul.f32.gmra.mxu0 %v1808
      %v1935 = vpop.f32.mrf.mxu0
      %v1936 = vadd.f32 %v1700, %v1935
      %1937 = vmatmul.f32.gmra.mxu0 %v1811
      %v1938 = vpop.f32.mrf.mxu0
      %v1939 = vadd.f32 %v1703, %v1938
      %1940 = vmatmul.f32.gmra.mxu0 %v1814
      %v1941 = vpop.f32.mrf.mxu0
      %v1942 = vadd.f32 %v1706, %v1941
      %1943 = vmatmul.f32.gmra.mxu0 %v1817
      %v1944 = vpop.f32.mrf.mxu0
      %v1945 = vadd.f32 %v1709, %v1944
      %1946 = vmatmul.f32.gmra.mxu0 %v1820
      %v1947 = vpop.f32.mrf.mxu0
      %v1948 = vadd.f32 %v1712, %v1947
      %1949 = vmatmul.f32.gmra.mxu0 %v1823
      %v1950 = vpop.f32.mrf.mxu0
      %v1951 = vadd.f32 %v1715, %v1950
      %1952 = vmatmul.f32.gmra.mxu0 %v1826
      %v1953 = vpop.f32.mrf.mxu0
      %v1954 = vadd.f32 %v1718, %v1953
      %1955 = vmatmul.f32.gmra.mxu0 %v1829
      %v1956 = vpop.f32.mrf.mxu0
      %v1957 = vadd.f32 %v1721, %v1956
      %1958 = vmatmul.f32.gmra.mxu0 %v1832
      %v1959 = vpop.f32.mrf.mxu0
      %v1960 = vadd.f32 %v1724, %v1959
      %1961 = vmatmul.f32.gmra.mxu0 %v1835
      %v1962 = vpop.f32.mrf.mxu0
      %v1963 = vadd.f32 %v1727, %v1962
      %1964 = vmatmul.f32.gmra.mxu0 %v1838
      %v1965 = vpop.f32.mrf.mxu0
      %v1966 = vadd.f32 %v1730, %v1965
      %1967 = vmatmul.f32.gmra.mxu0 %v1841
      %v1968 = vpop.f32.mrf.mxu0
      %v1969 = vadd.f32 %v1733, %v1968
      %1970 = vmatmul.f32.gmra.mxu0 %v1844
      %v1971 = vpop.f32.mrf.mxu0
      %v1972 = vadd.f32 %v1736, %v1971
      %1973 = vmatmul.f32.gmra.mxu0 %v1847
      %v1974 = vpop.f32.mrf.mxu0
      %v1975 = vadd.f32 %v1739, %v1974
      %1976 = vmatmul.f32.gmra.mxu0 %v1850
      %v1977 = vpop.f32.mrf.mxu0
      %v1978 = vadd.f32 %v1742, %v1977
      %1979 = vmatmul.f32.gmra.mxu0 %v1853
      %v1980 = vpop.f32.mrf.mxu0
      %v1981 = vadd.f32 %v1745, %v1980
      %1982 = vmatmul.f32.gmra.mxu0 %v1856
      %v1983 = vpop.f32.mrf.mxu0
      %v1984 = vadd.f32 %v1748, %v1983
      %1985 = vmatmul.f32.gmra.mxu0 %v1859
      %v1986 = vpop.f32.mrf.mxu0
      %v1987 = vadd.f32 %v1751, %v1986
      %1988 = vmatmul.f32.gmra.mxu0 %v1862
      %v1989 = vpop.f32.mrf.mxu0
      %v1990 = vadd.f32 %v1754, %v1989
      %1991 = vmatmul.f32.gmra.mxu0 %v1865
      %v1992 = vpop.f32.mrf.mxu0
      %v1993 = vadd.f32 %v1757, %v1992
      %1994 = vmatmul.f32.gmra.mxu0 %v1868
      %v1995 = vpop.f32.mrf.mxu0
      %v1996 = vadd.f32 %v1760, %v1995
      %1997 = vmatmul.f32.gmra.mxu0 %v1871
      %v1998 = vpop.f32.mrf.mxu0
      %v1999 = vadd.f32 %v1763, %v1998
      %2000 = vmatmul.f32.gmra.mxu0 %v1874
      %v2001 = vpop.f32.mrf.mxu0
      %v2002 = vadd.f32 %v1766, %v2001
      %2003 = vmatmul.f32.gmra.mxu0 %v1877
      %v2004 = vpop.f32.mrf.mxu0
      %v2005 = vadd.f32 %v1769, %v2004
      %2006 = vmatmul.f32.gmra.mxu0 %v1880
      %v2007 = vpop.f32.mrf.mxu0
      %v2008 = vadd.f32 %v1772, %v2007
      %2009 = vmatmul.f32.gmra.mxu0 %v1883
      %v2010 = vpop.f32.mrf.mxu0
      %v2011 = vadd.f32 %v1775, %v2010
      %2012 = vmatmul.f32.gmra.mxu0 %v1886
      %v2013 = vpop.f32.mrf.mxu0
      %v2014 = vadd.f32 %v1778, %v2013
      %2015 = vmatmul.f32.gmra.mxu0 %v1889
      %v2016 = vpop.f32.mrf.mxu0
      %v2017 = vadd.f32 %v1781, %v2016
      %2018 = vmatmul.f32.gmra.mxu0 %v1892
      %v2019 = vpop.f32.mrf.mxu0
      %v2020 = vadd.f32 %v1784, %v2019
      %2021 = vdwg.mxu0
      %v2022 = vld [vmem:[%s530] sm:$0xff]
      %v2023 = vld [vmem:[%s530 + $0x8] sm:$0xff]
      %v2024 = vld [vmem:[%s530 + $0x18] sm:$0xff]
      %v2025 = vld [vmem:[%s530 + $0x20] sm:$0xff]
      %v2026 = vld [vmem:[%s530 + $0x30] sm:$0xff]
      %v2027 = vld [vmem:[%s530 + $0x38] sm:$0xff]
      %v2028 = vld [vmem:[%s530 + $0x48] sm:$0xff]
      %v2029 = vld [vmem:[%s530 + $0x50] sm:$0xff]
      %v2030 = vld [vmem:[%s530 + $0x60] sm:$0xff]
      %v2031 = vld [vmem:[%s530 + $0x68] sm:$0xff]
      %v2032 = vld [vmem:[%s530 + $0x78] sm:$0xff]
      %v2033 = vld [vmem:[%s530 + $0x80] sm:$0xff]
      %v2034 = vld [vmem:[%s530 + $0x90] sm:$0xff]
      %v2035 = vld [vmem:[%s530 + $0x98] sm:$0xff]
      %v2036 = vld [vmem:[%s530 + $0xa8] sm:$0xff]
      %v2037 = vld [vmem:[%s530 + $0xb0] sm:$0xff]
      %v2038 = vld [vmem:[%s530 + $0xc0] sm:$0xff]
      %v2039 = vld [vmem:[%s530 + $0xc8] sm:$0xff]
      %v2040 = vld [vmem:[%s530 + $0xd8] sm:$0xff]
      %v2041 = vld [vmem:[%s530 + $0xe0] sm:$0xff]
      %v2042 = vld [vmem:[%s530 + $0xf0] sm:$0xff]
      %v2043 = vld [vmem:[%s530 + $0xf8] sm:$0xff]
      %v2044 = vld [vmem:[%s530 + $0x108] sm:$0xff]
      %v2045 = vld [vmem:[%s530 + $0x110] sm:$0xff]
      %v2046 = vld [vmem:[%s530 + $0x120] sm:$0xff]
      %v2047 = vld [vmem:[%s530 + $0x128] sm:$0xff]
      %v2048 = vld [vmem:[%s530 + $0x138] sm:$0xff]
      %v2049 = vld [vmem:[%s530 + $0x140] sm:$0xff]
      %v2050 = vld [vmem:[%s530 + $0x150] sm:$0xff]
      %v2051 = vld [vmem:[%s530 + $0x158] sm:$0xff]
      %v2052 = vld [vmem:[%s530 + $0x168] sm:$0xff]
      %v2053 = vld [vmem:[%s530 + $0x170] sm:$0xff]
      %v2054 = vld [vmem:[%s530 + $0x180] sm:$0xff]
      %v2055 = vld [vmem:[%s530 + $0x188] sm:$0xff]
      %v2056 = vld [vmem:[%s530 + $0x198] sm:$0xff]
      %v2057 = vld [vmem:[%s530 + $0x1a0] sm:$0xff]
      %v2058 = vld [vmem:[%s530 + $0x1] sm:$0xff]
      %v2059 = vld [vmem:[%s530 + $0x9] sm:$0xff]
      %v2060 = vld [vmem:[%s530 + $0x19] sm:$0xff]
      %v2061 = vld [vmem:[%s530 + $0x21] sm:$0xff]
      %v2062 = vld [vmem:[%s530 + $0x31] sm:$0xff]
      %v2063 = vld [vmem:[%s530 + $0x39] sm:$0xff]
      %v2064 = vld [vmem:[%s530 + $0x49] sm:$0xff]
      %v2065 = vld [vmem:[%s530 + $0x51] sm:$0xff]
      %v2066 = vld [vmem:[%s530 + $0x61] sm:$0xff]
      %v2067 = vld [vmem:[%s530 + $0x69] sm:$0xff]
      %v2068 = vld [vmem:[%s530 + $0x79] sm:$0xff]
      %v2069 = vld [vmem:[%s530 + $0x81] sm:$0xff]
      %v2070 = vld [vmem:[%s530 + $0x91] sm:$0xff]
      %v2071 = vld [vmem:[%s530 + $0x99] sm:$0xff]
      %v2072 = vld [vmem:[%s530 + $0xa9] sm:$0xff]
      %v2073 = vld [vmem:[%s530 + $0xb1] sm:$0xff]
      %v2074 = vld [vmem:[%s530 + $0xc1] sm:$0xff]
      %v2075 = vld [vmem:[%s530 + $0xc9] sm:$0xff]
      %v2076 = vld [vmem:[%s530 + $0xd9] sm:$0xff]
      %v2077 = vld [vmem:[%s530 + $0xe1] sm:$0xff]
      %v2078 = vld [vmem:[%s530 + $0xf1] sm:$0xff]
      %v2079 = vld [vmem:[%s530 + $0xf9] sm:$0xff]
      %v2080 = vld [vmem:[%s530 + $0x109] sm:$0xff]
      %v2081 = vld [vmem:[%s530 + $0x111] sm:$0xff]
      %v2082 = vld [vmem:[%s530 + $0x121] sm:$0xff]
      %v2083 = vld [vmem:[%s530 + $0x129] sm:$0xff]
      %v2084 = vld [vmem:[%s530 + $0x139] sm:$0xff]
      %v2085 = vld [vmem:[%s530 + $0x141] sm:$0xff]
      %v2086 = vld [vmem:[%s530 + $0x151] sm:$0xff]
      %v2087 = vld [vmem:[%s530 + $0x159] sm:$0xff]
      %v2088 = vld [vmem:[%s530 + $0x169] sm:$0xff]
      %v2089 = vld [vmem:[%s530 + $0x171] sm:$0xff]
      %v2090 = vld [vmem:[%s530 + $0x181] sm:$0xff]
      %v2091 = vld [vmem:[%s530 + $0x189] sm:$0xff]
      %v2092 = vld [vmem:[%s530 + $0x199] sm:$0xff]
      %v2093 = vld [vmem:[%s530 + $0x1a1] sm:$0xff]
      %v2094 = vld [vmem:[%s530 + $0x2] sm:$0xff]
      %v2095 = vld [vmem:[%s530 + $0xa] sm:$0xff]
      %v2096 = vld [vmem:[%s530 + $0x1a] sm:$0xff]
      %v2097 = vld [vmem:[%s530 + $0x22] sm:$0xff]
      %v2098 = vld [vmem:[%s530 + $0x32] sm:$0xff]
      %v2099 = vld [vmem:[%s530 + $0x3a] sm:$0xff]
      %v2100 = vld [vmem:[%s530 + $0x4a] sm:$0xff]
      %v2101 = vld [vmem:[%s530 + $0x52] sm:$0xff]
      %v2102 = vld [vmem:[%s530 + $0x62] sm:$0xff]
      %v2103 = vld [vmem:[%s530 + $0x6a] sm:$0xff]
      %v2104 = vld [vmem:[%s530 + $0x7a] sm:$0xff]
      %v2105 = vld [vmem:[%s530 + $0x82] sm:$0xff]
      %v2106 = vld [vmem:[%s530 + $0x92] sm:$0xff]
      %v2107 = vld [vmem:[%s530 + $0x9a] sm:$0xff]
      %v2108 = vld [vmem:[%s530 + $0xaa] sm:$0xff]
      %v2109 = vld [vmem:[%s530 + $0xb2] sm:$0xff]
      %v2110 = vld [vmem:[%s530 + $0xc2] sm:$0xff]
      %v2111 = vld [vmem:[%s530 + $0xca] sm:$0xff]
      %v2112 = vld [vmem:[%s530 + $0xda] sm:$0xff]
      %v2113 = vld [vmem:[%s530 + $0xe2] sm:$0xff]
      %v2114 = vld [vmem:[%s530 + $0xf2] sm:$0xff]
      %v2115 = vld [vmem:[%s530 + $0xfa] sm:$0xff]
      %v2116 = vld [vmem:[%s530 + $0x10a] sm:$0xff]
      %v2117 = vld [vmem:[%s530 + $0x112] sm:$0xff]
      %v2118 = vld [vmem:[%s530 + $0x122] sm:$0xff]
      %v2119 = vld [vmem:[%s530 + $0x12a] sm:$0xff]
      %v2120 = vld [vmem:[%s530 + $0x13a] sm:$0xff]
      %v2121 = vld [vmem:[%s530 + $0x142] sm:$0xff]
      %v2122 = vld [vmem:[%s530 + $0x152] sm:$0xff]
      %v2123 = vld [vmem:[%s530 + $0x15a] sm:$0xff]
      %v2124 = vld [vmem:[%s530 + $0x16a] sm:$0xff]
      %v2125 = vld [vmem:[%s530 + $0x172] sm:$0xff]
      %v2126 = vld [vmem:[%s530 + $0x182] sm:$0xff]
      %v2127 = vld [vmem:[%s530 + $0x18a] sm:$0xff]
      %v2128 = vld [vmem:[%s530 + $0x19a] sm:$0xff]
      %v2129 = vld [vmem:[%s530 + $0x1a2] sm:$0xff]
      %2166 = vrot.lane.b32.xlu0 %v2058, 4
      %v2167 = vpop.permute.xlu0 %2166
      %2168 = vrot.lane.b32.xlu0 %v2059, 4
      %v2169 = vpop.permute.xlu0 %2168
      %2170 = vrot.lane.b32.xlu0 %v2060, 4
      %v2171 = vpop.permute.xlu0 %2170
      %2172 = vrot.lane.b32.xlu0 %v2061, 4
      %v2173 = vpop.permute.xlu0 %2172
      %2174 = vrot.lane.b32.xlu0 %v2062, 4
      %v2175 = vpop.permute.xlu0 %2174
      %2176 = vrot.lane.b32.xlu0 %v2063, 4
      %v2177 = vpop.permute.xlu0 %2176
      %2178 = vrot.lane.b32.xlu0 %v2064, 4
      %v2179 = vpop.permute.xlu0 %2178
      %2180 = vrot.lane.b32.xlu0 %v2065, 4
      %v2181 = vpop.permute.xlu0 %2180
      %2182 = vrot.lane.b32.xlu0 %v2066, 4
      %v2183 = vpop.permute.xlu0 %2182
      %2184 = vrot.lane.b32.xlu0 %v2067, 4
      %v2185 = vpop.permute.xlu0 %2184
      %2186 = vrot.lane.b32.xlu0 %v2068, 4
      %v2187 = vpop.permute.xlu0 %2186
      %2188 = vrot.lane.b32.xlu0 %v2069, 4
      %v2189 = vpop.permute.xlu0 %2188
      %2190 = vrot.lane.b32.xlu0 %v2070, 4
      %v2191 = vpop.permute.xlu0 %2190
      %2192 = vrot.lane.b32.xlu0 %v2071, 4
      %v2193 = vpop.permute.xlu0 %2192
      %2194 = vrot.lane.b32.xlu0 %v2072, 4
      %v2195 = vpop.permute.xlu0 %2194
      %2196 = vrot.lane.b32.xlu0 %v2073, 4
      %v2197 = vpop.permute.xlu0 %2196
      %2198 = vrot.lane.b32.xlu0 %v2074, 4
      %v2199 = vpop.permute.xlu0 %2198
      %2200 = vrot.lane.b32.xlu0 %v2075, 4
      %v2201 = vpop.permute.xlu0 %2200
      %2202 = vrot.lane.b32.xlu0 %v2076, 4
      %v2203 = vpop.permute.xlu0 %2202
      %2204 = vrot.lane.b32.xlu0 %v2077, 4
      %v2205 = vpop.permute.xlu0 %2204
      %2206 = vrot.lane.b32.xlu0 %v2078, 4
      %v2207 = vpop.permute.xlu0 %2206
      %2208 = vrot.lane.b32.xlu0 %v2079, 4
      %v2209 = vpop.permute.xlu0 %2208
      %2210 = vrot.lane.b32.xlu0 %v2080, 4
      %v2211 = vpop.permute.xlu0 %2210
      %2212 = vrot.lane.b32.xlu0 %v2081, 4
      %v2213 = vpop.permute.xlu0 %2212
      %2214 = vrot.lane.b32.xlu0 %v2082, 4
      %v2215 = vpop.permute.xlu0 %2214
      %2216 = vrot.lane.b32.xlu0 %v2083, 4
      %v2217 = vpop.permute.xlu0 %2216
      %2218 = vrot.lane.b32.xlu0 %v2084, 4
      %v2219 = vpop.permute.xlu0 %2218
      %2220 = vrot.lane.b32.xlu0 %v2085, 4
      %v2221 = vpop.permute.xlu0 %2220
      %2222 = vrot.lane.b32.xlu0 %v2086, 4
      %v2223 = vpop.permute.xlu0 %2222
      %2224 = vrot.lane.b32.xlu0 %v2087, 4
      %v2225 = vpop.permute.xlu0 %2224
      %2226 = vrot.lane.b32.xlu0 %v2088, 4
      %v2227 = vpop.permute.xlu0 %2226
      %2228 = vrot.lane.b32.xlu0 %v2089, 4
      %v2229 = vpop.permute.xlu0 %2228
      %2230 = vrot.lane.b32.xlu0 %v2090, 4
      %v2231 = vpop.permute.xlu0 %2230
      %2232 = vrot.lane.b32.xlu0 %v2091, 4
      %v2233 = vpop.permute.xlu0 %2232
      %2234 = vrot.lane.b32.xlu0 %v2092, 4
      %v2235 = vpop.permute.xlu0 %2234
      %2236 = vrot.lane.b32.xlu0 %v2093, 4
      %v2237 = vpop.permute.xlu0 %2236
      %2310 = vrot.lane.b32.xlu0 %v2094, 8
      %v2311 = vpop.permute.xlu0 %2310
      %2312 = vrot.lane.b32.xlu0 %v2095, 8
      %v2313 = vpop.permute.xlu0 %2312
      %2314 = vrot.lane.b32.xlu0 %v2096, 8
      %v2315 = vpop.permute.xlu0 %2314
      %2316 = vrot.lane.b32.xlu0 %v2097, 8
      %v2317 = vpop.permute.xlu0 %2316
      %2318 = vrot.lane.b32.xlu0 %v2098, 8
      %v2319 = vpop.permute.xlu0 %2318
      %2320 = vrot.lane.b32.xlu0 %v2099, 8
      %v2321 = vpop.permute.xlu0 %2320
      %2322 = vrot.lane.b32.xlu0 %v2100, 8
      %v2323 = vpop.permute.xlu0 %2322
      %2324 = vrot.lane.b32.xlu0 %v2101, 8
      %v2325 = vpop.permute.xlu0 %2324
      %2326 = vrot.lane.b32.xlu0 %v2102, 8
      %v2327 = vpop.permute.xlu0 %2326
      %2328 = vrot.lane.b32.xlu0 %v2103, 8
      %v2329 = vpop.permute.xlu0 %2328
      %2330 = vrot.lane.b32.xlu0 %v2104, 8
      %v2331 = vpop.permute.xlu0 %2330
      %2332 = vrot.lane.b32.xlu0 %v2105, 8
      %v2333 = vpop.permute.xlu0 %2332
      %2334 = vrot.lane.b32.xlu0 %v2106, 8
      %v2335 = vpop.permute.xlu0 %2334
      %2336 = vrot.lane.b32.xlu0 %v2107, 8
      %v2337 = vpop.permute.xlu0 %2336
      %2338 = vrot.lane.b32.xlu0 %v2108, 8
      %v2339 = vpop.permute.xlu0 %2338
      %2340 = vrot.lane.b32.xlu0 %v2109, 8
      %v2341 = vpop.permute.xlu0 %2340
      %2342 = vrot.lane.b32.xlu0 %v2110, 8
      %v2343 = vpop.permute.xlu0 %2342
      %2344 = vrot.lane.b32.xlu0 %v2111, 8
      %v2345 = vpop.permute.xlu0 %2344
      %2346 = vrot.lane.b32.xlu0 %v2112, 8
      %v2347 = vpop.permute.xlu0 %2346
      %2348 = vrot.lane.b32.xlu0 %v2113, 8
      %v2349 = vpop.permute.xlu0 %2348
      %2350 = vrot.lane.b32.xlu0 %v2114, 8
      %v2351 = vpop.permute.xlu0 %2350
      %2352 = vrot.lane.b32.xlu0 %v2115, 8
      %v2353 = vpop.permute.xlu0 %2352
      %2354 = vrot.lane.b32.xlu0 %v2116, 8
      %v2355 = vpop.permute.xlu0 %2354
      %2356 = vrot.lane.b32.xlu0 %v2117, 8
      %v2357 = vpop.permute.xlu0 %2356
      %2358 = vrot.lane.b32.xlu0 %v2118, 8
      %v2359 = vpop.permute.xlu0 %2358
      %2360 = vrot.lane.b32.xlu0 %v2119, 8
      %v2361 = vpop.permute.xlu0 %2360
      %2362 = vrot.lane.b32.xlu0 %v2120, 8
      %v2363 = vpop.permute.xlu0 %2362
      %2364 = vrot.lane.b32.xlu0 %v2121, 8
      %v2365 = vpop.permute.xlu0 %2364
      %2366 = vrot.lane.b32.xlu0 %v2122, 8
      %v2367 = vpop.permute.xlu0 %2366
      %2368 = vrot.lane.b32.xlu0 %v2123, 8
      %v2369 = vpop.permute.xlu0 %2368
      %2370 = vrot.lane.b32.xlu0 %v2124, 8
      %v2371 = vpop.permute.xlu0 %2370
      %2372 = vrot.lane.b32.xlu0 %v2125, 8
      %v2373 = vpop.permute.xlu0 %2372
      %2374 = vrot.lane.b32.xlu0 %v2126, 8
      %v2375 = vpop.permute.xlu0 %2374
      %2376 = vrot.lane.b32.xlu0 %v2127, 8
      %v2377 = vpop.permute.xlu0 %2376
      %2378 = vrot.lane.b32.xlu0 %v2128, 8
      %v2379 = vpop.permute.xlu0 %2378
      %2380 = vrot.lane.b32.xlu0 %v2129, 8
      %v2381 = vpop.permute.xlu0 %2380
      %v2418 = vsel %vm531, %v2022, %v2167
      %v2419 = vsel %vm531, %v2023, %v2169
      %v2420 = vsel %vm531, %v2024, %v2171
      %v2421 = vsel %vm531, %v2025, %v2173
      %v2422 = vsel %vm531, %v2026, %v2175
      %v2423 = vsel %vm531, %v2027, %v2177
      %v2424 = vsel %vm531, %v2028, %v2179
      %v2425 = vsel %vm531, %v2029, %v2181
      %v2426 = vsel %vm531, %v2030, %v2183
      %v2427 = vsel %vm531, %v2031, %v2185
      %v2428 = vsel %vm531, %v2032, %v2187
      %v2429 = vsel %vm531, %v2033, %v2189
      %v2430 = vsel %vm531, %v2034, %v2191
      %v2431 = vsel %vm531, %v2035, %v2193
      %v2432 = vsel %vm531, %v2036, %v2195
      %v2433 = vsel %vm531, %v2037, %v2197
      %v2434 = vsel %vm531, %v2038, %v2199
      %v2435 = vsel %vm531, %v2039, %v2201
      %v2436 = vsel %vm531, %v2040, %v2203
      %v2437 = vsel %vm531, %v2041, %v2205
      %v2438 = vsel %vm531, %v2042, %v2207
      %v2439 = vsel %vm531, %v2043, %v2209
      %v2440 = vsel %vm531, %v2044, %v2211
      %v2441 = vsel %vm531, %v2045, %v2213
      %v2442 = vsel %vm531, %v2046, %v2215
      %v2443 = vsel %vm531, %v2047, %v2217
      %v2444 = vsel %vm531, %v2048, %v2219
      %v2445 = vsel %vm531, %v2049, %v2221
      %v2446 = vsel %vm531, %v2050, %v2223
      %v2447 = vsel %vm531, %v2051, %v2225
      %v2448 = vsel %vm531, %v2052, %v2227
      %v2449 = vsel %vm531, %v2053, %v2229
      %v2450 = vsel %vm531, %v2054, %v2231
      %v2451 = vsel %vm531, %v2055, %v2233
      %v2452 = vsel %vm531, %v2056, %v2235
      %v2453 = vsel %vm531, %v2057, %v2237
      %v2454 = vsel %vm1037, %v2418, %v2311
      %v2455 = vsel %vm1037, %v2419, %v2313
      %v2456 = vsel %vm1037, %v2420, %v2315
      %v2457 = vsel %vm1037, %v2421, %v2317
      %v2458 = vsel %vm1037, %v2422, %v2319
      %v2459 = vsel %vm1037, %v2423, %v2321
      %v2460 = vsel %vm1037, %v2424, %v2323
      %v2461 = vsel %vm1037, %v2425, %v2325
      %v2462 = vsel %vm1037, %v2426, %v2327
      %v2463 = vsel %vm1037, %v2427, %v2329
      %v2464 = vsel %vm1037, %v2428, %v2331
      %v2465 = vsel %vm1037, %v2429, %v2333
      %v2466 = vsel %vm1037, %v2430, %v2335
      %v2467 = vsel %vm1037, %v2431, %v2337
      %v2468 = vsel %vm1037, %v2432, %v2339
      %v2469 = vsel %vm1037, %v2433, %v2341
      %v2470 = vsel %vm1037, %v2434, %v2343
      %v2471 = vsel %vm1037, %v2435, %v2345
      %v2472 = vsel %vm1037, %v2436, %v2347
      %v2473 = vsel %vm1037, %v2437, %v2349
      %v2474 = vsel %vm1037, %v2438, %v2351
      %v2475 = vsel %vm1037, %v2439, %v2353
      %v2476 = vsel %vm1037, %v2440, %v2355
      %v2477 = vsel %vm1037, %v2441, %v2357
      %v2478 = vsel %vm1037, %v2442, %v2359
      %v2479 = vsel %vm1037, %v2443, %v2361
      %v2480 = vsel %vm1037, %v2444, %v2363
      %v2481 = vsel %vm1037, %v2445, %v2365
      %v2482 = vsel %vm1037, %v2446, %v2367
      %v2483 = vsel %vm1037, %v2447, %v2369
      %v2484 = vsel %vm1037, %v2448, %v2371
      %v2485 = vsel %vm1037, %v2449, %v2373
      %v2486 = vsel %vm1037, %v2450, %v2375
      %v2487 = vsel %vm1037, %v2451, %v2377
      %v2488 = vsel %vm1037, %v2452, %v2379
      %v2489 = vsel %vm1037, %v2453, %v2381
      %s2490 = scalar_lea.vmem %s3, 32
      %v2491 = vld [vmem:[%s2490] sm:$0xff]
      %v2492 = vld [vmem:[%s2490 + $0x8] sm:$0xf]
      %v2494 = vsel %vm1548, %v2454, 0
      %v2497 = vsel %vm1548, %v2455, 0
      %v2500 = vsel %vm1548, %v2456, 0
      %v2503 = vsel %vm1548, %v2457, 0
      %v2506 = vsel %vm1548, %v2458, 0
      %v2509 = vsel %vm1548, %v2459, 0
      %v2512 = vsel %vm1548, %v2460, 0
      %v2515 = vsel %vm1548, %v2461, 0
      %v2518 = vsel %vm1548, %v2462, 0
      %v2521 = vsel %vm1548, %v2463, 0
      %v2524 = vsel %vm1548, %v2464, 0
      %v2527 = vsel %vm1548, %v2465, 0
      %v2530 = vsel %vm1548, %v2466, 0
      %v2533 = vsel %vm1548, %v2467, 0
      %v2536 = vsel %vm1548, %v2468, 0
      %v2539 = vsel %vm1548, %v2469, 0
      %v2542 = vsel %vm1548, %v2470, 0
      %v2545 = vsel %vm1548, %v2471, 0
      %v2548 = vsel %vm1548, %v2472, 0
      %v2551 = vsel %vm1548, %v2473, 0
      %v2554 = vsel %vm1548, %v2474, 0
      %v2557 = vsel %vm1548, %v2475, 0
      %v2560 = vsel %vm1548, %v2476, 0
      %v2563 = vsel %vm1548, %v2477, 0
      %v2566 = vsel %vm1548, %v2478, 0
      %v2569 = vsel %vm1548, %v2479, 0
      %v2572 = vsel %vm1548, %v2480, 0
      %v2575 = vsel %vm1548, %v2481, 0
      %v2578 = vsel %vm1548, %v2482, 0
      %v2581 = vsel %vm1548, %v2483, 0
      %v2584 = vsel %vm1548, %v2484, 0
      %v2587 = vsel %vm1548, %v2485, 0
      %v2590 = vsel %vm1548, %v2486, 0
      %v2593 = vsel %vm1548, %v2487, 0
      %v2596 = vsel %vm1548, %v2488, 0
      %v2599 = vsel %vm1548, %v2489, 0
      %v2602 = vsel %vm1657, %v2492, 0
      %2604 = vmatpush.msra.mxu0 0.0
      %2605 = vmatpush.msra.mxu0 0.0
      %2606 = vmatpush.msra.mxu0 0.0
      %2607 = vmatpush.msra.mxu0 0.0
      %2608 = vmatpush.msra.mxu0 0.0
      %2609 = vmatpush.msra.mxu0 0.0
      %2610 = vmatpush.msra.mxu0 0.0
      %2611 = vmatpush.msra.mxu0 0.0
      %2612 = vmatpush.msra.mxu0 0.0
      %2613 = vmatpush.msra.mxu0 0.0
      %2614 = vmatpush.msra.mxu0 0.0
      %2615 = vmatpush.msra.mxu0 0.0
      %2616 = vmatpush.msra.mxu0 0.0
      %2617 = vmatpush.msra.mxu0 0.0
      %2618 = vmatpush.msra.mxu0 %v2602
      %2619 = vmatpush.msra.mxu0 %v2491
      %2620 = vmatmul.f32.gmra.mxu0 %v2494
      %v2621 = vpop.f32.mrf.mxu0
      %v2622 = vadd.f32 0.0, %v2621
      %2623 = vmatmul.f32.gmra.mxu0 %v2497
      %v2624 = vpop.f32.mrf.mxu0
      %v2625 = vadd.f32 0.0, %v2624
      %2626 = vmatmul.f32.gmra.mxu0 %v2500
      %v2627 = vpop.f32.mrf.mxu0
      %v2628 = vadd.f32 0.0, %v2627
      %2629 = vmatmul.f32.gmra.mxu0 %v2503
      %v2630 = vpop.f32.mrf.mxu0
      %v2631 = vadd.f32 0.0, %v2630
      %2632 = vmatmul.f32.gmra.mxu0 %v2506
      %v2633 = vpop.f32.mrf.mxu0
      %v2634 = vadd.f32 0.0, %v2633
      %2635 = vmatmul.f32.gmra.mxu0 %v2509
      %v2636 = vpop.f32.mrf.mxu0
      %v2637 = vadd.f32 0.0, %v2636
      %2638 = vmatmul.f32.gmra.mxu0 %v2512
      %v2639 = vpop.f32.mrf.mxu0
      %v2640 = vadd.f32 0.0, %v2639
      %2641 = vmatmul.f32.gmra.mxu0 %v2515
      %v2642 = vpop.f32.mrf.mxu0
      %v2643 = vadd.f32 0.0, %v2642
      %2644 = vmatmul.f32.gmra.mxu0 %v2518
      %v2645 = vpop.f32.mrf.mxu0
      %v2646 = vadd.f32 0.0, %v2645
      %2647 = vmatmul.f32.gmra.mxu0 %v2521
      %v2648 = vpop.f32.mrf.mxu0
      %v2649 = vadd.f32 0.0, %v2648
      %2650 = vmatmul.f32.gmra.mxu0 %v2524
      %v2651 = vpop.f32.mrf.mxu0
      %v2652 = vadd.f32 0.0, %v2651
      %2653 = vmatmul.f32.gmra.mxu0 %v2527
      %v2654 = vpop.f32.mrf.mxu0
      %v2655 = vadd.f32 0.0, %v2654
      %2656 = vmatmul.f32.gmra.mxu0 %v2530
      %v2657 = vpop.f32.mrf.mxu0
      %v2658 = vadd.f32 0.0, %v2657
      %2659 = vmatmul.f32.gmra.mxu0 %v2533
      %v2660 = vpop.f32.mrf.mxu0
      %v2661 = vadd.f32 0.0, %v2660
      %2662 = vmatmul.f32.gmra.mxu0 %v2536
      %v2663 = vpop.f32.mrf.mxu0
      %v2664 = vadd.f32 0.0, %v2663
      %2665 = vmatmul.f32.gmra.mxu0 %v2539
      %v2666 = vpop.f32.mrf.mxu0
      %v2667 = vadd.f32 0.0, %v2666
      %2668 = vmatmul.f32.gmra.mxu0 %v2542
      %v2669 = vpop.f32.mrf.mxu0
      %v2670 = vadd.f32 0.0, %v2669
      %2671 = vmatmul.f32.gmra.mxu0 %v2545
      %v2672 = vpop.f32.mrf.mxu0
      %v2673 = vadd.f32 0.0, %v2672
      %2674 = vmatmul.f32.gmra.mxu0 %v2548
      %v2675 = vpop.f32.mrf.mxu0
      %v2676 = vadd.f32 0.0, %v2675
      %2677 = vmatmul.f32.gmra.mxu0 %v2551
      %v2678 = vpop.f32.mrf.mxu0
      %v2679 = vadd.f32 0.0, %v2678
      %2680 = vmatmul.f32.gmra.mxu0 %v2554
      %v2681 = vpop.f32.mrf.mxu0
      %v2682 = vadd.f32 0.0, %v2681
      %2683 = vmatmul.f32.gmra.mxu0 %v2557
      %v2684 = vpop.f32.mrf.mxu0
      %v2685 = vadd.f32 0.0, %v2684
      %2686 = vmatmul.f32.gmra.mxu0 %v2560
      %v2687 = vpop.f32.mrf.mxu0
      %v2688 = vadd.f32 0.0, %v2687
      %2689 = vmatmul.f32.gmra.mxu0 %v2563
      %v2690 = vpop.f32.mrf.mxu0
      %v2691 = vadd.f32 0.0, %v2690
      %2692 = vmatmul.f32.gmra.mxu0 %v2566
      %v2693 = vpop.f32.mrf.mxu0
      %v2694 = vadd.f32 0.0, %v2693
      %2695 = vmatmul.f32.gmra.mxu0 %v2569
      %v2696 = vpop.f32.mrf.mxu0
      %v2697 = vadd.f32 0.0, %v2696
      %2698 = vmatmul.f32.gmra.mxu0 %v2572
      %v2699 = vpop.f32.mrf.mxu0
      %v2700 = vadd.f32 0.0, %v2699
      %2701 = vmatmul.f32.gmra.mxu0 %v2575
      %v2702 = vpop.f32.mrf.mxu0
      %v2703 = vadd.f32 0.0, %v2702
      %2704 = vmatmul.f32.gmra.mxu0 %v2578
      %v2705 = vpop.f32.mrf.mxu0
      %v2706 = vadd.f32 0.0, %v2705
      %2707 = vmatmul.f32.gmra.mxu0 %v2581
      %v2708 = vpop.f32.mrf.mxu0
      %v2709 = vadd.f32 0.0, %v2708
      %2710 = vmatmul.f32.gmra.mxu0 %v2584
      %v2711 = vpop.f32.mrf.mxu0
      %v2712 = vadd.f32 0.0, %v2711
      %2713 = vmatmul.f32.gmra.mxu0 %v2587
      %v2714 = vpop.f32.mrf.mxu0
      %v2715 = vadd.f32 0.0, %v2714
      %2716 = vmatmul.f32.gmra.mxu0 %v2590
      %v2717 = vpop.f32.mrf.mxu0
      %v2718 = vadd.f32 0.0, %v2717
      %2719 = vmatmul.f32.gmra.mxu0 %v2593
      %v2720 = vpop.f32.mrf.mxu0
      %v2721 = vadd.f32 0.0, %v2720
      %2722 = vmatmul.f32.gmra.mxu0 %v2596
      %v2723 = vpop.f32.mrf.mxu0
      %v2724 = vadd.f32 0.0, %v2723
      %2725 = vmatmul.f32.gmra.mxu0 %v2599
      %v2726 = vpop.f32.mrf.mxu0
      %v2727 = vadd.f32 0.0, %v2726
      %2728 = vdwg.mxu0
      %v2729 = vadd.f32 %v1915, %v2622
      %v2730 = vadd.f32 %v1918, %v2625
      %v2731 = vadd.f32 %v1921, %v2628
      %v2732 = vadd.f32 %v1924, %v2631
      %v2733 = vadd.f32 %v1927, %v2634
      %v2734 = vadd.f32 %v1930, %v2637
      %v2735 = vadd.f32 %v1933, %v2640
      %v2736 = vadd.f32 %v1936, %v2643
      %v2737 = vadd.f32 %v1939, %v2646
      %v2738 = vadd.f32 %v1942, %v2649
      %v2739 = vadd.f32 %v1945, %v2652
      %v2740 = vadd.f32 %v1948, %v2655
      %v2741 = vadd.f32 %v1951, %v2658
      %v2742 = vadd.f32 %v1954, %v2661
      %v2743 = vadd.f32 %v1957, %v2664
      %v2744 = vadd.f32 %v1960, %v2667
      %v2745 = vadd.f32 %v1963, %v2670
      %v2746 = vadd.f32 %v1966, %v2673
      %v2747 = vadd.f32 %v1969, %v2676
      %v2748 = vadd.f32 %v1972, %v2679
      %v2749 = vadd.f32 %v1975, %v2682
      %v2750 = vadd.f32 %v1978, %v2685
      %v2751 = vadd.f32 %v1981, %v2688
      %v2752 = vadd.f32 %v1984, %v2691
      %v2753 = vadd.f32 %v1987, %v2694
      %v2754 = vadd.f32 %v1990, %v2697
      %v2755 = vadd.f32 %v1993, %v2700
      %v2756 = vadd.f32 %v1996, %v2703
      %v2757 = vadd.f32 %v1999, %v2706
      %v2758 = vadd.f32 %v2002, %v2709
      %v2759 = vadd.f32 %v2005, %v2712
      %v2760 = vadd.f32 %v2008, %v2715
      %v2761 = vadd.f32 %v2011, %v2718
      %v2762 = vadd.f32 %v2014, %v2721
      %v2763 = vadd.f32 %v2017, %v2724
      %v2764 = vadd.f32 %v2020, %v2727
      %v2765 = vld [vmem:[%s4] sm:$0x1]
      %v2767 = vperm.slane %v2765, 0
      %v2769 = vadd.f32 %v2729, %v2767
      %v2770 = vadd.f32 %v2730, %v2767
      %v2771 = vadd.f32 %v2731, %v2767
      %v2772 = vadd.f32 %v2732, %v2767
      %v2773 = vadd.f32 %v2733, %v2767
      %v2774 = vadd.f32 %v2734, %v2767
      %v2775 = vadd.f32 %v2735, %v2767
      %v2776 = vadd.f32 %v2736, %v2767
      %v2777 = vadd.f32 %v2737, %v2767
      %v2778 = vadd.f32 %v2738, %v2767
      %v2779 = vadd.f32 %v2739, %v2767
      %v2780 = vadd.f32 %v2740, %v2767
      %v2781 = vadd.f32 %v2741, %v2767
      %v2782 = vadd.f32 %v2742, %v2767
      %v2783 = vadd.f32 %v2743, %v2767
      %v2784 = vadd.f32 %v2744, %v2767
      %v2785 = vadd.f32 %v2745, %v2767
      %v2786 = vadd.f32 %v2746, %v2767
      %v2787 = vadd.f32 %v2747, %v2767
      %v2788 = vadd.f32 %v2748, %v2767
      %v2789 = vadd.f32 %v2749, %v2767
      %v2790 = vadd.f32 %v2750, %v2767
      %v2791 = vadd.f32 %v2751, %v2767
      %v2792 = vadd.f32 %v2752, %v2767
      %v2793 = vadd.f32 %v2753, %v2767
      %v2794 = vadd.f32 %v2754, %v2767
      %v2795 = vadd.f32 %v2755, %v2767
      %v2796 = vadd.f32 %v2756, %v2767
      %v2797 = vadd.f32 %v2757, %v2767
      %v2798 = vadd.f32 %v2758, %v2767
      %v2799 = vadd.f32 %v2759, %v2767
      %v2800 = vadd.f32 %v2760, %v2767
      %v2801 = vadd.f32 %v2761, %v2767
      %v2802 = vadd.f32 %v2762, %v2767
      %v2803 = vadd.f32 %v2763, %v2767
      %v2804 = vadd.f32 %v2764, %v2767
      %v2805 = vmax.f32 %v2769, 0.0
      %v2806 = vmax.f32 %v2770, 0.0
      %v2807 = vmax.f32 %v2771, 0.0
      %v2808 = vmax.f32 %v2772, 0.0
      %v2809 = vmax.f32 %v2773, 0.0
      %v2810 = vmax.f32 %v2774, 0.0
      %v2811 = vmax.f32 %v2775, 0.0
      %v2812 = vmax.f32 %v2776, 0.0
      %v2813 = vmax.f32 %v2777, 0.0
      %v2814 = vmax.f32 %v2778, 0.0
      %v2815 = vmax.f32 %v2779, 0.0
      %v2816 = vmax.f32 %v2780, 0.0
      %v2817 = vmax.f32 %v2781, 0.0
      %v2818 = vmax.f32 %v2782, 0.0
      %v2819 = vmax.f32 %v2783, 0.0
      %v2820 = vmax.f32 %v2784, 0.0
      %v2821 = vmax.f32 %v2785, 0.0
      %v2822 = vmax.f32 %v2786, 0.0
      %v2823 = vmax.f32 %v2787, 0.0
      %v2824 = vmax.f32 %v2788, 0.0
      %v2825 = vmax.f32 %v2789, 0.0
      %v2826 = vmax.f32 %v2790, 0.0
      %v2827 = vmax.f32 %v2791, 0.0
      %v2828 = vmax.f32 %v2792, 0.0
      %v2829 = vmax.f32 %v2793, 0.0
      %v2830 = vmax.f32 %v2794, 0.0
      %v2831 = vmax.f32 %v2795, 0.0
      %v2832 = vmax.f32 %v2796, 0.0
      %v2833 = vmax.f32 %v2797, 0.0
      %v2834 = vmax.f32 %v2798, 0.0
      %v2835 = vmax.f32 %v2799, 0.0
      %v2836 = vmax.f32 %v2800, 0.0
      %v2837 = vmax.f32 %v2801, 0.0
      %v2838 = vmax.f32 %v2802, 0.0
      %v2839 = vmax.f32 %v2803, 0.0
      %v2840 = vmax.f32 %v2804, 0.0
      %2841 = vst.msk [vmem:[#allocation3] sm:$0x1] %vm457, 0.0
      %2842 = vst.msk [vmem:[#allocation3 + $0x18] sm:$0x1] %vm457, 0.0
      %2843 = vst.msk [vmem:[#allocation3 + $0x30] sm:$0x1] %vm457, 0.0
      %2844 = vst.msk [vmem:[#allocation3 + $0x48] sm:$0x1] %vm457, 0.0
      %2845 = vst.msk [vmem:[#allocation3 + $0x60] sm:$0x1] %vm457, 0.0
      %2846 = vst.msk [vmem:[#allocation3 + $0x78] sm:$0x1] %vm457, 0.0
      %2847 = vst.msk [vmem:[#allocation3 + $0x90] sm:$0x1] %vm457, 0.0
      %2848 = vst.msk [vmem:[#allocation3 + $0xa8] sm:$0x1] %vm457, 0.0
      %2849 = vst.msk [vmem:[#allocation3 + $0xc0] sm:$0x1] %vm457, 0.0
      %2850 = vst.msk [vmem:[#allocation3 + $0xd8] sm:$0x1] %vm457, 0.0
      %2851 = vst.msk [vmem:[#allocation3 + $0xf0] sm:$0x1] %vm457, 0.0
      %2852 = vst.msk [vmem:[#allocation3 + $0x108] sm:$0x1] %vm457, 0.0
      %2853 = vst.msk [vmem:[#allocation3 + $0x120] sm:$0x1] %vm457, 0.0
      %2854 = vst.msk [vmem:[#allocation3 + $0x138] sm:$0x1] %vm457, 0.0
      %2855 = vst.msk [vmem:[#allocation3 + $0x150] sm:$0x1] %vm457, 0.0
      %2856 = vst.msk [vmem:[#allocation3 + $0x168] sm:$0x1] %vm457, 0.0
      %2857 = vst.msk [vmem:[#allocation3 + $0x180] sm:$0x1] %vm457, 0.0
      %2858 = vst.msk [vmem:[#allocation3 + $0x198] sm:$0x1] %vm457, 0.0
      %2859 = vst.msk [vmem:[#allocation3 + $0x11] sm:$0x1] %vm457, 0.0
      %2860 = vst.msk [vmem:[#allocation3 + $0x29] sm:$0x1] %vm457, 0.0
      %2861 = vst.msk [vmem:[#allocation3 + $0x41] sm:$0x1] %vm457, 0.0
      %2862 = vst.msk [vmem:[#allocation3 + $0x59] sm:$0x1] %vm457, 0.0
      %2863 = vst.msk [vmem:[#allocation3 + $0x71] sm:$0x1] %vm457, 0.0
      %2864 = vst.msk [vmem:[#allocation3 + $0x89] sm:$0x1] %vm457, 0.0
      %2865 = vst.msk [vmem:[#allocation3 + $0xa1] sm:$0x1] %vm457, 0.0
      %2866 = vst.msk [vmem:[#allocation3 + $0xb9] sm:$0x1] %vm457, 0.0
      %2867 = vst.msk [vmem:[#allocation3 + $0xd1] sm:$0x1] %vm457, 0.0
      %2868 = vst.msk [vmem:[#allocation3 + $0xe9] sm:$0x1] %vm457, 0.0
      %2869 = vst.msk [vmem:[#allocation3 + $0x101] sm:$0x1] %vm457, 0.0
      %2870 = vst.msk [vmem:[#allocation3 + $0x119] sm:$0x1] %vm457, 0.0
      %2871 = vst.msk [vmem:[#allocation3 + $0x131] sm:$0x1] %vm457, 0.0
      %2872 = vst.msk [vmem:[#allocation3 + $0x149] sm:$0x1] %vm457, 0.0
      %2873 = vst.msk [vmem:[#allocation3 + $0x161] sm:$0x1] %vm457, 0.0
      %2874 = vst.msk [vmem:[#allocation3 + $0x179] sm:$0x1] %vm457, 0.0
      %2875 = vst.msk [vmem:[#allocation3 + $0x191] sm:$0x1] %vm457, 0.0
      %2876 = vst.msk [vmem:[#allocation3 + $0x1a9] sm:$0x1] %vm457, 0.0
      %2877 = vst.msk [vmem:[#allocation3 + $0x1] sm:$0xff] %vm531, %v2805
      %2878 = vst.msk [vmem:[#allocation3 + $0x9] sm:$0xff] %vm531, %v2806
      %2879 = vst.msk [vmem:[#allocation3 + $0x19] sm:$0xff] %vm531, %v2807
      %2880 = vst.msk [vmem:[#allocation3 + $0x21] sm:$0xff] %vm531, %v2808
      %2881 = vst.msk [vmem:[#allocation3 + $0x31] sm:$0xff] %vm531, %v2809
      %2882 = vst.msk [vmem:[#allocation3 + $0x39] sm:$0xff] %vm531, %v2810
      %2883 = vst.msk [vmem:[#allocation3 + $0x49] sm:$0xff] %vm531, %v2811
      %2884 = vst.msk [vmem:[#allocation3 + $0x51] sm:$0xff] %vm531, %v2812
      %2885 = vst.msk [vmem:[#allocation3 + $0x61] sm:$0xff] %vm531, %v2813
      %2886 = vst.msk [vmem:[#allocation3 + $0x69] sm:$0xff] %vm531, %v2814
      %2887 = vst.msk [vmem:[#allocation3 + $0x79] sm:$0xff] %vm531, %v2815
      %2888 = vst.msk [vmem:[#allocation3 + $0x81] sm:$0xff] %vm531, %v2816
      %2889 = vst.msk [vmem:[#allocation3 + $0x91] sm:$0xff] %vm531, %v2817
      %2890 = vst.msk [vmem:[#allocation3 + $0x99] sm:$0xff] %vm531, %v2818
      %2891 = vst.msk [vmem:[#allocation3 + $0xa9] sm:$0xff] %vm531, %v2819
      %2892 = vst.msk [vmem:[#allocation3 + $0xb1] sm:$0xff] %vm531, %v2820
      %2893 = vst.msk [vmem:[#allocation3 + $0xc1] sm:$0xff] %vm531, %v2821
      %2894 = vst.msk [vmem:[#allocation3 + $0xc9] sm:$0xff] %vm531, %v2822
      %2895 = vst.msk [vmem:[#allocation3 + $0xd9] sm:$0xff] %vm531, %v2823
      %2896 = vst.msk [vmem:[#allocation3 + $0xe1] sm:$0xff] %vm531, %v2824
      %2897 = vst.msk [vmem:[#allocation3 + $0xf1] sm:$0xff] %vm531, %v2825
      %2898 = vst.msk [vmem:[#allocation3 + $0xf9] sm:$0xff] %vm531, %v2826
      %2899 = vst.msk [vmem:[#allocation3 + $0x109] sm:$0xff] %vm531, %v2827
      %2900 = vst.msk [vmem:[#allocation3 + $0x111] sm:$0xff] %vm531, %v2828
      %2901 = vst.msk [vmem:[#allocation3 + $0x121] sm:$0xff] %vm531, %v2829
      %2902 = vst.msk [vmem:[#allocation3 + $0x129] sm:$0xff] %vm531, %v2830
      %2903 = vst.msk [vmem:[#allocation3 + $0x139] sm:$0xff] %vm531, %v2831
      %2904 = vst.msk [vmem:[#allocation3 + $0x141] sm:$0xff] %vm531, %v2832
      %2905 = vst.msk [vmem:[#allocation3 + $0x151] sm:$0xff] %vm531, %v2833
      %2906 = vst.msk [vmem:[#allocation3 + $0x159] sm:$0xff] %vm531, %v2834
      %2907 = vst.msk [vmem:[#allocation3 + $0x169] sm:$0xff] %vm531, %v2835
      %2908 = vst.msk [vmem:[#allocation3 + $0x171] sm:$0xff] %vm531, %v2836
      %2909 = vst.msk [vmem:[#allocation3 + $0x181] sm:$0xff] %vm531, %v2837
      %2910 = vst.msk [vmem:[#allocation3 + $0x189] sm:$0xff] %vm531, %v2838
      %2911 = vst.msk [vmem:[#allocation3 + $0x199] sm:$0xff] %vm531, %v2839
      %2912 = vst.msk [vmem:[#allocation3 + $0x1a1] sm:$0xff] %vm531, %v2840
      // Predicated region
      $region65: #{tpu_custom_call.1} parent=47 // pred_check
        %p2913 = pneg %p564
      $region66: #{tpu_custom_call.1} parent=47 // pred_check_branch
        %2915 = sbr.rel (%p2913) target = $region68
      $region67: #{tpu_custom_call.1} parent=47 // pred_region
        %2916 = vst.msk [vmem:[#allocation3] sm:$0xff] %vm531, 0.0
        %2917 = vst.msk [vmem:[#allocation3 + $0x8] sm:$0xff] %vm531, 0.0
        %vm2918 = vcmask 25600
        %2919 = vst.msk [vmem:[#allocation3 + $0x10] sm:$0x3] %vm2918, 0.0
        %s2920 = scalar_lea.vmem [#allocation3], 408
        %2921 = vst.msk [vmem:[%s2920] sm:$0xff] %vm531, 0.0
        %2922 = vst.msk [vmem:[%s2920 + $0x8] sm:$0xff] %vm531, 0.0
        %2923 = vst.msk [vmem:[%s2920 + $0x10] sm:$0x3] %vm2918, 0.0
      $region68: #{tpu_custom_call.1} parent=47 // pred_fallthru
        _
      %v2924 = vld [vmem:[#allocation3] sm:$0xff]
      %v2925 = vld [vmem:[#allocation3 + $0x8] sm:$0xff]
      %v2926 = vld [vmem:[#allocation3 + $0x18] sm:$0xff]
      %v2927 = vld [vmem:[#allocation3 + $0x20] sm:$0xff]
      %v2928 = vld [vmem:[#allocation3 + $0x30] sm:$0xff]
      %v2929 = vld [vmem:[#allocation3 + $0x38] sm:$0xff]
      %v2930 = vld [vmem:[#allocation3 + $0x48] sm:$0xff]
      %v2931 = vld [vmem:[#allocation3 + $0x50] sm:$0xff]
      %v2932 = vld [vmem:[#allocation3 + $0x60] sm:$0xff]
      %v2933 = vld [vmem:[#allocation3 + $0x68] sm:$0xff]
      %v2934 = vld [vmem:[#allocation3 + $0x78] sm:$0xff]
      %v2935 = vld [vmem:[#allocation3 + $0x80] sm:$0xff]
      %v2936 = vld [vmem:[#allocation3 + $0x90] sm:$0xff]
      %v2937 = vld [vmem:[#allocation3 + $0x98] sm:$0xff]
      %v2938 = vld [vmem:[#allocation3 + $0xa8] sm:$0xff]
      %v2939 = vld [vmem:[#allocation3 + $0xb0] sm:$0xff]
      %v2940 = vld [vmem:[#allocation3 + $0xc0] sm:$0xff]
      %v2941 = vld [vmem:[#allocation3 + $0xc8] sm:$0xff]
      %v2942 = vld [vmem:[#allocation3 + $0xd8] sm:$0xff]
      %v2943 = vld [vmem:[#allocation3 + $0xe0] sm:$0xff]
      %v2944 = vld [vmem:[#allocation3 + $0xf0] sm:$0xff]
      %v2945 = vld [vmem:[#allocation3 + $0xf8] sm:$0xff]
      %v2946 = vld [vmem:[#allocation3 + $0x108] sm:$0xff]
      %v2947 = vld [vmem:[#allocation3 + $0x110] sm:$0xff]
      %v2948 = vld [vmem:[#allocation3 + $0x120] sm:$0xff]
      %v2949 = vld [vmem:[#allocation3 + $0x128] sm:$0xff]
      %v2950 = vld [vmem:[#allocation3 + $0x138] sm:$0xff]
      %v2951 = vld [vmem:[#allocation3 + $0x140] sm:$0xff]
      %v2952 = vld [vmem:[#allocation3 + $0x150] sm:$0xff]
      %v2953 = vld [vmem:[#allocation3 + $0x158] sm:$0xff]
      %v2954 = vld [vmem:[#allocation3 + $0x168] sm:$0xff]
      %v2955 = vld [vmem:[#allocation3 + $0x170] sm:$0xff]
      %v2956 = vld [vmem:[#allocation3 + $0x1] sm:$0xff]
      %v2957 = vld [vmem:[#allocation3 + $0x9] sm:$0xff]
      %v2958 = vld [vmem:[#allocation3 + $0x19] sm:$0xff]
      %v2959 = vld [vmem:[#allocation3 + $0x21] sm:$0xff]
      %v2960 = vld [vmem:[#allocation3 + $0x31] sm:$0xff]
      %v2961 = vld [vmem:[#allocation3 + $0x39] sm:$0xff]
      %v2962 = vld [vmem:[#allocation3 + $0x49] sm:$0xff]
      %v2963 = vld [vmem:[#allocation3 + $0x51] sm:$0xff]
      %v2964 = vld [vmem:[#allocation3 + $0x61] sm:$0xff]
      %v2965 = vld [vmem:[#allocation3 + $0x69] sm:$0xff]
      %v2966 = vld [vmem:[#allocation3 + $0x79] sm:$0xff]
      %v2967 = vld [vmem:[#allocation3 + $0x81] sm:$0xff]
      %v2968 = vld [vmem:[#allocation3 + $0x91] sm:$0xff]
      %v2969 = vld [vmem:[#allocation3 + $0x99] sm:$0xff]
      %v2970 = vld [vmem:[#allocation3 + $0xa9] sm:$0xff]
      %v2971 = vld [vmem:[#allocation3 + $0xb1] sm:$0xff]
      %v2972 = vld [vmem:[#allocation3 + $0xc1] sm:$0xff]
      %v2973 = vld [vmem:[#allocation3 + $0xc9] sm:$0xff]
      %v2974 = vld [vmem:[#allocation3 + $0xd9] sm:$0xff]
      %v2975 = vld [vmem:[#allocation3 + $0xe1] sm:$0xff]
      %v2976 = vld [vmem:[#allocation3 + $0xf1] sm:$0xff]
      %v2977 = vld [vmem:[#allocation3 + $0xf9] sm:$0xff]
      %v2978 = vld [vmem:[#allocation3 + $0x109] sm:$0xff]
      %v2979 = vld [vmem:[#allocation3 + $0x111] sm:$0xff]
      %v2980 = vld [vmem:[#allocation3 + $0x121] sm:$0xff]
      %v2981 = vld [vmem:[#allocation3 + $0x129] sm:$0xff]
      %v2982 = vld [vmem:[#allocation3 + $0x139] sm:$0xff]
      %v2983 = vld [vmem:[#allocation3 + $0x141] sm:$0xff]
      %v2984 = vld [vmem:[#allocation3 + $0x151] sm:$0xff]
      %v2985 = vld [vmem:[#allocation3 + $0x159] sm:$0xff]
      %v2986 = vld [vmem:[#allocation3 + $0x169] sm:$0xff]
      %v2987 = vld [vmem:[#allocation3 + $0x171] sm:$0xff]
      %v2988 = vld [vmem:[#allocation3 + $0x2] sm:$0xff]
      %v2989 = vld [vmem:[#allocation3 + $0xa] sm:$0xff]
      %v2990 = vld [vmem:[#allocation3 + $0x1a] sm:$0xff]
      %v2991 = vld [vmem:[#allocation3 + $0x22] sm:$0xff]
      %v2992 = vld [vmem:[#allocation3 + $0x32] sm:$0xff]
      %v2993 = vld [vmem:[#allocation3 + $0x3a] sm:$0xff]
      %v2994 = vld [vmem:[#allocation3 + $0x4a] sm:$0xff]
      %v2995 = vld [vmem:[#allocation3 + $0x52] sm:$0xff]
      %v2996 = vld [vmem:[#allocation3 + $0x62] sm:$0xff]
      %v2997 = vld [vmem:[#allocation3 + $0x6a] sm:$0xff]
      %v2998 = vld [vmem:[#allocation3 + $0x7a] sm:$0xff]
      %v2999 = vld [vmem:[#allocation3 + $0x82] sm:$0xff]
      %v3000 = vld [vmem:[#allocation3 + $0x92] sm:$0xff]
      %v3001 = vld [vmem:[#allocation3 + $0x9a] sm:$0xff]
      %v3002 = vld [vmem:[#allocation3 + $0xaa] sm:$0xff]
      %v3003 = vld [vmem:[#allocation3 + $0xb2] sm:$0xff]
      %v3004 = vld [vmem:[#allocation3 + $0xc2] sm:$0xff]
      %v3005 = vld [vmem:[#allocation3 + $0xca] sm:$0xff]
      %v3006 = vld [vmem:[#allocation3 + $0xda] sm:$0xff]
      %v3007 = vld [vmem:[#allocation3 + $0xe2] sm:$0xff]
      %v3008 = vld [vmem:[#allocation3 + $0xf2] sm:$0xff]
      %v3009 = vld [vmem:[#allocation3 + $0xfa] sm:$0xff]
      %v3010 = vld [vmem:[#allocation3 + $0x10a] sm:$0xff]
      %v3011 = vld [vmem:[#allocation3 + $0x112] sm:$0xff]
      %v3012 = vld [vmem:[#allocation3 + $0x122] sm:$0xff]
      %v3013 = vld [vmem:[#allocation3 + $0x12a] sm:$0xff]
      %v3014 = vld [vmem:[#allocation3 + $0x13a] sm:$0xff]
      %v3015 = vld [vmem:[#allocation3 + $0x142] sm:$0xff]
      %v3016 = vld [vmem:[#allocation3 + $0x152] sm:$0xff]
      %v3017 = vld [vmem:[#allocation3 + $0x15a] sm:$0xff]
      %v3018 = vld [vmem:[#allocation3 + $0x16a] sm:$0xff]
      %v3019 = vld [vmem:[#allocation3 + $0x172] sm:$0xff]
      %3052 = vrot.lane.b32.xlu0 %v2956, 4
      %v3053 = vpop.permute.xlu0 %3052
      %3054 = vrot.lane.b32.xlu0 %v2957, 4
      %v3055 = vpop.permute.xlu0 %3054
      %3056 = vrot.lane.b32.xlu0 %v2958, 4
      %v3057 = vpop.permute.xlu0 %3056
      %3058 = vrot.lane.b32.xlu0 %v2959, 4
      %v3059 = vpop.permute.xlu0 %3058
      %3060 = vrot.lane.b32.xlu0 %v2960, 4
      %v3061 = vpop.permute.xlu0 %3060
      %3062 = vrot.lane.b32.xlu0 %v2961, 4
      %v3063 = vpop.permute.xlu0 %3062
      %3064 = vrot.lane.b32.xlu0 %v2962, 4
      %v3065 = vpop.permute.xlu0 %3064
      %3066 = vrot.lane.b32.xlu0 %v2963, 4
      %v3067 = vpop.permute.xlu0 %3066
      %3068 = vrot.lane.b32.xlu0 %v2964, 4
      %v3069 = vpop.permute.xlu0 %3068
      %3070 = vrot.lane.b32.xlu0 %v2965, 4
      %v3071 = vpop.permute.xlu0 %3070
      %3072 = vrot.lane.b32.xlu0 %v2966, 4
      %v3073 = vpop.permute.xlu0 %3072
      %3074 = vrot.lane.b32.xlu0 %v2967, 4
      %v3075 = vpop.permute.xlu0 %3074
      %3076 = vrot.lane.b32.xlu0 %v2968, 4
      %v3077 = vpop.permute.xlu0 %3076
      %3078 = vrot.lane.b32.xlu0 %v2969, 4
      %v3079 = vpop.permute.xlu0 %3078
      %3080 = vrot.lane.b32.xlu0 %v2970, 4
      %v3081 = vpop.permute.xlu0 %3080
      %3082 = vrot.lane.b32.xlu0 %v2971, 4
      %v3083 = vpop.permute.xlu0 %3082
      %3084 = vrot.lane.b32.xlu0 %v2972, 4
      %v3085 = vpop.permute.xlu0 %3084
      %3086 = vrot.lane.b32.xlu0 %v2973, 4
      %v3087 = vpop.permute.xlu0 %3086
      %3088 = vrot.lane.b32.xlu0 %v2974, 4
      %v3089 = vpop.permute.xlu0 %3088
      %3090 = vrot.lane.b32.xlu0 %v2975, 4
      %v3091 = vpop.permute.xlu0 %3090
      %3092 = vrot.lane.b32.xlu0 %v2976, 4
      %v3093 = vpop.permute.xlu0 %3092
      %3094 = vrot.lane.b32.xlu0 %v2977, 4
      %v3095 = vpop.permute.xlu0 %3094
      %3096 = vrot.lane.b32.xlu0 %v2978, 4
      %v3097 = vpop.permute.xlu0 %3096
      %3098 = vrot.lane.b32.xlu0 %v2979, 4
      %v3099 = vpop.permute.xlu0 %3098
      %3100 = vrot.lane.b32.xlu0 %v2980, 4
      %v3101 = vpop.permute.xlu0 %3100
      %3102 = vrot.lane.b32.xlu0 %v2981, 4
      %v3103 = vpop.permute.xlu0 %3102
      %3104 = vrot.lane.b32.xlu0 %v2982, 4
      %v3105 = vpop.permute.xlu0 %3104
      %3106 = vrot.lane.b32.xlu0 %v2983, 4
      %v3107 = vpop.permute.xlu0 %3106
      %3108 = vrot.lane.b32.xlu0 %v2984, 4
      %v3109 = vpop.permute.xlu0 %3108
      %3110 = vrot.lane.b32.xlu0 %v2985, 4
      %v3111 = vpop.permute.xlu0 %3110
      %3112 = vrot.lane.b32.xlu0 %v2986, 4
      %v3113 = vpop.permute.xlu0 %3112
      %3114 = vrot.lane.b32.xlu0 %v2987, 4
      %v3115 = vpop.permute.xlu0 %3114
      %3180 = vrot.lane.b32.xlu0 %v2988, 8
      %v3181 = vpop.permute.xlu0 %3180
      %3182 = vrot.lane.b32.xlu0 %v2989, 8
      %v3183 = vpop.permute.xlu0 %3182
      %3184 = vrot.lane.b32.xlu0 %v2990, 8
      %v3185 = vpop.permute.xlu0 %3184
      %3186 = vrot.lane.b32.xlu0 %v2991, 8
      %v3187 = vpop.permute.xlu0 %3186
      %3188 = vrot.lane.b32.xlu0 %v2992, 8
      %v3189 = vpop.permute.xlu0 %3188
      %3190 = vrot.lane.b32.xlu0 %v2993, 8
      %v3191 = vpop.permute.xlu0 %3190
      %3192 = vrot.lane.b32.xlu0 %v2994, 8
      %v3193 = vpop.permute.xlu0 %3192
      %3194 = vrot.lane.b32.xlu0 %v2995, 8
      %v3195 = vpop.permute.xlu0 %3194
      %3196 = vrot.lane.b32.xlu0 %v2996, 8
      %v3197 = vpop.permute.xlu0 %3196
      %3198 = vrot.lane.b32.xlu0 %v2997, 8
      %v3199 = vpop.permute.xlu0 %3198
      %3200 = vrot.lane.b32.xlu0 %v2998, 8
      %v3201 = vpop.permute.xlu0 %3200
      %3202 = vrot.lane.b32.xlu0 %v2999, 8
      %v3203 = vpop.permute.xlu0 %3202
      %3204 = vrot.lane.b32.xlu0 %v3000, 8
      %v3205 = vpop.permute.xlu0 %3204
      %3206 = vrot.lane.b32.xlu0 %v3001, 8
      %v3207 = vpop.permute.xlu0 %3206
      %3208 = vrot.lane.b32.xlu0 %v3002, 8
      %v3209 = vpop.permute.xlu0 %3208
      %3210 = vrot.lane.b32.xlu0 %v3003, 8
      %v3211 = vpop.permute.xlu0 %3210
      %3212 = vrot.lane.b32.xlu0 %v3004, 8
      %v3213 = vpop.permute.xlu0 %3212
      %3214 = vrot.lane.b32.xlu0 %v3005, 8
      %v3215 = vpop.permute.xlu0 %3214
      %3216 = vrot.lane.b32.xlu0 %v3006, 8
      %v3217 = vpop.permute.xlu0 %3216
      %3218 = vrot.lane.b32.xlu0 %v3007, 8
      %v3219 = vpop.permute.xlu0 %3218
      %3220 = vrot.lane.b32.xlu0 %v3008, 8
      %v3221 = vpop.permute.xlu0 %3220
      %3222 = vrot.lane.b32.xlu0 %v3009, 8
      %v3223 = vpop.permute.xlu0 %3222
      %3224 = vrot.lane.b32.xlu0 %v3010, 8
      %v3225 = vpop.permute.xlu0 %3224
      %3226 = vrot.lane.b32.xlu0 %v3011, 8
      %v3227 = vpop.permute.xlu0 %3226
      %3228 = vrot.lane.b32.xlu0 %v3012, 8
      %v3229 = vpop.permute.xlu0 %3228
      %3230 = vrot.lane.b32.xlu0 %v3013, 8
      %v3231 = vpop.permute.xlu0 %3230
      %3232 = vrot.lane.b32.xlu0 %v3014, 8
      %v3233 = vpop.permute.xlu0 %3232
      %3234 = vrot.lane.b32.xlu0 %v3015, 8
      %v3235 = vpop.permute.xlu0 %3234
      %3236 = vrot.lane.b32.xlu0 %v3016, 8
      %v3237 = vpop.permute.xlu0 %3236
      %3238 = vrot.lane.b32.xlu0 %v3017, 8
      %v3239 = vpop.permute.xlu0 %3238
      %3240 = vrot.lane.b32.xlu0 %v3018, 8
      %v3241 = vpop.permute.xlu0 %3240
      %3242 = vrot.lane.b32.xlu0 %v3019, 8
      %v3243 = vpop.permute.xlu0 %3242
      %v3276 = vsel %vm531, %v2924, %v3053
      %v3277 = vsel %vm531, %v2925, %v3055
      %v3278 = vsel %vm531, %v2926, %v3057
      %v3279 = vsel %vm531, %v2927, %v3059
      %v3280 = vsel %vm531, %v2928, %v3061
      %v3281 = vsel %vm531, %v2929, %v3063
      %v3282 = vsel %vm531, %v2930, %v3065
      %v3283 = vsel %vm531, %v2931, %v3067
      %v3284 = vsel %vm531, %v2932, %v3069
      %v3285 = vsel %vm531, %v2933, %v3071
      %v3286 = vsel %vm531, %v2934, %v3073
      %v3287 = vsel %vm531, %v2935, %v3075
      %v3288 = vsel %vm531, %v2936, %v3077
      %v3289 = vsel %vm531, %v2937, %v3079
      %v3290 = vsel %vm531, %v2938, %v3081
      %v3291 = vsel %vm531, %v2939, %v3083
      %v3292 = vsel %vm531, %v2940, %v3085
      %v3293 = vsel %vm531, %v2941, %v3087
      %v3294 = vsel %vm531, %v2942, %v3089
      %v3295 = vsel %vm531, %v2943, %v3091
      %v3296 = vsel %vm531, %v2944, %v3093
      %v3297 = vsel %vm531, %v2945, %v3095
      %v3298 = vsel %vm531, %v2946, %v3097
      %v3299 = vsel %vm531, %v2947, %v3099
      %v3300 = vsel %vm531, %v2948, %v3101
      %v3301 = vsel %vm531, %v2949, %v3103
      %v3302 = vsel %vm531, %v2950, %v3105
      %v3303 = vsel %vm531, %v2951, %v3107
      %v3304 = vsel %vm531, %v2952, %v3109
      %v3305 = vsel %vm531, %v2953, %v3111
      %v3306 = vsel %vm531, %v2954, %v3113
      %v3307 = vsel %vm531, %v2955, %v3115
      %v3308 = vsel %vm1037, %v3276, %v3181
      %v3309 = vsel %vm1037, %v3277, %v3183
      %v3310 = vsel %vm1037, %v3278, %v3185
      %v3311 = vsel %vm1037, %v3279, %v3187
      %v3312 = vsel %vm1037, %v3280, %v3189
      %v3313 = vsel %vm1037, %v3281, %v3191
      %v3314 = vsel %vm1037, %v3282, %v3193
      %v3315 = vsel %vm1037, %v3283, %v3195
      %v3316 = vsel %vm1037, %v3284, %v3197
      %v3317 = vsel %vm1037, %v3285, %v3199
      %v3318 = vsel %vm1037, %v3286, %v3201
      %v3319 = vsel %vm1037, %v3287, %v3203
      %v3320 = vsel %vm1037, %v3288, %v3205
      %v3321 = vsel %vm1037, %v3289, %v3207
      %v3322 = vsel %vm1037, %v3290, %v3209
      %v3323 = vsel %vm1037, %v3291, %v3211
      %v3324 = vsel %vm1037, %v3292, %v3213
      %v3325 = vsel %vm1037, %v3293, %v3215
      %v3326 = vsel %vm1037, %v3294, %v3217
      %v3327 = vsel %vm1037, %v3295, %v3219
      %v3328 = vsel %vm1037, %v3296, %v3221
      %v3329 = vsel %vm1037, %v3297, %v3223
      %v3330 = vsel %vm1037, %v3298, %v3225
      %v3331 = vsel %vm1037, %v3299, %v3227
      %v3332 = vsel %vm1037, %v3300, %v3229
      %v3333 = vsel %vm1037, %v3301, %v3231
      %v3334 = vsel %vm1037, %v3302, %v3233
      %v3335 = vsel %vm1037, %v3303, %v3235
      %v3336 = vsel %vm1037, %v3304, %v3237
      %v3337 = vsel %vm1037, %v3305, %v3239
      %v3338 = vsel %vm1037, %v3306, %v3241
      %v3339 = vsel %vm1037, %v3307, %v3243
      %v3340 = vld [vmem:[%s5] sm:$0xff]
      %v3341 = vld [vmem:[%s5 + $0x8] sm:$0xf]
      %s3342 = scalar_lea.vmem [#allocation3], 24
      %v3343 = vld [vmem:[%s3342] sm:$0xff]
      %v3344 = vld [vmem:[%s3342 + $0x8] sm:$0xff]
      %v3345 = vld [vmem:[%s3342 + $0x18] sm:$0xff]
      %v3346 = vld [vmem:[%s3342 + $0x20] sm:$0xff]
      %v3347 = vld [vmem:[%s3342 + $0x30] sm:$0xff]
      %v3348 = vld [vmem:[%s3342 + $0x38] sm:$0xff]
      %v3349 = vld [vmem:[%s3342 + $0x48] sm:$0xff]
      %v3350 = vld [vmem:[%s3342 + $0x50] sm:$0xff]
      %v3351 = vld [vmem:[%s3342 + $0x60] sm:$0xff]
      %v3352 = vld [vmem:[%s3342 + $0x68] sm:$0xff]
      %v3353 = vld [vmem:[%s3342 + $0x78] sm:$0xff]
      %v3354 = vld [vmem:[%s3342 + $0x80] sm:$0xff]
      %v3355 = vld [vmem:[%s3342 + $0x90] sm:$0xff]
      %v3356 = vld [vmem:[%s3342 + $0x98] sm:$0xff]
      %v3357 = vld [vmem:[%s3342 + $0xa8] sm:$0xff]
      %v3358 = vld [vmem:[%s3342 + $0xb0] sm:$0xff]
      %v3359 = vld [vmem:[%s3342 + $0xc0] sm:$0xff]
      %v3360 = vld [vmem:[%s3342 + $0xc8] sm:$0xff]
      %v3361 = vld [vmem:[%s3342 + $0xd8] sm:$0xff]
      %v3362 = vld [vmem:[%s3342 + $0xe0] sm:$0xff]
      %v3363 = vld [vmem:[%s3342 + $0xf0] sm:$0xff]
      %v3364 = vld [vmem:[%s3342 + $0xf8] sm:$0xff]
      %v3365 = vld [vmem:[%s3342 + $0x108] sm:$0xff]
      %v3366 = vld [vmem:[%s3342 + $0x110] sm:$0xff]
      %v3367 = vld [vmem:[%s3342 + $0x120] sm:$0xff]
      %v3368 = vld [vmem:[%s3342 + $0x128] sm:$0xff]
      %v3369 = vld [vmem:[%s3342 + $0x138] sm:$0xff]
      %v3370 = vld [vmem:[%s3342 + $0x140] sm:$0xff]
      %v3371 = vld [vmem:[%s3342 + $0x150] sm:$0xff]
      %v3372 = vld [vmem:[%s3342 + $0x158] sm:$0xff]
      %v3373 = vld [vmem:[%s3342 + $0x168] sm:$0xff]
      %v3374 = vld [vmem:[%s3342 + $0x170] sm:$0xff]
      %v3375 = vld [vmem:[%s3342 + $0x1] sm:$0xff]
      %v3376 = vld [vmem:[%s3342 + $0x9] sm:$0xff]
      %v3377 = vld [vmem:[%s3342 + $0x19] sm:$0xff]
      %v3378 = vld [vmem:[%s3342 + $0x21] sm:$0xff]
      %v3379 = vld [vmem:[%s3342 + $0x31] sm:$0xff]
      %v3380 = vld [vmem:[%s3342 + $0x39] sm:$0xff]
      %v3381 = vld [vmem:[%s3342 + $0x49] sm:$0xff]
      %v3382 = vld [vmem:[%s3342 + $0x51] sm:$0xff]
      %v3383 = vld [vmem:[%s3342 + $0x61] sm:$0xff]
      %v3384 = vld [vmem:[%s3342 + $0x69] sm:$0xff]
      %v3385 = vld [vmem:[%s3342 + $0x79] sm:$0xff]
      %v3386 = vld [vmem:[%s3342 + $0x81] sm:$0xff]
      %v3387 = vld [vmem:[%s3342 + $0x91] sm:$0xff]
      %v3388 = vld [vmem:[%s3342 + $0x99] sm:$0xff]
      %v3389 = vld [vmem:[%s3342 + $0xa9] sm:$0xff]
      %v3390 = vld [vmem:[%s3342 + $0xb1] sm:$0xff]
      %v3391 = vld [vmem:[%s3342 + $0xc1] sm:$0xff]
      %v3392 = vld [vmem:[%s3342 + $0xc9] sm:$0xff]
      %v3393 = vld [vmem:[%s3342 + $0xd9] sm:$0xff]
      %v3394 = vld [vmem:[%s3342 + $0xe1] sm:$0xff]
      %v3395 = vld [vmem:[%s3342 + $0xf1] sm:$0xff]
      %v3396 = vld [vmem:[%s3342 + $0xf9] sm:$0xff]
      %v3397 = vld [vmem:[%s3342 + $0x109] sm:$0xff]
      %v3398 = vld [vmem:[%s3342 + $0x111] sm:$0xff]
      %v3399 = vld [vmem:[%s3342 + $0x121] sm:$0xff]
      %v3400 = vld [vmem:[%s3342 + $0x129] sm:$0xff]
      %v3401 = vld [vmem:[%s3342 + $0x139] sm:$0xff]
      %v3402 = vld [vmem:[%s3342 + $0x141] sm:$0xff]
      %v3403 = vld [vmem:[%s3342 + $0x151] sm:$0xff]
      %v3404 = vld [vmem:[%s3342 + $0x159] sm:$0xff]
      %v3405 = vld [vmem:[%s3342 + $0x169] sm:$0xff]
      %v3406 = vld [vmem:[%s3342 + $0x171] sm:$0xff]
      %v3407 = vld [vmem:[%s3342 + $0x2] sm:$0xff]
      %v3408 = vld [vmem:[%s3342 + $0xa] sm:$0xff]
      %v3409 = vld [vmem:[%s3342 + $0x1a] sm:$0xff]
      %v3410 = vld [vmem:[%s3342 + $0x22] sm:$0xff]
      %v3411 = vld [vmem:[%s3342 + $0x32] sm:$0xff]
      %v3412 = vld [vmem:[%s3342 + $0x3a] sm:$0xff]
      %v3413 = vld [vmem:[%s3342 + $0x4a] sm:$0xff]
      %v3414 = vld [vmem:[%s3342 + $0x52] sm:$0xff]
      %v3415 = vld [vmem:[%s3342 + $0x62] sm:$0xff]
      %v3416 = vld [vmem:[%s3342 + $0x6a] sm:$0xff]
      %v3417 = vld [vmem:[%s3342 + $0x7a] sm:$0xff]
      %v3418 = vld [vmem:[%s3342 + $0x82] sm:$0xff]
      %v3419 = vld [vmem:[%s3342 + $0x92] sm:$0xff]
      %v3420 = vld [vmem:[%s3342 + $0x9a] sm:$0xff]
      %v3421 = vld [vmem:[%s3342 + $0xaa] sm:$0xff]
      %v3422 = vld [vmem:[%s3342 + $0xb2] sm:$0xff]
      %v3423 = vld [vmem:[%s3342 + $0xc2] sm:$0xff]
      %v3424 = vld [vmem:[%s3342 + $0xca] sm:$0xff]
      %v3425 = vld [vmem:[%s3342 + $0xda] sm:$0xff]
      %v3426 = vld [vmem:[%s3342 + $0xe2] sm:$0xff]
      %v3427 = vld [vmem:[%s3342 + $0xf2] sm:$0xff]
      %v3428 = vld [vmem:[%s3342 + $0xfa] sm:$0xff]
      %v3429 = vld [vmem:[%s3342 + $0x10a] sm:$0xff]
      %v3430 = vld [vmem:[%s3342 + $0x112] sm:$0xff]
      %v3431 = vld [vmem:[%s3342 + $0x122] sm:$0xff]
      %v3432 = vld [vmem:[%s3342 + $0x12a] sm:$0xff]
      %v3433 = vld [vmem:[%s3342 + $0x13a] sm:$0xff]
      %v3434 = vld [vmem:[%s3342 + $0x142] sm:$0xff]
      %v3435 = vld [vmem:[%s3342 + $0x152] sm:$0xff]
      %v3436 = vld [vmem:[%s3342 + $0x15a] sm:$0xff]
      %v3437 = vld [vmem:[%s3342 + $0x16a] sm:$0xff]
      %v3438 = vld [vmem:[%s3342 + $0x172] sm:$0xff]
      %3471 = vrot.lane.b32.xlu0 %v3375, 4
      %v3472 = vpop.permute.xlu0 %3471
      %3473 = vrot.lane.b32.xlu0 %v3376, 4
      %v3474 = vpop.permute.xlu0 %3473
      %3475 = vrot.lane.b32.xlu0 %v3377, 4
      %v3476 = vpop.permute.xlu0 %3475
      %3477 = vrot.lane.b32.xlu0 %v3378, 4
      %v3478 = vpop.permute.xlu0 %3477
      %3479 = vrot.lane.b32.xlu0 %v3379, 4
      %v3480 = vpop.permute.xlu0 %3479
      %3481 = vrot.lane.b32.xlu0 %v3380, 4
      %v3482 = vpop.permute.xlu0 %3481
      %3483 = vrot.lane.b32.xlu0 %v3381, 4
      %v3484 = vpop.permute.xlu0 %3483
      %3485 = vrot.lane.b32.xlu0 %v3382, 4
      %v3486 = vpop.permute.xlu0 %3485
      %3487 = vrot.lane.b32.xlu0 %v3383, 4
      %v3488 = vpop.permute.xlu0 %3487
      %3489 = vrot.lane.b32.xlu0 %v3384, 4
      %v3490 = vpop.permute.xlu0 %3489
      %3491 = vrot.lane.b32.xlu0 %v3385, 4
      %v3492 = vpop.permute.xlu0 %3491
      %3493 = vrot.lane.b32.xlu0 %v3386, 4
      %v3494 = vpop.permute.xlu0 %3493
      %3495 = vrot.lane.b32.xlu0 %v3387, 4
      %v3496 = vpop.permute.xlu0 %3495
      %3497 = vrot.lane.b32.xlu0 %v3388, 4
      %v3498 = vpop.permute.xlu0 %3497
      %3499 = vrot.lane.b32.xlu0 %v3389, 4
      %v3500 = vpop.permute.xlu0 %3499
      %3501 = vrot.lane.b32.xlu0 %v3390, 4
      %v3502 = vpop.permute.xlu0 %3501
      %3503 = vrot.lane.b32.xlu0 %v3391, 4
      %v3504 = vpop.permute.xlu0 %3503
      %3505 = vrot.lane.b32.xlu0 %v3392, 4
      %v3506 = vpop.permute.xlu0 %3505
      %3507 = vrot.lane.b32.xlu0 %v3393, 4
      %v3508 = vpop.permute.xlu0 %3507
      %3509 = vrot.lane.b32.xlu0 %v3394, 4
      %v3510 = vpop.permute.xlu0 %3509
      %3511 = vrot.lane.b32.xlu0 %v3395, 4
      %v3512 = vpop.permute.xlu0 %3511
      %3513 = vrot.lane.b32.xlu0 %v3396, 4
      %v3514 = vpop.permute.xlu0 %3513
      %3515 = vrot.lane.b32.xlu0 %v3397, 4
      %v3516 = vpop.permute.xlu0 %3515
      %3517 = vrot.lane.b32.xlu0 %v3398, 4
      %v3518 = vpop.permute.xlu0 %3517
      %3519 = vrot.lane.b32.xlu0 %v3399, 4
      %v3520 = vpop.permute.xlu0 %3519
      %3521 = vrot.lane.b32.xlu0 %v3400, 4
      %v3522 = vpop.permute.xlu0 %3521
      %3523 = vrot.lane.b32.xlu0 %v3401, 4
      %v3524 = vpop.permute.xlu0 %3523
      %3525 = vrot.lane.b32.xlu0 %v3402, 4
      %v3526 = vpop.permute.xlu0 %3525
      %3527 = vrot.lane.b32.xlu0 %v3403, 4
      %v3528 = vpop.permute.xlu0 %3527
      %3529 = vrot.lane.b32.xlu0 %v3404, 4
      %v3530 = vpop.permute.xlu0 %3529
      %3531 = vrot.lane.b32.xlu0 %v3405, 4
      %v3532 = vpop.permute.xlu0 %3531
      %3533 = vrot.lane.b32.xlu0 %v3406, 4
      %v3534 = vpop.permute.xlu0 %3533
      %3599 = vrot.lane.b32.xlu0 %v3407, 8
      %v3600 = vpop.permute.xlu0 %3599
      %3601 = vrot.lane.b32.xlu0 %v3408, 8
      %v3602 = vpop.permute.xlu0 %3601
      %3603 = vrot.lane.b32.xlu0 %v3409, 8
      %v3604 = vpop.permute.xlu0 %3603
      %3605 = vrot.lane.b32.xlu0 %v3410, 8
      %v3606 = vpop.permute.xlu0 %3605
      %3607 = vrot.lane.b32.xlu0 %v3411, 8
      %v3608 = vpop.permute.xlu0 %3607
      %3609 = vrot.lane.b32.xlu0 %v3412, 8
      %v3610 = vpop.permute.xlu0 %3609
      %3611 = vrot.lane.b32.xlu0 %v3413, 8
      %v3612 = vpop.permute.xlu0 %3611
      %3613 = vrot.lane.b32.xlu0 %v3414, 8
      %v3614 = vpop.permute.xlu0 %3613
      %3615 = vrot.lane.b32.xlu0 %v3415, 8
      %v3616 = vpop.permute.xlu0 %3615
      %3617 = vrot.lane.b32.xlu0 %v3416, 8
      %v3618 = vpop.permute.xlu0 %3617
      %3619 = vrot.lane.b32.xlu0 %v3417, 8
      %v3620 = vpop.permute.xlu0 %3619
      %3621 = vrot.lane.b32.xlu0 %v3418, 8
      %v3622 = vpop.permute.xlu0 %3621
      %3623 = vrot.lane.b32.xlu0 %v3419, 8
      %v3624 = vpop.permute.xlu0 %3623
      %3625 = vrot.lane.b32.xlu0 %v3420, 8
      %v3626 = vpop.permute.xlu0 %3625
      %3627 = vrot.lane.b32.xlu0 %v3421, 8
      %v3628 = vpop.permute.xlu0 %3627
      %3629 = vrot.lane.b32.xlu0 %v3422, 8
      %v3630 = vpop.permute.xlu0 %3629
      %3631 = vrot.lane.b32.xlu0 %v3423, 8
      %v3632 = vpop.permute.xlu0 %3631
      %3633 = vrot.lane.b32.xlu0 %v3424, 8
      %v3634 = vpop.permute.xlu0 %3633
      %3635 = vrot.lane.b32.xlu0 %v3425, 8
      %v3636 = vpop.permute.xlu0 %3635
      %3637 = vrot.lane.b32.xlu0 %v3426, 8
      %v3638 = vpop.permute.xlu0 %3637
      %3639 = vrot.lane.b32.xlu0 %v3427, 8
      %v3640 = vpop.permute.xlu0 %3639
      %3641 = vrot.lane.b32.xlu0 %v3428, 8
      %v3642 = vpop.permute.xlu0 %3641
      %3643 = vrot.lane.b32.xlu0 %v3429, 8
      %v3644 = vpop.permute.xlu0 %3643
      %3645 = vrot.lane.b32.xlu0 %v3430, 8
      %v3646 = vpop.permute.xlu0 %3645
      %3647 = vrot.lane.b32.xlu0 %v3431, 8
      %v3648 = vpop.permute.xlu0 %3647
      %3649 = vrot.lane.b32.xlu0 %v3432, 8
      %v3650 = vpop.permute.xlu0 %3649
      %3651 = vrot.lane.b32.xlu0 %v3433, 8
      %v3652 = vpop.permute.xlu0 %3651
      %3653 = vrot.lane.b32.xlu0 %v3434, 8
      %v3654 = vpop.permute.xlu0 %3653
      %3655 = vrot.lane.b32.xlu0 %v3435, 8
      %v3656 = vpop.permute.xlu0 %3655
      %3657 = vrot.lane.b32.xlu0 %v3436, 8
      %v3658 = vpop.permute.xlu0 %3657
      %3659 = vrot.lane.b32.xlu0 %v3437, 8
      %v3660 = vpop.permute.xlu0 %3659
      %3661 = vrot.lane.b32.xlu0 %v3438, 8
      %v3662 = vpop.permute.xlu0 %3661
      %v3695 = vsel %vm531, %v3343, %v3472
      %v3696 = vsel %vm531, %v3344, %v3474
      %v3697 = vsel %vm531, %v3345, %v3476
      %v3698 = vsel %vm531, %v3346, %v3478
      %v3699 = vsel %vm531, %v3347, %v3480
      %v3700 = vsel %vm531, %v3348, %v3482
      %v3701 = vsel %vm531, %v3349, %v3484
      %v3702 = vsel %vm531, %v3350, %v3486
      %v3703 = vsel %vm531, %v3351, %v3488
      %v3704 = vsel %vm531, %v3352, %v3490
      %v3705 = vsel %vm531, %v3353, %v3492
      %v3706 = vsel %vm531, %v3354, %v3494
      %v3707 = vsel %vm531, %v3355, %v3496
      %v3708 = vsel %vm531, %v3356, %v3498
      %v3709 = vsel %vm531, %v3357, %v3500
      %v3710 = vsel %vm531, %v3358, %v3502
      %v3711 = vsel %vm531, %v3359, %v3504
      %v3712 = vsel %vm531, %v3360, %v3506
      %v3713 = vsel %vm531, %v3361, %v3508
      %v3714 = vsel %vm531, %v3362, %v3510
      %v3715 = vsel %vm531, %v3363, %v3512
      %v3716 = vsel %vm531, %v3364, %v3514
      %v3717 = vsel %vm531, %v3365, %v3516
      %v3718 = vsel %vm531, %v3366, %v3518
      %v3719 = vsel %vm531, %v3367, %v3520
      %v3720 = vsel %vm531, %v3368, %v3522
      %v3721 = vsel %vm531, %v3369, %v3524
      %v3722 = vsel %vm531, %v3370, %v3526
      %v3723 = vsel %vm531, %v3371, %v3528
      %v3724 = vsel %vm531, %v3372, %v3530
      %v3725 = vsel %vm531, %v3373, %v3532
      %v3726 = vsel %vm531, %v3374, %v3534
      %v3727 = vsel %vm1037, %v3695, %v3600
      %v3728 = vsel %vm1037, %v3696, %v3602
      %v3729 = vsel %vm1037, %v3697, %v3604
      %v3730 = vsel %vm1037, %v3698, %v3606
      %v3731 = vsel %vm1037, %v3699, %v3608
      %v3732 = vsel %vm1037, %v3700, %v3610
      %v3733 = vsel %vm1037, %v3701, %v3612
      %v3734 = vsel %vm1037, %v3702, %v3614
      %v3735 = vsel %vm1037, %v3703, %v3616
      %v3736 = vsel %vm1037, %v3704, %v3618
      %v3737 = vsel %vm1037, %v3705, %v3620
      %v3738 = vsel %vm1037, %v3706, %v3622
      %v3739 = vsel %vm1037, %v3707, %v3624
      %v3740 = vsel %vm1037, %v3708, %v3626
      %v3741 = vsel %vm1037, %v3709, %v3628
      %v3742 = vsel %vm1037, %v3710, %v3630
      %v3743 = vsel %vm1037, %v3711, %v3632
      %v3744 = vsel %vm1037, %v3712, %v3634
      %v3745 = vsel %vm1037, %v3713, %v3636
      %v3746 = vsel %vm1037, %v3714, %v3638
      %v3747 = vsel %vm1037, %v3715, %v3640
      %v3748 = vsel %vm1037, %v3716, %v3642
      %v3749 = vsel %vm1037, %v3717, %v3644
      %v3750 = vsel %vm1037, %v3718, %v3646
      %v3751 = vsel %vm1037, %v3719, %v3648
      %v3752 = vsel %vm1037, %v3720, %v3650
      %v3753 = vsel %vm1037, %v3721, %v3652
      %v3754 = vsel %vm1037, %v3722, %v3654
      %v3755 = vsel %vm1037, %v3723, %v3656
      %v3756 = vsel %vm1037, %v3724, %v3658
      %v3757 = vsel %vm1037, %v3725, %v3660
      %v3758 = vsel %vm1037, %v3726, %v3662
      %s3759 = scalar_lea.vmem %s5, 16
      %v3760 = vld [vmem:[%s3759] sm:$0xff]
      %v3761 = vld [vmem:[%s3759 + $0x8] sm:$0xf]
      %v3763 = vsel %vm1548, %v3727, 0
      %v3766 = vsel %vm1548, %v3728, 0
      %v3769 = vsel %vm1548, %v3729, 0
      %v3772 = vsel %vm1548, %v3730, 0
      %v3775 = vsel %vm1548, %v3731, 0
      %v3778 = vsel %vm1548, %v3732, 0
      %v3781 = vsel %vm1548, %v3733, 0
      %v3784 = vsel %vm1548, %v3734, 0
      %v3787 = vsel %vm1548, %v3735, 0
      %v3790 = vsel %vm1548, %v3736, 0
      %v3793 = vsel %vm1548, %v3737, 0
      %v3796 = vsel %vm1548, %v3738, 0
      %v3799 = vsel %vm1548, %v3739, 0
      %v3802 = vsel %vm1548, %v3740, 0
      %v3805 = vsel %vm1548, %v3741, 0
      %v3808 = vsel %vm1548, %v3742, 0
      %v3811 = vsel %vm1548, %v3743, 0
      %v3814 = vsel %vm1548, %v3744, 0
      %v3817 = vsel %vm1548, %v3745, 0
      %v3820 = vsel %vm1548, %v3746, 0
      %v3823 = vsel %vm1548, %v3747, 0
      %v3826 = vsel %vm1548, %v3748, 0
      %v3829 = vsel %vm1548, %v3749, 0
      %v3832 = vsel %vm1548, %v3750, 0
      %v3835 = vsel %vm1548, %v3751, 0
      %v3838 = vsel %vm1548, %v3752, 0
      %v3841 = vsel %vm1548, %v3753, 0
      %v3844 = vsel %vm1548, %v3754, 0
      %v3847 = vsel %vm1548, %v3755, 0
      %v3850 = vsel %vm1548, %v3756, 0
      %v3853 = vsel %vm1548, %v3757, 0
      %v3856 = vsel %vm1548, %v3758, 0
      %v3859 = vsel %vm1657, %v3761, 0
      %3861 = vmatpush.msra.mxu0 0.0
      %3862 = vmatpush.msra.mxu0 0.0
      %3863 = vmatpush.msra.mxu0 0.0
      %3864 = vmatpush.msra.mxu0 0.0
      %3865 = vmatpush.msra.mxu0 0.0
      %3866 = vmatpush.msra.mxu0 0.0
      %3867 = vmatpush.msra.mxu0 0.0
      %3868 = vmatpush.msra.mxu0 0.0
      %3869 = vmatpush.msra.mxu0 0.0
      %3870 = vmatpush.msra.mxu0 0.0
      %3871 = vmatpush.msra.mxu0 0.0
      %3872 = vmatpush.msra.mxu0 0.0
      %3873 = vmatpush.msra.mxu0 0.0
      %3874 = vmatpush.msra.mxu0 0.0
      %3875 = vmatpush.msra.mxu0 %v3859
      %3876 = vmatpush.msra.mxu0 %v3760
      %3877 = vmatmul.f32.gmra.mxu0 %v3763
      %v3878 = vpop.f32.mrf.mxu0
      %v3879 = vadd.f32 0.0, %v3878
      %3880 = vmatmul.f32.gmra.mxu0 %v3766
      %v3881 = vpop.f32.mrf.mxu0
      %v3882 = vadd.f32 0.0, %v3881
      %3883 = vmatmul.f32.gmra.mxu0 %v3769
      %v3884 = vpop.f32.mrf.mxu0
      %v3885 = vadd.f32 0.0, %v3884
      %3886 = vmatmul.f32.gmra.mxu0 %v3772
      %v3887 = vpop.f32.mrf.mxu0
      %v3888 = vadd.f32 0.0, %v3887
      %3889 = vmatmul.f32.gmra.mxu0 %v3775
      %v3890 = vpop.f32.mrf.mxu0
      %v3891 = vadd.f32 0.0, %v3890
      %3892 = vmatmul.f32.gmra.mxu0 %v3778
      %v3893 = vpop.f32.mrf.mxu0
      %v3894 = vadd.f32 0.0, %v3893
      %3895 = vmatmul.f32.gmra.mxu0 %v3781
      %v3896 = vpop.f32.mrf.mxu0
      %v3897 = vadd.f32 0.0, %v3896
      %3898 = vmatmul.f32.gmra.mxu0 %v3784
      %v3899 = vpop.f32.mrf.mxu0
      %v3900 = vadd.f32 0.0, %v3899
      %3901 = vmatmul.f32.gmra.mxu0 %v3787
      %v3902 = vpop.f32.mrf.mxu0
      %v3903 = vadd.f32 0.0, %v3902
      %3904 = vmatmul.f32.gmra.mxu0 %v3790
      %v3905 = vpop.f32.mrf.mxu0
      %v3906 = vadd.f32 0.0, %v3905
      %3907 = vmatmul.f32.gmra.mxu0 %v3793
      %v3908 = vpop.f32.mrf.mxu0
      %v3909 = vadd.f32 0.0, %v3908
      %3910 = vmatmul.f32.gmra.mxu0 %v3796
      %v3911 = vpop.f32.mrf.mxu0
      %v3912 = vadd.f32 0.0, %v3911
      %3913 = vmatmul.f32.gmra.mxu0 %v3799
      %v3914 = vpop.f32.mrf.mxu0
      %v3915 = vadd.f32 0.0, %v3914
      %3916 = vmatmul.f32.gmra.mxu0 %v3802
      %v3917 = vpop.f32.mrf.mxu0
      %v3918 = vadd.f32 0.0, %v3917
      %3919 = vmatmul.f32.gmra.mxu0 %v3805
      %v3920 = vpop.f32.mrf.mxu0
      %v3921 = vadd.f32 0.0, %v3920
      %3922 = vmatmul.f32.gmra.mxu0 %v3808
      %v3923 = vpop.f32.mrf.mxu0
      %v3924 = vadd.f32 0.0, %v3923
      %3925 = vmatmul.f32.gmra.mxu0 %v3811
      %v3926 = vpop.f32.mrf.mxu0
      %v3927 = vadd.f32 0.0, %v3926
      %3928 = vmatmul.f32.gmra.mxu0 %v3814
      %v3929 = vpop.f32.mrf.mxu0
      %v3930 = vadd.f32 0.0, %v3929
      %3931 = vmatmul.f32.gmra.mxu0 %v3817
      %v3932 = vpop.f32.mrf.mxu0
      %v3933 = vadd.f32 0.0, %v3932
      %3934 = vmatmul.f32.gmra.mxu0 %v3820
      %v3935 = vpop.f32.mrf.mxu0
      %v3936 = vadd.f32 0.0, %v3935
      %3937 = vmatmul.f32.gmra.mxu0 %v3823
      %v3938 = vpop.f32.mrf.mxu0
      %v3939 = vadd.f32 0.0, %v3938
      %3940 = vmatmul.f32.gmra.mxu0 %v3826
      %v3941 = vpop.f32.mrf.mxu0
      %v3942 = vadd.f32 0.0, %v3941
      %3943 = vmatmul.f32.gmra.mxu0 %v3829
      %v3944 = vpop.f32.mrf.mxu0
      %v3945 = vadd.f32 0.0, %v3944
      %3946 = vmatmul.f32.gmra.mxu0 %v3832
      %v3947 = vpop.f32.mrf.mxu0
      %v3948 = vadd.f32 0.0, %v3947
      %3949 = vmatmul.f32.gmra.mxu0 %v3835
      %v3950 = vpop.f32.mrf.mxu0
      %v3951 = vadd.f32 0.0, %v3950
      %3952 = vmatmul.f32.gmra.mxu0 %v3838
      %v3953 = vpop.f32.mrf.mxu0
      %v3954 = vadd.f32 0.0, %v3953
      %3955 = vmatmul.f32.gmra.mxu0 %v3841
      %v3956 = vpop.f32.mrf.mxu0
      %v3957 = vadd.f32 0.0, %v3956
      %3958 = vmatmul.f32.gmra.mxu0 %v3844
      %v3959 = vpop.f32.mrf.mxu0
      %v3960 = vadd.f32 0.0, %v3959
      %3961 = vmatmul.f32.gmra.mxu0 %v3847
      %v3962 = vpop.f32.mrf.mxu0
      %v3963 = vadd.f32 0.0, %v3962
      %3964 = vmatmul.f32.gmra.mxu0 %v3850
      %v3965 = vpop.f32.mrf.mxu0
      %v3966 = vadd.f32 0.0, %v3965
      %3967 = vmatmul.f32.gmra.mxu0 %v3853
      %v3968 = vpop.f32.mrf.mxu0
      %v3969 = vadd.f32 0.0, %v3968
      %3970 = vmatmul.f32.gmra.mxu0 %v3856
      %v3971 = vpop.f32.mrf.mxu0
      %v3972 = vadd.f32 0.0, %v3971
      %3973 = vdwg.mxu0
      %v3975 = vsel %vm1548, %v3308, 0
      %v3978 = vsel %vm1548, %v3309, 0
      %v3981 = vsel %vm1548, %v3310, 0
      %v3984 = vsel %vm1548, %v3311, 0
      %v3987 = vsel %vm1548, %v3312, 0
      %v3990 = vsel %vm1548, %v3313, 0
      %v3993 = vsel %vm1548, %v3314, 0
      %v3996 = vsel %vm1548, %v3315, 0
      %v3999 = vsel %vm1548, %v3316, 0
      %v4002 = vsel %vm1548, %v3317, 0
      %v4005 = vsel %vm1548, %v3318, 0
      %v4008 = vsel %vm1548, %v3319, 0
      %v4011 = vsel %vm1548, %v3320, 0
      %v4014 = vsel %vm1548, %v3321, 0
      %v4017 = vsel %vm1548, %v3322, 0
      %v4020 = vsel %vm1548, %v3323, 0
      %v4023 = vsel %vm1548, %v3324, 0
      %v4026 = vsel %vm1548, %v3325, 0
      %v4029 = vsel %vm1548, %v3326, 0
      %v4032 = vsel %vm1548, %v3327, 0
      %v4035 = vsel %vm1548, %v3328, 0
      %v4038 = vsel %vm1548, %v3329, 0
      %v4041 = vsel %vm1548, %v3330, 0
      %v4044 = vsel %vm1548, %v3331, 0
      %v4047 = vsel %vm1548, %v3332, 0
      %v4050 = vsel %vm1548, %v3333, 0
      %v4053 = vsel %vm1548, %v3334, 0
      %v4056 = vsel %vm1548, %v3335, 0
      %v4059 = vsel %vm1548, %v3336, 0
      %v4062 = vsel %vm1548, %v3337, 0
      %v4065 = vsel %vm1548, %v3338, 0
      %v4068 = vsel %vm1548, %v3339, 0
      %v4071 = vsel %vm1657, %v3341, 0
      %4073 = vmatpush.msra.mxu0 0.0
      %4074 = vmatpush.msra.mxu0 0.0
      %4075 = vmatpush.msra.mxu0 0.0
      %4076 = vmatpush.msra.mxu0 0.0
      %4077 = vmatpush.msra.mxu0 0.0
      %4078 = vmatpush.msra.mxu0 0.0
      %4079 = vmatpush.msra.mxu0 0.0
      %4080 = vmatpush.msra.mxu0 0.0
      %4081 = vmatpush.msra.mxu0 0.0
      %4082 = vmatpush.msra.mxu0 0.0
      %4083 = vmatpush.msra.mxu0 0.0
      %4084 = vmatpush.msra.mxu0 0.0
      %4085 = vmatpush.msra.mxu0 0.0
      %4086 = vmatpush.msra.mxu0 0.0
      %4087 = vmatpush.msra.mxu0 %v4071
      %4088 = vmatpush.msra.mxu0 %v3340
      %4089 = vmatmul.f32.gmra.mxu0 %v3975
      %v4090 = vpop.f32.mrf.mxu0
      %v4091 = vadd.f32 %v3879, %v4090
      %4092 = vmatmul.f32.gmra.mxu0 %v3978
      %v4093 = vpop.f32.mrf.mxu0
      %v4094 = vadd.f32 %v3882, %v4093
      %4095 = vmatmul.f32.gmra.mxu0 %v3981
      %v4096 = vpop.f32.mrf.mxu0
      %v4097 = vadd.f32 %v3885, %v4096
      %4098 = vmatmul.f32.gmra.mxu0 %v3984
      %v4099 = vpop.f32.mrf.mxu0
      %v4100 = vadd.f32 %v3888, %v4099
      %4101 = vmatmul.f32.gmra.mxu0 %v3987
      %v4102 = vpop.f32.mrf.mxu0
      %v4103 = vadd.f32 %v3891, %v4102
      %4104 = vmatmul.f32.gmra.mxu0 %v3990
      %v4105 = vpop.f32.mrf.mxu0
      %v4106 = vadd.f32 %v3894, %v4105
      %4107 = vmatmul.f32.gmra.mxu0 %v3993
      %v4108 = vpop.f32.mrf.mxu0
      %v4109 = vadd.f32 %v3897, %v4108
      %4110 = vmatmul.f32.gmra.mxu0 %v3996
      %v4111 = vpop.f32.mrf.mxu0
      %v4112 = vadd.f32 %v3900, %v4111
      %4113 = vmatmul.f32.gmra.mxu0 %v3999
      %v4114 = vpop.f32.mrf.mxu0
      %v4115 = vadd.f32 %v3903, %v4114
      %4116 = vmatmul.f32.gmra.mxu0 %v4002
      %v4117 = vpop.f32.mrf.mxu0
      %v4118 = vadd.f32 %v3906, %v4117
      %4119 = vmatmul.f32.gmra.mxu0 %v4005
      %v4120 = vpop.f32.mrf.mxu0
      %v4121 = vadd.f32 %v3909, %v4120
      %4122 = vmatmul.f32.gmra.mxu0 %v4008
      %v4123 = vpop.f32.mrf.mxu0
      %v4124 = vadd.f32 %v3912, %v4123
      %4125 = vmatmul.f32.gmra.mxu0 %v4011
      %v4126 = vpop.f32.mrf.mxu0
      %v4127 = vadd.f32 %v3915, %v4126
      %4128 = vmatmul.f32.gmra.mxu0 %v4014
      %v4129 = vpop.f32.mrf.mxu0
      %v4130 = vadd.f32 %v3918, %v4129
      %4131 = vmatmul.f32.gmra.mxu0 %v4017
      %v4132 = vpop.f32.mrf.mxu0
      %v4133 = vadd.f32 %v3921, %v4132
      %4134 = vmatmul.f32.gmra.mxu0 %v4020
      %v4135 = vpop.f32.mrf.mxu0
      %v4136 = vadd.f32 %v3924, %v4135
      %4137 = vmatmul.f32.gmra.mxu0 %v4023
      %v4138 = vpop.f32.mrf.mxu0
      %v4139 = vadd.f32 %v3927, %v4138
      %4140 = vmatmul.f32.gmra.mxu0 %v4026
      %v4141 = vpop.f32.mrf.mxu0
      %v4142 = vadd.f32 %v3930, %v4141
      %4143 = vmatmul.f32.gmra.mxu0 %v4029
      %v4144 = vpop.f32.mrf.mxu0
      %v4145 = vadd.f32 %v3933, %v4144
      %4146 = vmatmul.f32.gmra.mxu0 %v4032
      %v4147 = vpop.f32.mrf.mxu0
      %v4148 = vadd.f32 %v3936, %v4147
      %4149 = vmatmul.f32.gmra.mxu0 %v4035
      %v4150 = vpop.f32.mrf.mxu0
      %v4151 = vadd.f32 %v3939, %v4150
      %4152 = vmatmul.f32.gmra.mxu0 %v4038
      %v4153 = vpop.f32.mrf.mxu0
      %v4154 = vadd.f32 %v3942, %v4153
      %4155 = vmatmul.f32.gmra.mxu0 %v4041
      %v4156 = vpop.f32.mrf.mxu0
      %v4157 = vadd.f32 %v3945, %v4156
      %4158 = vmatmul.f32.gmra.mxu0 %v4044
      %v4159 = vpop.f32.mrf.mxu0
      %v4160 = vadd.f32 %v3948, %v4159
      %4161 = vmatmul.f32.gmra.mxu0 %v4047
      %v4162 = vpop.f32.mrf.mxu0
      %v4163 = vadd.f32 %v3951, %v4162
      %4164 = vmatmul.f32.gmra.mxu0 %v4050
      %v4165 = vpop.f32.mrf.mxu0
      %v4166 = vadd.f32 %v3954, %v4165
      %4167 = vmatmul.f32.gmra.mxu0 %v4053
      %v4168 = vpop.f32.mrf.mxu0
      %v4169 = vadd.f32 %v3957, %v4168
      %4170 = vmatmul.f32.gmra.mxu0 %v4056
      %v4171 = vpop.f32.mrf.mxu0
      %v4172 = vadd.f32 %v3960, %v4171
      %4173 = vmatmul.f32.gmra.mxu0 %v4059
      %v4174 = vpop.f32.mrf.mxu0
      %v4175 = vadd.f32 %v3963, %v4174
      %4176 = vmatmul.f32.gmra.mxu0 %v4062
      %v4177 = vpop.f32.mrf.mxu0
      %v4178 = vadd.f32 %v3966, %v4177
      %4179 = vmatmul.f32.gmra.mxu0 %v4065
      %v4180 = vpop.f32.mrf.mxu0
      %v4181 = vadd.f32 %v3969, %v4180
      %4182 = vmatmul.f32.gmra.mxu0 %v4068
      %v4183 = vpop.f32.mrf.mxu0
      %v4184 = vadd.f32 %v3972, %v4183
      %4185 = vdwg.mxu0
      %s4186 = scalar_lea.vmem [#allocation3], 48
      %v4187 = vld [vmem:[%s4186] sm:$0xff]
      %v4188 = vld [vmem:[%s4186 + $0x8] sm:$0xff]
      %v4189 = vld [vmem:[%s4186 + $0x18] sm:$0xff]
      %v4190 = vld [vmem:[%s4186 + $0x20] sm:$0xff]
      %v4191 = vld [vmem:[%s4186 + $0x30] sm:$0xff]
      %v4192 = vld [vmem:[%s4186 + $0x38] sm:$0xff]
      %v4193 = vld [vmem:[%s4186 + $0x48] sm:$0xff]
      %v4194 = vld [vmem:[%s4186 + $0x50] sm:$0xff]
      %v4195 = vld [vmem:[%s4186 + $0x60] sm:$0xff]
      %v4196 = vld [vmem:[%s4186 + $0x68] sm:$0xff]
      %v4197 = vld [vmem:[%s4186 + $0x78] sm:$0xff]
      %v4198 = vld [vmem:[%s4186 + $0x80] sm:$0xff]
      %v4199 = vld [vmem:[%s4186 + $0x90] sm:$0xff]
      %v4200 = vld [vmem:[%s4186 + $0x98] sm:$0xff]
      %v4201 = vld [vmem:[%s4186 + $0xa8] sm:$0xff]
      %v4202 = vld [vmem:[%s4186 + $0xb0] sm:$0xff]
      %v4203 = vld [vmem:[%s4186 + $0xc0] sm:$0xff]
      %v4204 = vld [vmem:[%s4186 + $0xc8] sm:$0xff]
      %v4205 = vld [vmem:[%s4186 + $0xd8] sm:$0xff]
      %v4206 = vld [vmem:[%s4186 + $0xe0] sm:$0xff]
      %v4207 = vld [vmem:[%s4186 + $0xf0] sm:$0xff]
      %v4208 = vld [vmem:[%s4186 + $0xf8] sm:$0xff]
      %v4209 = vld [vmem:[%s4186 + $0x108] sm:$0xff]
      %v4210 = vld [vmem:[%s4186 + $0x110] sm:$0xff]
      %v4211 = vld [vmem:[%s4186 + $0x120] sm:$0xff]
      %v4212 = vld [vmem:[%s4186 + $0x128] sm:$0xff]
      %v4213 = vld [vmem:[%s4186 + $0x138] sm:$0xff]
      %v4214 = vld [vmem:[%s4186 + $0x140] sm:$0xff]
      %v4215 = vld [vmem:[%s4186 + $0x150] sm:$0xff]
      %v4216 = vld [vmem:[%s4186 + $0x158] sm:$0xff]
      %v4217 = vld [vmem:[%s4186 + $0x168] sm:$0xff]
      %v4218 = vld [vmem:[%s4186 + $0x170] sm:$0xff]
      %v4219 = vld [vmem:[%s4186 + $0x1] sm:$0xff]
      %v4220 = vld [vmem:[%s4186 + $0x9] sm:$0xff]
      %v4221 = vld [vmem:[%s4186 + $0x19] sm:$0xff]
      %v4222 = vld [vmem:[%s4186 + $0x21] sm:$0xff]
      %v4223 = vld [vmem:[%s4186 + $0x31] sm:$0xff]
      %v4224 = vld [vmem:[%s4186 + $0x39] sm:$0xff]
      %v4225 = vld [vmem:[%s4186 + $0x49] sm:$0xff]
      %v4226 = vld [vmem:[%s4186 + $0x51] sm:$0xff]
      %v4227 = vld [vmem:[%s4186 + $0x61] sm:$0xff]
      %v4228 = vld [vmem:[%s4186 + $0x69] sm:$0xff]
      %v4229 = vld [vmem:[%s4186 + $0x79] sm:$0xff]
      %v4230 = vld [vmem:[%s4186 + $0x81] sm:$0xff]
      %v4231 = vld [vmem:[%s4186 + $0x91] sm:$0xff]
      %v4232 = vld [vmem:[%s4186 + $0x99] sm:$0xff]
      %v4233 = vld [vmem:[%s4186 + $0xa9] sm:$0xff]
      %v4234 = vld [vmem:[%s4186 + $0xb1] sm:$0xff]
      %v4235 = vld [vmem:[%s4186 + $0xc1] sm:$0xff]
      %v4236 = vld [vmem:[%s4186 + $0xc9] sm:$0xff]
      %v4237 = vld [vmem:[%s4186 + $0xd9] sm:$0xff]
      %v4238 = vld [vmem:[%s4186 + $0xe1] sm:$0xff]
      %v4239 = vld [vmem:[%s4186 + $0xf1] sm:$0xff]
      %v4240 = vld [vmem:[%s4186 + $0xf9] sm:$0xff]
      %v4241 = vld [vmem:[%s4186 + $0x109] sm:$0xff]
      %v4242 = vld [vmem:[%s4186 + $0x111] sm:$0xff]
      %v4243 = vld [vmem:[%s4186 + $0x121] sm:$0xff]
      %v4244 = vld [vmem:[%s4186 + $0x129] sm:$0xff]
      %v4245 = vld [vmem:[%s4186 + $0x139] sm:$0xff]
      %v4246 = vld [vmem:[%s4186 + $0x141] sm:$0xff]
      %v4247 = vld [vmem:[%s4186 + $0x151] sm:$0xff]
      %v4248 = vld [vmem:[%s4186 + $0x159] sm:$0xff]
      %v4249 = vld [vmem:[%s4186 + $0x169] sm:$0xff]
      %v4250 = vld [vmem:[%s4186 + $0x171] sm:$0xff]
      %v4251 = vld [vmem:[%s4186 + $0x2] sm:$0xff]
      %v4252 = vld [vmem:[%s4186 + $0xa] sm:$0xff]
      %v4253 = vld [vmem:[%s4186 + $0x1a] sm:$0xff]
      %v4254 = vld [vmem:[%s4186 + $0x22] sm:$0xff]
      %v4255 = vld [vmem:[%s4186 + $0x32] sm:$0xff]
      %v4256 = vld [vmem:[%s4186 + $0x3a] sm:$0xff]
      %v4257 = vld [vmem:[%s4186 + $0x4a] sm:$0xff]
      %v4258 = vld [vmem:[%s4186 + $0x52] sm:$0xff]
      %v4259 = vld [vmem:[%s4186 + $0x62] sm:$0xff]
      %v4260 = vld [vmem:[%s4186 + $0x6a] sm:$0xff]
      %v4261 = vld [vmem:[%s4186 + $0x7a] sm:$0xff]
      %v4262 = vld [vmem:[%s4186 + $0x82] sm:$0xff]
      %v4263 = vld [vmem:[%s4186 + $0x92] sm:$0xff]
      %v4264 = vld [vmem:[%s4186 + $0x9a] sm:$0xff]
      %v4265 = vld [vmem:[%s4186 + $0xaa] sm:$0xff]
      %v4266 = vld [vmem:[%s4186 + $0xb2] sm:$0xff]
      %v4267 = vld [vmem:[%s4186 + $0xc2] sm:$0xff]
      %v4268 = vld [vmem:[%s4186 + $0xca] sm:$0xff]
      %v4269 = vld [vmem:[%s4186 + $0xda] sm:$0xff]
      %v4270 = vld [vmem:[%s4186 + $0xe2] sm:$0xff]
      %v4271 = vld [vmem:[%s4186 + $0xf2] sm:$0xff]
      %v4272 = vld [vmem:[%s4186 + $0xfa] sm:$0xff]
      %v4273 = vld [vmem:[%s4186 + $0x10a] sm:$0xff]
      %v4274 = vld [vmem:[%s4186 + $0x112] sm:$0xff]
      %v4275 = vld [vmem:[%s4186 + $0x122] sm:$0xff]
      %v4276 = vld [vmem:[%s4186 + $0x12a] sm:$0xff]
      %v4277 = vld [vmem:[%s4186 + $0x13a] sm:$0xff]
      %v4278 = vld [vmem:[%s4186 + $0x142] sm:$0xff]
      %v4279 = vld [vmem:[%s4186 + $0x152] sm:$0xff]
      %v4280 = vld [vmem:[%s4186 + $0x15a] sm:$0xff]
      %v4281 = vld [vmem:[%s4186 + $0x16a] sm:$0xff]
      %v4282 = vld [vmem:[%s4186 + $0x172] sm:$0xff]
      %4315 = vrot.lane.b32.xlu0 %v4219, 4
      %v4316 = vpop.permute.xlu0 %4315
      %4317 = vrot.lane.b32.xlu0 %v4220, 4
      %v4318 = vpop.permute.xlu0 %4317
      %4319 = vrot.lane.b32.xlu0 %v4221, 4
      %v4320 = vpop.permute.xlu0 %4319
      %4321 = vrot.lane.b32.xlu0 %v4222, 4
      %v4322 = vpop.permute.xlu0 %4321
      %4323 = vrot.lane.b32.xlu0 %v4223, 4
      %v4324 = vpop.permute.xlu0 %4323
      %4325 = vrot.lane.b32.xlu0 %v4224, 4
      %v4326 = vpop.permute.xlu0 %4325
      %4327 = vrot.lane.b32.xlu0 %v4225, 4
      %v4328 = vpop.permute.xlu0 %4327
      %4329 = vrot.lane.b32.xlu0 %v4226, 4
      %v4330 = vpop.permute.xlu0 %4329
      %4331 = vrot.lane.b32.xlu0 %v4227, 4
      %v4332 = vpop.permute.xlu0 %4331
      %4333 = vrot.lane.b32.xlu0 %v4228, 4
      %v4334 = vpop.permute.xlu0 %4333
      %4335 = vrot.lane.b32.xlu0 %v4229, 4
      %v4336 = vpop.permute.xlu0 %4335
      %4337 = vrot.lane.b32.xlu0 %v4230, 4
      %v4338 = vpop.permute.xlu0 %4337
      %4339 = vrot.lane.b32.xlu0 %v4231, 4
      %v4340 = vpop.permute.xlu0 %4339
      %4341 = vrot.lane.b32.xlu0 %v4232, 4
      %v4342 = vpop.permute.xlu0 %4341
      %4343 = vrot.lane.b32.xlu0 %v4233, 4
      %v4344 = vpop.permute.xlu0 %4343
      %4345 = vrot.lane.b32.xlu0 %v4234, 4
      %v4346 = vpop.permute.xlu0 %4345
      %4347 = vrot.lane.b32.xlu0 %v4235, 4
      %v4348 = vpop.permute.xlu0 %4347
      %4349 = vrot.lane.b32.xlu0 %v4236, 4
      %v4350 = vpop.permute.xlu0 %4349
      %4351 = vrot.lane.b32.xlu0 %v4237, 4
      %v4352 = vpop.permute.xlu0 %4351
      %4353 = vrot.lane.b32.xlu0 %v4238, 4
      %v4354 = vpop.permute.xlu0 %4353
      %4355 = vrot.lane.b32.xlu0 %v4239, 4
      %v4356 = vpop.permute.xlu0 %4355
      %4357 = vrot.lane.b32.xlu0 %v4240, 4
      %v4358 = vpop.permute.xlu0 %4357
      %4359 = vrot.lane.b32.xlu0 %v4241, 4
      %v4360 = vpop.permute.xlu0 %4359
      %4361 = vrot.lane.b32.xlu0 %v4242, 4
      %v4362 = vpop.permute.xlu0 %4361
      %4363 = vrot.lane.b32.xlu0 %v4243, 4
      %v4364 = vpop.permute.xlu0 %4363
      %4365 = vrot.lane.b32.xlu0 %v4244, 4
      %v4366 = vpop.permute.xlu0 %4365
      %4367 = vrot.lane.b32.xlu0 %v4245, 4
      %v4368 = vpop.permute.xlu0 %4367
      %4369 = vrot.lane.b32.xlu0 %v4246, 4
      %v4370 = vpop.permute.xlu0 %4369
      %4371 = vrot.lane.b32.xlu0 %v4247, 4
      %v4372 = vpop.permute.xlu0 %4371
      %4373 = vrot.lane.b32.xlu0 %v4248, 4
      %v4374 = vpop.permute.xlu0 %4373
      %4375 = vrot.lane.b32.xlu0 %v4249, 4
      %v4376 = vpop.permute.xlu0 %4375
      %4377 = vrot.lane.b32.xlu0 %v4250, 4
      %v4378 = vpop.permute.xlu0 %4377
      %4443 = vrot.lane.b32.xlu0 %v4251, 8
      %v4444 = vpop.permute.xlu0 %4443
      %4445 = vrot.lane.b32.xlu0 %v4252, 8
      %v4446 = vpop.permute.xlu0 %4445
      %4447 = vrot.lane.b32.xlu0 %v4253, 8
      %v4448 = vpop.permute.xlu0 %4447
      %4449 = vrot.lane.b32.xlu0 %v4254, 8
      %v4450 = vpop.permute.xlu0 %4449
      %4451 = vrot.lane.b32.xlu0 %v4255, 8
      %v4452 = vpop.permute.xlu0 %4451
      %4453 = vrot.lane.b32.xlu0 %v4256, 8
      %v4454 = vpop.permute.xlu0 %4453
      %4455 = vrot.lane.b32.xlu0 %v4257, 8
      %v4456 = vpop.permute.xlu0 %4455
      %4457 = vrot.lane.b32.xlu0 %v4258, 8
      %v4458 = vpop.permute.xlu0 %4457
      %4459 = vrot.lane.b32.xlu0 %v4259, 8
      %v4460 = vpop.permute.xlu0 %4459
      %4461 = vrot.lane.b32.xlu0 %v4260, 8
      %v4462 = vpop.permute.xlu0 %4461
      %4463 = vrot.lane.b32.xlu0 %v4261, 8
      %v4464 = vpop.permute.xlu0 %4463
      %4465 = vrot.lane.b32.xlu0 %v4262, 8
      %v4466 = vpop.permute.xlu0 %4465
      %4467 = vrot.lane.b32.xlu0 %v4263, 8
      %v4468 = vpop.permute.xlu0 %4467
      %4469 = vrot.lane.b32.xlu0 %v4264, 8
      %v4470 = vpop.permute.xlu0 %4469
      %4471 = vrot.lane.b32.xlu0 %v4265, 8
      %v4472 = vpop.permute.xlu0 %4471
      %4473 = vrot.lane.b32.xlu0 %v4266, 8
      %v4474 = vpop.permute.xlu0 %4473
      %4475 = vrot.lane.b32.xlu0 %v4267, 8
      %v4476 = vpop.permute.xlu0 %4475
      %4477 = vrot.lane.b32.xlu0 %v4268, 8
      %v4478 = vpop.permute.xlu0 %4477
      %4479 = vrot.lane.b32.xlu0 %v4269, 8
      %v4480 = vpop.permute.xlu0 %4479
      %4481 = vrot.lane.b32.xlu0 %v4270, 8
      %v4482 = vpop.permute.xlu0 %4481
      %4483 = vrot.lane.b32.xlu0 %v4271, 8
      %v4484 = vpop.permute.xlu0 %4483
      %4485 = vrot.lane.b32.xlu0 %v4272, 8
      %v4486 = vpop.permute.xlu0 %4485
      %4487 = vrot.lane.b32.xlu0 %v4273, 8
      %v4488 = vpop.permute.xlu0 %4487
      %4489 = vrot.lane.b32.xlu0 %v4274, 8
      %v4490 = vpop.permute.xlu0 %4489
      %4491 = vrot.lane.b32.xlu0 %v4275, 8
      %v4492 = vpop.permute.xlu0 %4491
      %4493 = vrot.lane.b32.xlu0 %v4276, 8
      %v4494 = vpop.permute.xlu0 %4493
      %4495 = vrot.lane.b32.xlu0 %v4277, 8
      %v4496 = vpop.permute.xlu0 %4495
      %4497 = vrot.lane.b32.xlu0 %v4278, 8
      %v4498 = vpop.permute.xlu0 %4497
      %4499 = vrot.lane.b32.xlu0 %v4279, 8
      %v4500 = vpop.permute.xlu0 %4499
      %4501 = vrot.lane.b32.xlu0 %v4280, 8
      %v4502 = vpop.permute.xlu0 %4501
      %4503 = vrot.lane.b32.xlu0 %v4281, 8
      %v4504 = vpop.permute.xlu0 %4503
      %4505 = vrot.lane.b32.xlu0 %v4282, 8
      %v4506 = vpop.permute.xlu0 %4505
      %v4539 = vsel %vm531, %v4187, %v4316
      %v4540 = vsel %vm531, %v4188, %v4318
      %v4541 = vsel %vm531, %v4189, %v4320
      %v4542 = vsel %vm531, %v4190, %v4322
      %v4543 = vsel %vm531, %v4191, %v4324
      %v4544 = vsel %vm531, %v4192, %v4326
      %v4545 = vsel %vm531, %v4193, %v4328
      %v4546 = vsel %vm531, %v4194, %v4330
      %v4547 = vsel %vm531, %v4195, %v4332
      %v4548 = vsel %vm531, %v4196, %v4334
      %v4549 = vsel %vm531, %v4197, %v4336
      %v4550 = vsel %vm531, %v4198, %v4338
      %v4551 = vsel %vm531, %v4199, %v4340
      %v4552 = vsel %vm531, %v4200, %v4342
      %v4553 = vsel %vm531, %v4201, %v4344
      %v4554 = vsel %vm531, %v4202, %v4346
      %v4555 = vsel %vm531, %v4203, %v4348
      %v4556 = vsel %vm531, %v4204, %v4350
      %v4557 = vsel %vm531, %v4205, %v4352
      %v4558 = vsel %vm531, %v4206, %v4354
      %v4559 = vsel %vm531, %v4207, %v4356
      %v4560 = vsel %vm531, %v4208, %v4358
      %v4561 = vsel %vm531, %v4209, %v4360
      %v4562 = vsel %vm531, %v4210, %v4362
      %v4563 = vsel %vm531, %v4211, %v4364
      %v4564 = vsel %vm531, %v4212, %v4366
      %v4565 = vsel %vm531, %v4213, %v4368
      %v4566 = vsel %vm531, %v4214, %v4370
      %v4567 = vsel %vm531, %v4215, %v4372
      %v4568 = vsel %vm531, %v4216, %v4374
      %v4569 = vsel %vm531, %v4217, %v4376
      %v4570 = vsel %vm531, %v4218, %v4378
      %v4571 = vsel %vm1037, %v4539, %v4444
      %v4572 = vsel %vm1037, %v4540, %v4446
      %v4573 = vsel %vm1037, %v4541, %v4448
      %v4574 = vsel %vm1037, %v4542, %v4450
      %v4575 = vsel %vm1037, %v4543, %v4452
      %v4576 = vsel %vm1037, %v4544, %v4454
      %v4577 = vsel %vm1037, %v4545, %v4456
      %v4578 = vsel %vm1037, %v4546, %v4458
      %v4579 = vsel %vm1037, %v4547, %v4460
      %v4580 = vsel %vm1037, %v4548, %v4462
      %v4581 = vsel %vm1037, %v4549, %v4464
      %v4582 = vsel %vm1037, %v4550, %v4466
      %v4583 = vsel %vm1037, %v4551, %v4468
      %v4584 = vsel %vm1037, %v4552, %v4470
      %v4585 = vsel %vm1037, %v4553, %v4472
      %v4586 = vsel %vm1037, %v4554, %v4474
      %v4587 = vsel %vm1037, %v4555, %v4476
      %v4588 = vsel %vm1037, %v4556, %v4478
      %v4589 = vsel %vm1037, %v4557, %v4480
      %v4590 = vsel %vm1037, %v4558, %v4482
      %v4591 = vsel %vm1037, %v4559, %v4484
      %v4592 = vsel %vm1037, %v4560, %v4486
      %v4593 = vsel %vm1037, %v4561, %v4488
      %v4594 = vsel %vm1037, %v4562, %v4490
      %v4595 = vsel %vm1037, %v4563, %v4492
      %v4596 = vsel %vm1037, %v4564, %v4494
      %v4597 = vsel %vm1037, %v4565, %v4496
      %v4598 = vsel %vm1037, %v4566, %v4498
      %v4599 = vsel %vm1037, %v4567, %v4500
      %v4600 = vsel %vm1037, %v4568, %v4502
      %v4601 = vsel %vm1037, %v4569, %v4504
      %v4602 = vsel %vm1037, %v4570, %v4506
      %s4603 = scalar_lea.vmem %s5, 32
      %v4604 = vld [vmem:[%s4603] sm:$0xff]
      %v4605 = vld [vmem:[%s4603 + $0x8] sm:$0xf]
      %v4607 = vsel %vm1548, %v4571, 0
      %v4610 = vsel %vm1548, %v4572, 0
      %v4613 = vsel %vm1548, %v4573, 0
      %v4616 = vsel %vm1548, %v4574, 0
      %v4619 = vsel %vm1548, %v4575, 0
      %v4622 = vsel %vm1548, %v4576, 0
      %v4625 = vsel %vm1548, %v4577, 0
      %v4628 = vsel %vm1548, %v4578, 0
      %v4631 = vsel %vm1548, %v4579, 0
      %v4634 = vsel %vm1548, %v4580, 0
      %v4637 = vsel %vm1548, %v4581, 0
      %v4640 = vsel %vm1548, %v4582, 0
      %v4643 = vsel %vm1548, %v4583, 0
      %v4646 = vsel %vm1548, %v4584, 0
      %v4649 = vsel %vm1548, %v4585, 0
      %v4652 = vsel %vm1548, %v4586, 0
      %v4655 = vsel %vm1548, %v4587, 0
      %v4658 = vsel %vm1548, %v4588, 0
      %v4661 = vsel %vm1548, %v4589, 0
      %v4664 = vsel %vm1548, %v4590, 0
      %v4667 = vsel %vm1548, %v4591, 0
      %v4670 = vsel %vm1548, %v4592, 0
      %v4673 = vsel %vm1548, %v4593, 0
      %v4676 = vsel %vm1548, %v4594, 0
      %v4679 = vsel %vm1548, %v4595, 0
      %v4682 = vsel %vm1548, %v4596, 0
      %v4685 = vsel %vm1548, %v4597, 0
      %v4688 = vsel %vm1548, %v4598, 0
      %v4691 = vsel %vm1548, %v4599, 0
      %v4694 = vsel %vm1548, %v4600, 0
      %v4697 = vsel %vm1548, %v4601, 0
      %v4700 = vsel %vm1548, %v4602, 0
      %v4703 = vsel %vm1657, %v4605, 0
      %4705 = vmatpush.msra.mxu0 0.0
      %4706 = vmatpush.msra.mxu0 0.0
      %4707 = vmatpush.msra.mxu0 0.0
      %4708 = vmatpush.msra.mxu0 0.0
      %4709 = vmatpush.msra.mxu0 0.0
      %4710 = vmatpush.msra.mxu0 0.0
      %4711 = vmatpush.msra.mxu0 0.0
      %4712 = vmatpush.msra.mxu0 0.0
      %4713 = vmatpush.msra.mxu0 0.0
      %4714 = vmatpush.msra.mxu0 0.0
      %4715 = vmatpush.msra.mxu0 0.0
      %4716 = vmatpush.msra.mxu0 0.0
      %4717 = vmatpush.msra.mxu0 0.0
      %4718 = vmatpush.msra.mxu0 0.0
      %4719 = vmatpush.msra.mxu0 %v4703
      %4720 = vmatpush.msra.mxu0 %v4604
      %4721 = vmatmul.f32.gmra.mxu0 %v4607
      %v4722 = vpop.f32.mrf.mxu0
      %v4723 = vadd.f32 0.0, %v4722
      %4724 = vmatmul.f32.gmra.mxu0 %v4610
      %v4725 = vpop.f32.mrf.mxu0
      %v4726 = vadd.f32 0.0, %v4725
      %4727 = vmatmul.f32.gmra.mxu0 %v4613
      %v4728 = vpop.f32.mrf.mxu0
      %v4729 = vadd.f32 0.0, %v4728
      %4730 = vmatmul.f32.gmra.mxu0 %v4616
      %v4731 = vpop.f32.mrf.mxu0
      %v4732 = vadd.f32 0.0, %v4731
      %4733 = vmatmul.f32.gmra.mxu0 %v4619
      %v4734 = vpop.f32.mrf.mxu0
      %v4735 = vadd.f32 0.0, %v4734
      %4736 = vmatmul.f32.gmra.mxu0 %v4622
      %v4737 = vpop.f32.mrf.mxu0
      %v4738 = vadd.f32 0.0, %v4737
      %4739 = vmatmul.f32.gmra.mxu0 %v4625
      %v4740 = vpop.f32.mrf.mxu0
      %v4741 = vadd.f32 0.0, %v4740
      %4742 = vmatmul.f32.gmra.mxu0 %v4628
      %v4743 = vpop.f32.mrf.mxu0
      %v4744 = vadd.f32 0.0, %v4743
      %4745 = vmatmul.f32.gmra.mxu0 %v4631
      %v4746 = vpop.f32.mrf.mxu0
      %v4747 = vadd.f32 0.0, %v4746
      %4748 = vmatmul.f32.gmra.mxu0 %v4634
      %v4749 = vpop.f32.mrf.mxu0
      %v4750 = vadd.f32 0.0, %v4749
      %4751 = vmatmul.f32.gmra.mxu0 %v4637
      %v4752 = vpop.f32.mrf.mxu0
      %v4753 = vadd.f32 0.0, %v4752
      %4754 = vmatmul.f32.gmra.mxu0 %v4640
      %v4755 = vpop.f32.mrf.mxu0
      %v4756 = vadd.f32 0.0, %v4755
      %4757 = vmatmul.f32.gmra.mxu0 %v4643
      %v4758 = vpop.f32.mrf.mxu0
      %v4759 = vadd.f32 0.0, %v4758
      %4760 = vmatmul.f32.gmra.mxu0 %v4646
      %v4761 = vpop.f32.mrf.mxu0
      %v4762 = vadd.f32 0.0, %v4761
      %4763 = vmatmul.f32.gmra.mxu0 %v4649
      %v4764 = vpop.f32.mrf.mxu0
      %v4765 = vadd.f32 0.0, %v4764
      %4766 = vmatmul.f32.gmra.mxu0 %v4652
      %v4767 = vpop.f32.mrf.mxu0
      %v4768 = vadd.f32 0.0, %v4767
      %4769 = vmatmul.f32.gmra.mxu0 %v4655
      %v4770 = vpop.f32.mrf.mxu0
      %v4771 = vadd.f32 0.0, %v4770
      %4772 = vmatmul.f32.gmra.mxu0 %v4658
      %v4773 = vpop.f32.mrf.mxu0
      %v4774 = vadd.f32 0.0, %v4773
      %4775 = vmatmul.f32.gmra.mxu0 %v4661
      %v4776 = vpop.f32.mrf.mxu0
      %v4777 = vadd.f32 0.0, %v4776
      %4778 = vmatmul.f32.gmra.mxu0 %v4664
      %v4779 = vpop.f32.mrf.mxu0
      %v4780 = vadd.f32 0.0, %v4779
      %4781 = vmatmul.f32.gmra.mxu0 %v4667
      %v4782 = vpop.f32.mrf.mxu0
      %v4783 = vadd.f32 0.0, %v4782
      %4784 = vmatmul.f32.gmra.mxu0 %v4670
      %v4785 = vpop.f32.mrf.mxu0
      %v4786 = vadd.f32 0.0, %v4785
      %4787 = vmatmul.f32.gmra.mxu0 %v4673
      %v4788 = vpop.f32.mrf.mxu0
      %v4789 = vadd.f32 0.0, %v4788
      %4790 = vmatmul.f32.gmra.mxu0 %v4676
      %v4791 = vpop.f32.mrf.mxu0
      %v4792 = vadd.f32 0.0, %v4791
      %4793 = vmatmul.f32.gmra.mxu0 %v4679
      %v4794 = vpop.f32.mrf.mxu0
      %v4795 = vadd.f32 0.0, %v4794
      %4796 = vmatmul.f32.gmra.mxu0 %v4682
      %v4797 = vpop.f32.mrf.mxu0
      %v4798 = vadd.f32 0.0, %v4797
      %4799 = vmatmul.f32.gmra.mxu0 %v4685
      %v4800 = vpop.f32.mrf.mxu0
      %v4801 = vadd.f32 0.0, %v4800
      %4802 = vmatmul.f32.gmra.mxu0 %v4688
      %v4803 = vpop.f32.mrf.mxu0
      %v4804 = vadd.f32 0.0, %v4803
      %4805 = vmatmul.f32.gmra.mxu0 %v4691
      %v4806 = vpop.f32.mrf.mxu0
      %v4807 = vadd.f32 0.0, %v4806
      %4808 = vmatmul.f32.gmra.mxu0 %v4694
      %v4809 = vpop.f32.mrf.mxu0
      %v4810 = vadd.f32 0.0, %v4809
      %4811 = vmatmul.f32.gmra.mxu0 %v4697
      %v4812 = vpop.f32.mrf.mxu0
      %v4813 = vadd.f32 0.0, %v4812
      %4814 = vmatmul.f32.gmra.mxu0 %v4700
      %v4815 = vpop.f32.mrf.mxu0
      %v4816 = vadd.f32 0.0, %v4815
      %4817 = vdwg.mxu0
      %v4818 = vadd.f32 %v4091, %v4723
      %v4819 = vadd.f32 %v4094, %v4726
      %v4820 = vadd.f32 %v4097, %v4729
      %v4821 = vadd.f32 %v4100, %v4732
      %v4822 = vadd.f32 %v4103, %v4735
      %v4823 = vadd.f32 %v4106, %v4738
      %v4824 = vadd.f32 %v4109, %v4741
      %v4825 = vadd.f32 %v4112, %v4744
      %v4826 = vadd.f32 %v4115, %v4747
      %v4827 = vadd.f32 %v4118, %v4750
      %v4828 = vadd.f32 %v4121, %v4753
      %v4829 = vadd.f32 %v4124, %v4756
      %v4830 = vadd.f32 %v4127, %v4759
      %v4831 = vadd.f32 %v4130, %v4762
      %v4832 = vadd.f32 %v4133, %v4765
      %v4833 = vadd.f32 %v4136, %v4768
      %v4834 = vadd.f32 %v4139, %v4771
      %v4835 = vadd.f32 %v4142, %v4774
      %v4836 = vadd.f32 %v4145, %v4777
      %v4837 = vadd.f32 %v4148, %v4780
      %v4838 = vadd.f32 %v4151, %v4783
      %v4839 = vadd.f32 %v4154, %v4786
      %v4840 = vadd.f32 %v4157, %v4789
      %v4841 = vadd.f32 %v4160, %v4792
      %v4842 = vadd.f32 %v4163, %v4795
      %v4843 = vadd.f32 %v4166, %v4798
      %v4844 = vadd.f32 %v4169, %v4801
      %v4845 = vadd.f32 %v4172, %v4804
      %v4846 = vadd.f32 %v4175, %v4807
      %v4847 = vadd.f32 %v4178, %v4810
      %v4848 = vadd.f32 %v4181, %v4813
      %v4849 = vadd.f32 %v4184, %v4816
      %v4850 = vld [vmem:[%s6] sm:$0x1]
      %v4852 = vperm.slane %v4850, 0
      %v4854 = vadd.f32 %v4818, %v4852
      %v4855 = vadd.f32 %v4819, %v4852
      %v4856 = vadd.f32 %v4820, %v4852
      %v4857 = vadd.f32 %v4821, %v4852
      %v4858 = vadd.f32 %v4822, %v4852
      %v4859 = vadd.f32 %v4823, %v4852
      %v4860 = vadd.f32 %v4824, %v4852
      %v4861 = vadd.f32 %v4825, %v4852
      %v4862 = vadd.f32 %v4826, %v4852
      %v4863 = vadd.f32 %v4827, %v4852
      %v4864 = vadd.f32 %v4828, %v4852
      %v4865 = vadd.f32 %v4829, %v4852
      %v4866 = vadd.f32 %v4830, %v4852
      %v4867 = vadd.f32 %v4831, %v4852
      %v4868 = vadd.f32 %v4832, %v4852
      %v4869 = vadd.f32 %v4833, %v4852
      %v4870 = vadd.f32 %v4834, %v4852
      %v4871 = vadd.f32 %v4835, %v4852
      %v4872 = vadd.f32 %v4836, %v4852
      %v4873 = vadd.f32 %v4837, %v4852
      %v4874 = vadd.f32 %v4838, %v4852
      %v4875 = vadd.f32 %v4839, %v4852
      %v4876 = vadd.f32 %v4840, %v4852
      %v4877 = vadd.f32 %v4841, %v4852
      %v4878 = vadd.f32 %v4842, %v4852
      %v4879 = vadd.f32 %v4843, %v4852
      %v4880 = vadd.f32 %v4844, %v4852
      %v4881 = vadd.f32 %v4845, %v4852
      %v4882 = vadd.f32 %v4846, %v4852
      %v4883 = vadd.f32 %v4847, %v4852
      %v4884 = vadd.f32 %v4848, %v4852
      %v4885 = vadd.f32 %v4849, %v4852
      %v4886 = vld [vmem:[%s406] sm:$0xff]
      %v4887 = vld [vmem:[%s406 + $0x8] sm:$0xff]
      %v4888 = vld [vmem:[%s406 + $0x10] sm:$0xff]
      %v4889 = vld [vmem:[%s406 + $0x18] sm:$0xff]
      %v4890 = vld [vmem:[%s406 + $0x20] sm:$0xff]
      %v4891 = vld [vmem:[%s406 + $0x28] sm:$0xff]
      %v4892 = vld [vmem:[%s406 + $0x30] sm:$0xff]
      %v4893 = vld [vmem:[%s406 + $0x38] sm:$0xff]
      %v4894 = vld [vmem:[%s406 + $0x40] sm:$0xff]
      %v4895 = vld [vmem:[%s406 + $0x48] sm:$0xff]
      %v4896 = vld [vmem:[%s406 + $0x50] sm:$0xff]
      %v4897 = vld [vmem:[%s406 + $0x58] sm:$0xff]
      %v4898 = vld [vmem:[%s406 + $0x60] sm:$0xff]
      %v4899 = vld [vmem:[%s406 + $0x68] sm:$0xff]
      %v4900 = vld [vmem:[%s406 + $0x70] sm:$0xff]
      %v4901 = vld [vmem:[%s406 + $0x78] sm:$0xff]
      %v4902 = vld [vmem:[%s406 + $0x80] sm:$0xff]
      %v4903 = vld [vmem:[%s406 + $0x88] sm:$0xff]
      %v4904 = vld [vmem:[%s406 + $0x90] sm:$0xff]
      %v4905 = vld [vmem:[%s406 + $0x98] sm:$0xff]
      %v4906 = vld [vmem:[%s406 + $0xa0] sm:$0xff]
      %v4907 = vld [vmem:[%s406 + $0xa8] sm:$0xff]
      %v4908 = vld [vmem:[%s406 + $0xb0] sm:$0xff]
      %v4909 = vld [vmem:[%s406 + $0xb8] sm:$0xff]
      %v4910 = vld [vmem:[%s406 + $0xc0] sm:$0xff]
      %v4911 = vld [vmem:[%s406 + $0xc8] sm:$0xff]
      %v4912 = vld [vmem:[%s406 + $0xd0] sm:$0xff]
      %v4913 = vld [vmem:[%s406 + $0xd8] sm:$0xff]
      %v4914 = vld [vmem:[%s406 + $0xe0] sm:$0xff]
      %v4915 = vld [vmem:[%s406 + $0xe8] sm:$0xff]
      %v4916 = vld [vmem:[%s406 + $0xf0] sm:$0xff]
      %v4917 = vld [vmem:[%s406 + $0xf8] sm:$0xff]
      %v4918 = vadd.f32 %v4886, %v4854
      %v4919 = vadd.f32 %v4887, %v4855
      %v4920 = vadd.f32 %v4888, %v4856
      %v4921 = vadd.f32 %v4889, %v4857
      %v4922 = vadd.f32 %v4890, %v4858
      %v4923 = vadd.f32 %v4891, %v4859
      %v4924 = vadd.f32 %v4892, %v4860
      %v4925 = vadd.f32 %v4893, %v4861
      %v4926 = vadd.f32 %v4894, %v4862
      %v4927 = vadd.f32 %v4895, %v4863
      %v4928 = vadd.f32 %v4896, %v4864
      %v4929 = vadd.f32 %v4897, %v4865
      %v4930 = vadd.f32 %v4898, %v4866
      %v4931 = vadd.f32 %v4899, %v4867
      %v4932 = vadd.f32 %v4900, %v4868
      %v4933 = vadd.f32 %v4901, %v4869
      %v4934 = vadd.f32 %v4902, %v4870
      %v4935 = vadd.f32 %v4903, %v4871
      %v4936 = vadd.f32 %v4904, %v4872
      %v4937 = vadd.f32 %v4905, %v4873
      %v4938 = vadd.f32 %v4906, %v4874
      %v4939 = vadd.f32 %v4907, %v4875
      %v4940 = vadd.f32 %v4908, %v4876
      %v4941 = vadd.f32 %v4909, %v4877
      %v4942 = vadd.f32 %v4910, %v4878
      %v4943 = vadd.f32 %v4911, %v4879
      %v4944 = vadd.f32 %v4912, %v4880
      %v4945 = vadd.f32 %v4913, %v4881
      %v4946 = vadd.f32 %v4914, %v4882
      %v4947 = vadd.f32 %v4915, %v4883
      %v4948 = vadd.f32 %v4916, %v4884
      %v4949 = vadd.f32 %v4917, %v4885
      %4950 = vst.msk [vmem:[%s455] sm:$0xff] %vm531, %v4918
      %4951 = vst.msk [vmem:[%s455 + $0x8] sm:$0xff] %vm531, %v4919
      %4952 = vst.msk [vmem:[%s455 + $0x10] sm:$0xff] %vm531, %v4920
      %4953 = vst.msk [vmem:[%s455 + $0x18] sm:$0xff] %vm531, %v4921
      %4954 = vst.msk [vmem:[%s455 + $0x20] sm:$0xff] %vm531, %v4922
      %4955 = vst.msk [vmem:[%s455 + $0x28] sm:$0xff] %vm531, %v4923
      %4956 = vst.msk [vmem:[%s455 + $0x30] sm:$0xff] %vm531, %v4924
      %4957 = vst.msk [vmem:[%s455 + $0x38] sm:$0xff] %vm531, %v4925
      %4958 = vst.msk [vmem:[%s455 + $0x40] sm:$0xff] %vm531, %v4926
      %4959 = vst.msk [vmem:[%s455 + $0x48] sm:$0xff] %vm531, %v4927
      %4960 = vst.msk [vmem:[%s455 + $0x50] sm:$0xff] %vm531, %v4928
      %4961 = vst.msk [vmem:[%s455 + $0x58] sm:$0xff] %vm531, %v4929
      %4962 = vst.msk [vmem:[%s455 + $0x60] sm:$0xff] %vm531, %v4930
      %4963 = vst.msk [vmem:[%s455 + $0x68] sm:$0xff] %vm531, %v4931
      %4964 = vst.msk [vmem:[%s455 + $0x70] sm:$0xff] %vm531, %v4932
      %4965 = vst.msk [vmem:[%s455 + $0x78] sm:$0xff] %vm531, %v4933
      %4966 = vst.msk [vmem:[%s455 + $0x80] sm:$0xff] %vm531, %v4934
      %4967 = vst.msk [vmem:[%s455 + $0x88] sm:$0xff] %vm531, %v4935
      %4968 = vst.msk [vmem:[%s455 + $0x90] sm:$0xff] %vm531, %v4936
      %4969 = vst.msk [vmem:[%s455 + $0x98] sm:$0xff] %vm531, %v4937
      %4970 = vst.msk [vmem:[%s455 + $0xa0] sm:$0xff] %vm531, %v4938
      %4971 = vst.msk [vmem:[%s455 + $0xa8] sm:$0xff] %vm531, %v4939
      %4972 = vst.msk [vmem:[%s455 + $0xb0] sm:$0xff] %vm531, %v4940
      %4973 = vst.msk [vmem:[%s455 + $0xb8] sm:$0xff] %vm531, %v4941
      %4974 = vst.msk [vmem:[%s455 + $0xc0] sm:$0xff] %vm531, %v4942
      %4975 = vst.msk [vmem:[%s455 + $0xc8] sm:$0xff] %vm531, %v4943
      %4976 = vst.msk [vmem:[%s455 + $0xd0] sm:$0xff] %vm531, %v4944
      %4977 = vst.msk [vmem:[%s455 + $0xd8] sm:$0xff] %vm531, %v4945
      %4978 = vst.msk [vmem:[%s455 + $0xe0] sm:$0xff] %vm531, %v4946
      %4979 = vst.msk [vmem:[%s455 + $0xe8] sm:$0xff] %vm531, %v4947
      %4980 = vst.msk [vmem:[%s455 + $0xf0] sm:$0xff] %vm531, %v4948
      %4981 = vst.msk [vmem:[%s455 + $0xf8] sm:$0xff] %vm531, %v4949
      %s4982 = smul.u32 16, %s23
      %p4983 = scmp.lt.s32.totalorder %s22, 1
      %s4984 = scalar_select %p4983, %s22, 1
      %p4985 = scmp.lt.s32.totalorder %s4982, 15
      %s4986 = scalar_select %p4985, %s4982, 15
      %s4987 = smul.addr %s4986, 2
      %s4988 = smul.addr %s4984, 32
      %s4989 = sadd.s32 %s4987, %s4988
      %s4990 = smul.addr %s4989, 8
      %s4991 = scalar_lea.vmem %s7, %s4990
      // Predicated region
      $region69: #{tpu_custom_call.1} parent=47 // pred_check
        %p4992 = pneg %p234
      $region70: #{tpu_custom_call.1} parent=47 // pred_check_branch
        %4994 = sbr.rel (%p4992) target = $region72
      $region71: #{tpu_custom_call.1} parent=47 // pred_region
        %s4995 = smul.u32 16, %s23
      $region72: #{tpu_custom_call.1} parent=47 // pred_fallthru
        _
    $region48: #{tpu_custom_call.1} parent=5 // pred_fallthru
      _
    %p4996 = scmp.le.s32.totalorder 2, %s13
    // Predicated region
    $region73: #{tpu_custom_call.1} parent=5 // pred_check
      %p4997 = pneg %p4996
    $region74: #{tpu_custom_call.1} parent=5 // pred_check_branch
      %4999 = sbr.rel (%p4997) target = $region76
    $region75: #{tpu_custom_call.1} parent=5 // pred_region
      %s5000 = ssub.s32 %s13, 2
      // Predicated region
      $region77: #{tpu_custom_call.1} parent=75 // pred_check
        %p5001 = pneg %p240
      $region78: #{tpu_custom_call.1} parent=75 // pred_check_branch
        %5003 = sbr.rel (%p5001) target = $region80
      $region79: #{tpu_custom_call.1} parent=75 // pred_region
        %s5004 = smul.u32 16, %s25
        %p5005 = scmp.lt.s32.totalorder %s24, 1
        %s5006 = scalar_select %p5005, %s24, 1
        %p5007 = scmp.lt.s32.totalorder %s5004, 15
        %s5008 = scalar_select %p5007, %s5004, 15
        %s5009 = smul.addr %s5008, 2
        %s5010 = smul.addr %s5006, 32
        %s5011 = sadd.s32 %s5009, %s5010
        %s5012 = smul.addr %s5011, 8
        %s5013 = scalar_lea.vmem %s7, %s5012
      $region80: #{tpu_custom_call.1} parent=75 // pred_fallthru
        _
    $region76: #{tpu_custom_call.1} parent=5 // pred_fallthru
      _
  $region6: #{tpu_custom_call.1} parent=0 // loop_footer
    %s17 = sadd.s32 1, %s13
  $region7: #{tpu_custom_call.1} parent=0 // loop_footer_branch
    %12 = sbr.rel target = $region3
  $region8: #{tpu_custom_call.1} parent=0 // loop_exit
    _

</llo_original>
